<compile_context>
chip_gen: v6e
topology: v6e:2x2x1
jax: 0.10.0
libtpu: 0.0.40
codegen_flags: <defaults>
</compile_context>

<pallas_src>
import math

import jax
import jax.numpy as jnp
from jax.experimental import pallas as pl
from jax.experimental.pallas import tpu as pltpu


# ----------------------------------------------------------------------------
# Fixed bilinear upsample matrix
# (== depthwise ConvTranspose2d(2f, stride f, pad f//2) with fill_up_weights)
# ----------------------------------------------------------------------------
def _bilinear_upsample_matrix(n_in, f):
    k = 2 * f
    pad = f // 2
    n_out = (n_in - 1) * f - 2 * pad + k
    c = (2 * f - 1 - f % 2) / (2.0 * f)
    idx = jnp.arange(k, dtype=jnp.float32)
    w1d = 1.0 - jnp.abs(idx / f - c)                     # separable bilinear kernel
    p = jnp.arange(n_out)[:, None]
    i = jnp.arange(n_in)[None, :]
    kk = p + pad - i * f                                 # transposed-conv tap index
    valid = (kk >= 0) & (kk < k)
    return jnp.where(valid, w1d[jnp.clip(kk, 0, k - 1)], 0.0).astype(jnp.float32)


def _up_out_size(n, f):
    return n if f == 1 else (n - 1) * f - 2 * (f // 2) + 2 * f


# ----------------------------------------------------------------------------
# Parameters (same format / init as the PyTorch module)
# ----------------------------------------------------------------------------
def init_ida_up_params(key, node_kernel, out_dim, channels):
    eps = 1e-5
    bn_scale = jnp.full((out_dim,), 1.0 / math.sqrt(1.0 + eps), jnp.float32)
    bn_bias = jnp.zeros((out_dim,), jnp.float32)
    params = {}
    keys = jax.random.split(key, 2 * len(channels))
    for i, c in enumerate(channels):
        if c != out_dim:
            std = math.sqrt(2.0 / (1 * 1 * out_dim))
            w = std * jax.random.normal(keys[2 * i], (c, out_dim), jnp.float32)
            params[f"proj_{i}"] = dict(w=w, scale=bn_scale, bias=bn_bias)
    for i in range(1, len(channels)):
        std = math.sqrt(2.0 / (node_kernel * node_kernel * out_dim))
        w = std * jax.random.normal(
            keys[2 * i + 1], (node_kernel, node_kernel, 2 * out_dim, out_dim),
            jnp.float32)
        params[f"node_{i}"] = dict(w=w, scale=bn_scale, bias=bn_bias)
    return params


# ----------------------------------------------------------------------------
# Fused forward (matches IDAUp.forward)
# ----------------------------------------------------------------------------
def ida_up_forward(params, layers_nchw, node_kernel, out_dim, channels, up_factors):
    L = len(channels)
    assert L == len(layers_nchw) and L >= 2
    C = out_dim
    nk = node_kernel
    pad = nk // 2
    N = layers_nchw[0].shape[0]

    # fold inputs: NCHW -> NHWC -> (N, H, W*c), bf16 for MXU / HBM traffic
    shapes, xs_folded = [], []
    for i, l in enumerate(layers_nchw):
        n_, c_i, H_i, W_i = l.shape
        assert n_ == N and c_i == channels[i]
        a = jnp.transpose(l, (0, 2, 3, 1)).reshape(N, H_i, W_i * c_i)
        xs_folded.append(a.astype(jnp.bfloat16))
        shapes.append((H_i, W_i))

    has_proj = [channels[i] != C for i in range(L)]
    up_f = [int(f) for f in up_factors]
    has_up = [f != 1 for f in up_f]

    HO = _up_out_size(shapes[0][0], up_f[0])
    WO = _up_out_size(shapes[0][1], up_f[0])
    for i in range(L):
        assert _up_out_size(shapes[i][0], up_f[i]) == HO
        assert _up_out_size(shapes[i][1], up_f[i]) == WO
    HP, WP = HO + 2 * pad, WO + 2 * pad

    # ------------------------------------------------------------------
    # Build constant matmul operands (wrapper-side, plain XLA, tiny)
    # ------------------------------------------------------------------
    inputs, in_specs, ref_idx = [], [], {}

    def add_batched(name, arr):
        ref_idx[name] = len(inputs)
        inputs.append(arr)
        nd = arr.ndim
        in_specs.append(pl.BlockSpec((1,) + arr.shape[1:],
                                     lambda b, nd=nd: (b,) + (0,) * (nd - 1)))

    def add_const(name, arr):
        ref_idx[name] = len(inputs)
        inputs.append(arr)
        nd = arr.ndim
        in_specs.append(pl.BlockSpec(arr.shape, lambda b, nd=nd: (0,) * nd))

    for i in range(L):
        add_batched(f"x{i}", xs_folded[i])

    for i in range(L):
        H_i, W_i = shapes[i]
        if has_proj[i]:
            pp = params[f"proj_{i}"]
            w_s = pp["w"] * pp["scale"][None, :]                       # (c_i, C)
            kp = jnp.kron(jnp.eye(W_i, dtype=jnp.float32), w_s)       # (W_i*c_i, W_i*C)
            add_const(f"kp{i}", kp.astype(jnp.bfloat16))
            add_const(f"pb{i}",
                      jnp.tile(pp["bias"], W_i).reshape(1, W_i * C).astype(jnp.float32))
        if has_up[i]:
            uh = _bilinear_upsample_matrix(H_i, up_f[i])               # (HO, H_i)
            uw = _bilinear_upsample_matrix(W_i, up_f[i])               # (WO, W_i)
            kw = jnp.kron(uw.T, jnp.eye(C, dtype=jnp.float32))         # (W_i*C, WO*C)
            add_const(f"uh{i}", uh.astype(jnp.bfloat16))
            add_const(f"kw{i}", kw.astype(jnp.bfloat16))

    # node-conv banded weights: index s*nk + ki -> (WP*C, WO*C)
    for j in range(1, L):
        pn = params[f"node_{j}"]
        w_s = pn["w"] * pn["scale"][None, None, None, :]               # (nk, nk, 2C, C)
        mats = []
        for s in range(2):                       # half 0: running x, half 1: layer j
            for ki in range(nk):
                acc = jnp.zeros((WP * C, WO * C), jnp.float32)
                for kj in range(nk):
                    pkj = jnp.eye(WP, WO, k=-kj, dtype=jnp.float32)    # P[w+kj, w] = 1
                    acc = acc + jnp.kron(pkj, w_s[ki, kj, s * C:(s + 1) * C, :])
                mats.append(acc)
        bmat = jnp.stack(mats)                                         # (2*nk, WP*C, WO*C)
        add_const(f"nw{j}", bmat.astype(jnp.bfloat16))
        add_const(f"nb{j}",
                  jnp.tile(pn["bias"], WO).reshape(1, WO * C).astype(jnp.float32))

    n_in = len(inputs)

    # ------------------------------------------------------------------
    # The fused kernel (one grid step = one batch image)
    # ------------------------------------------------------------------
    def kernel(*refs):
        in_refs = refs[:n_in]
        out_refs = refs[n_in:n_in + (L - 1)]
        padx_ref, padl_ref = refs[n_in + (L - 1):]

        def R(name):
            return in_refs[ref_idx[name]]

        # zero the SAME-padding borders
        padx_ref[...] = jnp.zeros((HP, WP * C), jnp.float32)
        padl_ref[...] = jnp.zeros((HP, WP * C), jnp.float32)

        def layer_act(i):
            y = R(f"x{i}")[0]                                          # (H_i, W_i*c_i) bf16
            if has_proj[i]:
                y = jnp.dot(y, R(f"kp{i}")[...],
                            preferred_element_type=jnp.float32)
                y = jnp.maximum(y + R(f"pb{i}")[...], 0.0)             # (H_i, W_i*C) f32
            else:
                y = y.astype(jnp.float32)
            if has_up[i]:
                y = jnp.dot(R(f"uh{i}")[...], y.astype(jnp.bfloat16),
                            preferred_element_type=jnp.float32)        # (HO, W_i*C)
                y = jnp.dot(y.astype(jnp.bfloat16), R(f"kw{i}")[...],
                            preferred_element_type=jnp.float32)        # (HO, WO*C)
            return y                                                   # f32 (HO, WO*C)

        def put(ref, val):
            ref[pad:pad + HO, pad * C:(pad + WO) * C] = val

        put(padx_ref, layer_act(0))
        for j in range(1, L):
            put(padl_ref, layer_act(j))
            bw = R(f"nw{j}")
            acc = jnp.zeros((HO, WO * C), jnp.float32)
            for s, src in enumerate((padx_ref, padl_ref)):
                for ki in range(nk):
                    slab = src[ki:ki + HO, :].astype(jnp.bfloat16)     # (HO, WP*C)
                    acc = acc + jnp.dot(slab, bw[s * nk + ki],
                                        preferred_element_type=jnp.float32)
            y = jnp.maximum(acc + R(f"nb{j}")[...], 0.0)               # (HO, WO*C)
            out_refs[j - 1][0] = y
            if j < L - 1:
                put(padx_ref, y)                                       # becomes next x

    out_shape = tuple(jax.ShapeDtypeStruct((N, HO, WO * C), jnp.float32)
                      for _ in range(L - 1))
    out_specs = tuple(pl.BlockSpec((1, HO, WO * C), lambda b: (b, 0, 0))
                      for _ in range(L - 1))

    ys_folded = pl.pallas_call(
        kernel,
        out_shape=out_shape,
        grid=(N,),
        in_specs=in_specs,
        out_specs=out_specs,
        scratch_shapes=[pltpu.VMEM((HP, WP * C), jnp.float32),
                        pltpu.VMEM((HP, WP * C), jnp.float32)],
        compiler_params=pltpu.CompilerParams(dimension_semantics=("parallel",)),
    )(*inputs)

    def unfold(a):  # (N, HO, WO*C) -> NCHW
        return jnp.transpose(a.reshape(N, HO, WO, C), (0, 3, 1, 2))

    y_out = [unfold(a) for a in ys_folded]
    return y_out[-1], y_out


# ----------------------------------------------------------------------------
# Pure-JAX f32 reference (independent of the folded/banded formulation)
# ----------------------------------------------------------------------------
def _reference_forward(params, layers_nchw, node_kernel, out_dim, channels, up_factors):
    C = out_dim
    acts = []
    for i, l in enumerate(layers_nchw):
        x = jnp.transpose(l, (0, 2, 3, 1)).astype(jnp.float32)
        if channels[i] != C:
            p = params[f"proj_{i}"]
            x = jnp.einsum("nhwc,cd->nhwd", x, p["w"])
            x = jnp.maximum(x * p["scale"] + p["bias"], 0.0)
        f = int(up_factors[i])
        if f != 1:
            uh = _bilinear_upsample_matrix(x.shape[1], f)
            uw = _bilinear_upsample_matrix(x.shape[2], f)
            x = jnp.einsum("ph,nhwc->npwc", uh, x)
            x = jnp.einsum("qw,npwc->npqc", uw, x)
        acts.append(x)
    x = acts[0]
    ys = []
    pd_ = node_kernel // 2
    for i in range(1, len(acts)):
        p = params[f"node_{i}"]
        cat = jnp.concatenate([x, acts[i]], axis=-1)
        catp = jnp.pad(cat, ((0, 0), (pd_, pd_), (pd_, pd_), (0, 0)))
        H, W = x.shape[1], x.shape[2]
        acc = jnp.zeros((x.shape[0], H, W, C), jnp.float32)
        for ki in range(node_kernel):
            for kj in range(node_kernel):
                acc = acc + jnp.einsum("nhwc,cd->nhwd",
                                       catp[:, ki:ki + H, kj:kj + W, :], p["w"][ki, kj])
        x = jnp.maximum(acc * p["scale"] + p["bias"], 0.0)
        ys.append(x)
    return (jnp.transpose(x, (0, 3, 1, 2)),
            [jnp.transpose(t, (0, 3, 1, 2)) for t in ys])


# ----------------------------------------------------------------------------
if __name__ == "__main__":
    node_kernel = 3
    out_dim = 16
    channels = (16, 32, 64)
    up_factors = (1, 2, 4)
    batch = 2
    spatial = (16, 8, 4)   # after upsample all become 16x16

    key = jax.random.PRNGKey(0)
    k_par, k0, k1, k2 = jax.random.split(key, 4)
    params = init_ida_up_params(k_par, node_kernel, out_dim, channels)

    layers_nchw = [
        jax.random.normal(k0, (batch, channels[0], spatial[0], spatial[0]), jnp.float32),
        jax.random.normal(k1, (batch, channels[1], spatial[1], spatial[1]), jnp.float32),
        jax.random.normal(k2, (batch, channels[2], spatial[2], spatial[2]), jnp.float32),
    ]

    x_out, y_out = ida_up_forward(params, layers_nchw, node_kernel, out_dim,
                                  channels, up_factors)
    x_out = jax.block_until_ready(x_out)
    y_out = [jax.block_until_ready(t) for t in y_out]

    assert x_out.shape == (batch, out_dim, spatial[0], spatial[0]), x_out.shape
    assert len(y_out) == len(channels) - 1
    for t in y_out:
        assert t.shape == (batch, out_dim, spatial[0], spatial[0]), t.shape
    assert bool(jnp.isfinite(x_out).all())

    # numerics vs pure-JAX f32 reference (loose tol: kernel uses bf16 MXU operands)
    x_ref, y_ref = _reference_forward(params, layers_nchw, node_kernel, out_dim,
                                      channels, up_factors)
    scale = float(jnp.max(jnp.abs(x_ref)))
    for got, ref in zip([x_out] + y_out, [x_ref] + y_ref):
        err = float(jnp.max(jnp.abs(got - ref)))
        assert err <= 5e-2 * scale + 1e-1, f"max abs err {err} (scale {scale})"

    print("KERNEL_OK")
</pallas_src>

<mosaic_0001>
module attributes {stable_mosaic.version = 11 : i64} {
  func.func @kernel(%arg0: i32, %arg1: memref<1x16x256xbf16, #tpu.memory_space<vmem>>, %arg2: memref<1x8x256xbf16, #tpu.memory_space<vmem>>, %arg3: memref<1x4x256xbf16, #tpu.memory_space<vmem>>, %arg4: memref<256x128xbf16, #tpu.memory_space<vmem>>, %arg5: memref<1x128xf32, #tpu.memory_space<vmem>>, %arg6: memref<16x8xbf16, #tpu.memory_space<vmem>>, %arg7: memref<128x256xbf16, #tpu.memory_space<vmem>>, %arg8: memref<256x64xbf16, #tpu.memory_space<vmem>>, %arg9: memref<1x64xf32, #tpu.memory_space<vmem>>, %arg10: memref<16x4xbf16, #tpu.memory_space<vmem>>, %arg11: memref<64x256xbf16, #tpu.memory_space<vmem>>, %arg12: memref<6x288x256xbf16, #tpu.memory_space<vmem>>, %arg13: memref<1x256xf32, #tpu.memory_space<vmem>>, %arg14: memref<6x288x256xbf16, #tpu.memory_space<vmem>>, %arg15: memref<1x256xf32, #tpu.memory_space<vmem>>, %arg16: memref<1x16x256xf32, #tpu.memory_space<vmem>>, %arg17: memref<1x16x256xf32, #tpu.memory_space<vmem>>, %arg18: memref<18x288xf32, #tpu.memory_space<vmem>>, %arg19: memref<18x288xf32, #tpu.memory_space<vmem>>) attributes {dimension_semantics = [#tpu.dimension_semantics<parallel>], iteration_bounds = array<i64: 2>, scalar_prefetch = 0 : i64, scratch_operands = 2 : i64, tpu.core_type = #tpu.core_type<tc>, window_params = [{transform_indices = @transform_0, window_bounds = array<i64: 1, 16, 256>}, {transform_indices = @transform_1, window_bounds = array<i64: 1, 8, 256>}, {transform_indices = @transform_2, window_bounds = array<i64: 1, 4, 256>}, {pipeline_mode = #tpu.pipeline_mode<synchronous>, transform_indices = @transform_3, window_bounds = array<i64: 256, 128>}, {pipeline_mode = #tpu.pipeline_mode<synchronous>, transform_indices = @transform_4, window_bounds = array<i64: 1, 128>}, {pipeline_mode = #tpu.pipeline_mode<synchronous>, transform_indices = @transform_5, window_bounds = array<i64: 16, 8>}, {pipeline_mode = #tpu.pipeline_mode<synchronous>, transform_indices = @transform_6, window_bounds = array<i64: 128, 256>}, {pipeline_mode = #tpu.pipeline_mode<synchronous>, transform_indices = @transform_7, window_bounds = array<i64: 256, 64>}, {pipeline_mode = #tpu.pipeline_mode<synchronous>, transform_indices = @transform_8, window_bounds = array<i64: 1, 64>}, {pipeline_mode = #tpu.pipeline_mode<synchronous>, transform_indices = @transform_9, window_bounds = array<i64: 16, 4>}, {pipeline_mode = #tpu.pipeline_mode<synchronous>, transform_indices = @transform_10, window_bounds = array<i64: 64, 256>}, {pipeline_mode = #tpu.pipeline_mode<synchronous>, transform_indices = @transform_11, window_bounds = array<i64: 6, 288, 256>}, {pipeline_mode = #tpu.pipeline_mode<synchronous>, transform_indices = @transform_12, window_bounds = array<i64: 1, 256>}, {pipeline_mode = #tpu.pipeline_mode<synchronous>, transform_indices = @transform_13, window_bounds = array<i64: 6, 288, 256>}, {pipeline_mode = #tpu.pipeline_mode<synchronous>, transform_indices = @transform_14, window_bounds = array<i64: 1, 256>}, {transform_indices = @transform_15, window_bounds = array<i64: 1, 16, 256>}, {transform_indices = @transform_16, window_bounds = array<i64: 1, 16, 256>}]} {
    %cst = arith.constant 0.000000e+00 : f32
    %0 = vector.broadcast %cst : f32 to vector<18x288xf32>
    %c0 = arith.constant 0 : index
    %c0_0 = arith.constant 0 : index
    %1 = vector.load %arg18[%c0, %c0_0] : memref<18x288xf32, #tpu.memory_space<vmem>>, vector<18x288xf32>
    tpu.vector_store %arg18[%c0, %c0_0], %0 {strides = array<i32>} : memref<18x288xf32, #tpu.memory_space<vmem>>, vector<18x288xf32>,
    %cst_1 = arith.constant 0.000000e+00 : f32
    %2 = vector.broadcast %cst_1 : f32 to vector<18x288xf32>
    %c0_2 = arith.constant 0 : index
    %c0_3 = arith.constant 0 : index
    %3 = vector.load %arg19[%c0_2, %c0_3] : memref<18x288xf32, #tpu.memory_space<vmem>>, vector<18x288xf32>
    tpu.vector_store %arg19[%c0_2, %c0_3], %2 {strides = array<i32>} : memref<18x288xf32, #tpu.memory_space<vmem>>, vector<18x288xf32>,
    %c0_4 = arith.constant 0 : index
    %c0_5 = arith.constant 0 : index
    %c0_6 = arith.constant 0 : index
    %4 = vector.load %arg1[%c0_4, %c0_5, %c0_6] : memref<1x16x256xbf16, #tpu.memory_space<vmem>>, vector<1x16x256xbf16>
    %5 = vector.shape_cast %4 : vector<1x16x256xbf16> to vector<16x256xbf16>
    %6 = arith.extf %5 : vector<16x256xbf16> to vector<16x256xf32>
    %c1 = arith.constant 1 : index
    %c16 = arith.constant 16 : index
    %7 = vector.load %arg18[%c1, %c16] : memref<18x288xf32, #tpu.memory_space<vmem>>, vector<16x256xf32>
    tpu.vector_store %arg18[%c1, %c16], %6 {strides = array<i32>} : memref<18x288xf32, #tpu.memory_space<vmem>>, vector<16x256xf32>,
    %c0_7 = arith.constant 0 : index
    %c0_8 = arith.constant 0 : index
    %c0_9 = arith.constant 0 : index
    %8 = vector.load %arg2[%c0_7, %c0_8, %c0_9] : memref<1x8x256xbf16, #tpu.memory_space<vmem>>, vector<1x8x256xbf16>
    %9 = vector.shape_cast %8 : vector<1x8x256xbf16> to vector<8x256xbf16>
    %c0_10 = arith.constant 0 : index
    %c0_11 = arith.constant 0 : index
    %10 = vector.load %arg4[%c0_10, %c0_11] : memref<256x128xbf16, #tpu.memory_space<vmem>>, vector<256x128xbf16>
    %cst_12 = arith.constant dense<0.000000e+00> : vector<8x128xf32>
    %11 = tpu.matmul %9, %10, %cst_12 {dimension_numbers = #tpu.dot_dimension_numbers<[1], [0], [0], [1], [0, 0, 1, 1], [], []>} : vector<8x256xbf16>, vector<256x128xbf16>, vector<8x128xf32> -> vector<8x128xf32>
    %c0_13 = arith.constant 0 : index
    %c0_14 = arith.constant 0 : index
    %12 = vector.load %arg5[%c0_13, %c0_14] : memref<1x128xf32, #tpu.memory_space<vmem>>, vector<1x128xf32>
    %13 = vector.broadcast %12 : vector<1x128xf32> to vector<8x128xf32>
    %14 = arith.addf %11, %13 : vector<8x128xf32>
    %cst_15 = arith.constant 0.000000e+00 : f32
    %15 = vector.broadcast %cst_15 : f32 to vector<8x128xf32>
    %16 = arith.maximumf %14, %15 : vector<8x128xf32>
    %c0_16 = arith.constant 0 : index
    %c0_17 = arith.constant 0 : index
    %17 = vector.load %arg6[%c0_16, %c0_17] : memref<16x8xbf16, #tpu.memory_space<vmem>>, vector<16x8xbf16>
    %18 = arith.truncf %16 : vector<8x128xf32> to vector<8x128xbf16>
    %cst_18 = arith.constant dense<0.000000e+00> : vector<16x128xf32>
    %19 = tpu.matmul %17, %18, %cst_18 {dimension_numbers = #tpu.dot_dimension_numbers<[1], [0], [0], [1], [0, 0, 1, 1], [], []>} : vector<16x8xbf16>, vector<8x128xbf16>, vector<16x128xf32> -> vector<16x128xf32>
    %20 = arith.truncf %19 : vector<16x128xf32> to vector<16x128xbf16>
    %c0_19 = arith.constant 0 : index
    %c0_20 = arith.constant 0 : index
    %21 = vector.load %arg7[%c0_19, %c0_20] : memref<128x256xbf16, #tpu.memory_space<vmem>>, vector<128x256xbf16>
    %cst_21 = arith.constant dense<0.000000e+00> : vector<16x256xf32>
    %22 = tpu.matmul %20, %21, %cst_21 {dimension_numbers = #tpu.dot_dimension_numbers<[1], [0], [0], [1], [0, 0, 1, 1], [], []>} : vector<16x128xbf16>, vector<128x256xbf16>, vector<16x256xf32> -> vector<16x256xf32>
    %c1_22 = arith.constant 1 : index
    %c16_23 = arith.constant 16 : index
    %23 = vector.load %arg19[%c1_22, %c16_23] : memref<18x288xf32, #tpu.memory_space<vmem>>, vector<16x256xf32>
    tpu.vector_store %arg19[%c1_22, %c16_23], %22 {strides = array<i32>} : memref<18x288xf32, #tpu.memory_space<vmem>>, vector<16x256xf32>,
    %cst_24 = arith.constant 0.000000e+00 : f32
    %24 = vector.broadcast %cst_24 : f32 to vector<16x256xf32>
    %c0_25 = arith.constant 0 : index
    %c0_26 = arith.constant 0 : index
    %25 = vector.load %arg18[%c0_25, %c0_26] : memref<18x288xf32, #tpu.memory_space<vmem>>, vector<16x288xf32>
    %26 = arith.truncf %25 : vector<16x288xf32> to vector<16x288xbf16>
    %c0_27 = arith.constant 0 : index
    %c0_28 = arith.constant 0 : index
    %c0_29 = arith.constant 0 : index
    %27 = vector.load %arg12[%c0_27, %c0_28, %c0_29] : memref<6x288x256xbf16, #tpu.memory_space<vmem>>, vector<1x288x256xbf16>
    %28 = vector.shape_cast %27 : vector<1x288x256xbf16> to vector<288x256xbf16>
    %cst_30 = arith.constant dense<0.000000e+00> : vector<16x256xf32>
    %29 = tpu.matmul %26, %28, %cst_30 {dimension_numbers = #tpu.dot_dimension_numbers<[1], [0], [0], [1], [0, 0, 1, 1], [], []>} : vector<16x288xbf16>, vector<288x256xbf16>, vector<16x256xf32> -> vector<16x256xf32>
    %30 = arith.addf %24, %29 : vector<16x256xf32>
    %c1_31 = arith.constant 1 : index
    %c0_32 = arith.constant 0 : index
    %31 = vector.load %arg18[%c1_31, %c0_32] : memref<18x288xf32, #tpu.memory_space<vmem>>, vector<16x288xf32>
    %32 = arith.truncf %31 : vector<16x288xf32> to vector<16x288xbf16>
    %c1_33 = arith.constant 1 : index
    %c0_34 = arith.constant 0 : index
    %c0_35 = arith.constant 0 : index
    %33 = vector.load %arg12[%c1_33, %c0_34, %c0_35] : memref<6x288x256xbf16, #tpu.memory_space<vmem>>, vector<1x288x256xbf16>
    %34 = vector.shape_cast %33 : vector<1x288x256xbf16> to vector<288x256xbf16>
    %cst_36 = arith.constant dense<0.000000e+00> : vector<16x256xf32>
    %35 = tpu.matmul %32, %34, %cst_36 {dimension_numbers = #tpu.dot_dimension_numbers<[1], [0], [0], [1], [0, 0, 1, 1], [], []>} : vector<16x288xbf16>, vector<288x256xbf16>, vector<16x256xf32> -> vector<16x256xf32>
    %36 = arith.addf %30, %35 : vector<16x256xf32>
    %c2 = arith.constant 2 : index
    %c0_37 = arith.constant 0 : index
    %37 = vector.load %arg18[%c2, %c0_37] : memref<18x288xf32, #tpu.memory_space<vmem>>, vector<16x288xf32>
    %38 = arith.truncf %37 : vector<16x288xf32> to vector<16x288xbf16>
    %c2_38 = arith.constant 2 : index
    %c0_39 = arith.constant 0 : index
    %c0_40 = arith.constant 0 : index
    %39 = vector.load %arg12[%c2_38, %c0_39, %c0_40] : memref<6x288x256xbf16, #tpu.memory_space<vmem>>, vector<1x288x256xbf16>
    %40 = vector.shape_cast %39 : vector<1x288x256xbf16> to vector<288x256xbf16>
    %cst_41 = arith.constant dense<0.000000e+00> : vector<16x256xf32>
    %41 = tpu.matmul %38, %40, %cst_41 {dimension_numbers = #tpu.dot_dimension_numbers<[1], [0], [0], [1], [0, 0, 1, 1], [], []>} : vector<16x288xbf16>, vector<288x256xbf16>, vector<16x256xf32> -> vector<16x256xf32>
    %42 = arith.addf %36, %41 : vector<16x256xf32>
    %c0_42 = arith.constant 0 : index
    %c0_43 = arith.constant 0 : index
    %43 = vector.load %arg19[%c0_42, %c0_43] : memref<18x288xf32, #tpu.memory_space<vmem>>, vector<16x288xf32>
    %44 = arith.truncf %43 : vector<16x288xf32> to vector<16x288xbf16>
    %c3 = arith.constant 3 : index
    %c0_44 = arith.constant 0 : index
    %c0_45 = arith.constant 0 : index
    %45 = vector.load %arg12[%c3, %c0_44, %c0_45] : memref<6x288x256xbf16, #tpu.memory_space<vmem>>, vector<1x288x256xbf16>
    %46 = vector.shape_cast %45 : vector<1x288x256xbf16> to vector<288x256xbf16>
    %cst_46 = arith.constant dense<0.000000e+00> : vector<16x256xf32>
    %47 = tpu.matmul %44, %46, %cst_46 {dimension_numbers = #tpu.dot_dimension_numbers<[1], [0], [0], [1], [0, 0, 1, 1], [], []>} : vector<16x288xbf16>, vector<288x256xbf16>, vector<16x256xf32> -> vector<16x256xf32>
    %48 = arith.addf %42, %47 : vector<16x256xf32>
    %c1_47 = arith.constant 1 : index
    %c0_48 = arith.constant 0 : index
    %49 = vector.load %arg19[%c1_47, %c0_48] : memref<18x288xf32, #tpu.memory_space<vmem>>, vector<16x288xf32>
    %50 = arith.truncf %49 : vector<16x288xf32> to vector<16x288xbf16>
    %c4 = arith.constant 4 : index
    %c0_49 = arith.constant 0 : index
    %c0_50 = arith.constant 0 : index
    %51 = vector.load %arg12[%c4, %c0_49, %c0_50] : memref<6x288x256xbf16, #tpu.memory_space<vmem>>, vector<1x288x256xbf16>
    %52 = vector.shape_cast %51 : vector<1x288x256xbf16> to vector<288x256xbf16>
    %cst_51 = arith.constant dense<0.000000e+00> : vector<16x256xf32>
    %53 = tpu.matmul %50, %52, %cst_51 {dimension_numbers = #tpu.dot_dimension_numbers<[1], [0], [0], [1], [0, 0, 1, 1], [], []>} : vector<16x288xbf16>, vector<288x256xbf16>, vector<16x256xf32> -> vector<16x256xf32>
    %54 = arith.addf %48, %53 : vector<16x256xf32>
    %c2_52 = arith.constant 2 : index
    %c0_53 = arith.constant 0 : index
    %55 = vector.load %arg19[%c2_52, %c0_53] : memref<18x288xf32, #tpu.memory_space<vmem>>, vector<16x288xf32>
    %56 = arith.truncf %55 : vector<16x288xf32> to vector<16x288xbf16>
    %c5 = arith.constant 5 : index
    %c0_54 = arith.constant 0 : index
    %c0_55 = arith.constant 0 : index
    %57 = vector.load %arg12[%c5, %c0_54, %c0_55] : memref<6x288x256xbf16, #tpu.memory_space<vmem>>, vector<1x288x256xbf16>
    %58 = vector.shape_cast %57 : vector<1x288x256xbf16> to vector<288x256xbf16>
    %cst_56 = arith.constant dense<0.000000e+00> : vector<16x256xf32>
    %59 = tpu.matmul %56, %58, %cst_56 {dimension_numbers = #tpu.dot_dimension_numbers<[1], [0], [0], [1], [0, 0, 1, 1], [], []>} : vector<16x288xbf16>, vector<288x256xbf16>, vector<16x256xf32> -> vector<16x256xf32>
    %60 = arith.addf %54, %59 : vector<16x256xf32>
    %c0_57 = arith.constant 0 : index
    %c0_58 = arith.constant 0 : index
    %61 = vector.load %arg13[%c0_57, %c0_58] : memref<1x256xf32, #tpu.memory_space<vmem>>, vector<1x256xf32>
    %62 = vector.broadcast %61 : vector<1x256xf32> to vector<16x256xf32>
    %63 = arith.addf %60, %62 : vector<16x256xf32>
    %cst_59 = arith.constant 0.000000e+00 : f32
    %64 = vector.broadcast %cst_59 : f32 to vector<16x256xf32>
    %65 = arith.maximumf %63, %64 : vector<16x256xf32>
    %c0_60 = arith.constant 0 : index
    %c0_61 = arith.constant 0 : index
    %c0_62 = arith.constant 0 : index
    %66 = vector.load %arg16[%c0_60, %c0_61, %c0_62] : memref<1x16x256xf32, #tpu.memory_space<vmem>>, vector<1x16x256xf32>
    %67 = vector.shape_cast %66 : vector<1x16x256xf32> to vector<16x256xf32>
    %68 = vector.shape_cast %65 : vector<16x256xf32> to vector<1x16x256xf32>
    tpu.vector_store %arg16[%c0_60, %c0_61, %c0_62], %68 {strides = array<i32>} : memref<1x16x256xf32, #tpu.memory_space<vmem>>, vector<1x16x256xf32>,
    %c1_63 = arith.constant 1 : index
    %c16_64 = arith.constant 16 : index
    %69 = vector.load %arg18[%c1_63, %c16_64] : memref<18x288xf32, #tpu.memory_space<vmem>>, vector<16x256xf32>
    tpu.vector_store %arg18[%c1_63, %c16_64], %65 {strides = array<i32>} : memref<18x288xf32, #tpu.memory_space<vmem>>, vector<16x256xf32>,
    %c0_65 = arith.constant 0 : index
    %c0_66 = arith.constant 0 : index
    %c0_67 = arith.constant 0 : index
    %70 = vector.load %arg3[%c0_65, %c0_66, %c0_67] : memref<1x4x256xbf16, #tpu.memory_space<vmem>>, vector<1x4x256xbf16>
    %71 = vector.shape_cast %70 : vector<1x4x256xbf16> to vector<4x256xbf16>
    %c0_68 = arith.constant 0 : index
    %c0_69 = arith.constant 0 : index
    %72 = vector.load %arg8[%c0_68, %c0_69] : memref<256x64xbf16, #tpu.memory_space<vmem>>, vector<256x64xbf16>
    %cst_70 = arith.constant dense<0.000000e+00> : vector<4x64xf32>
    %73 = tpu.matmul %71, %72, %cst_70 {dimension_numbers = #tpu.dot_dimension_numbers<[1], [0], [0], [1], [0, 0, 1, 1], [], []>} : vector<4x256xbf16>, vector<256x64xbf16>, vector<4x64xf32> -> vector<4x64xf32>
    %c0_71 = arith.constant 0 : index
    %c0_72 = arith.constant 0 : index
    %74 = vector.load %arg9[%c0_71, %c0_72] : memref<1x64xf32, #tpu.memory_space<vmem>>, vector<1x64xf32>
    %75 = vector.broadcast %74 : vector<1x64xf32> to vector<4x64xf32>
    %76 = arith.addf %73, %75 : vector<4x64xf32>
    %cst_73 = arith.constant 0.000000e+00 : f32
    %77 = vector.broadcast %cst_73 : f32 to vector<4x64xf32>
    %78 = arith.maximumf %76, %77 : vector<4x64xf32>
    %c0_74 = arith.constant 0 : index
    %c0_75 = arith.constant 0 : index
    %79 = vector.load %arg10[%c0_74, %c0_75] : memref<16x4xbf16, #tpu.memory_space<vmem>>, vector<16x4xbf16>
    %80 = arith.truncf %78 : vector<4x64xf32> to vector<4x64xbf16>
    %cst_76 = arith.constant dense<0.000000e+00> : vector<16x64xf32>
    %81 = tpu.matmul %79, %80, %cst_76 {dimension_numbers = #tpu.dot_dimension_numbers<[1], [0], [0], [1], [0, 0, 1, 1], [], []>} : vector<16x4xbf16>, vector<4x64xbf16>, vector<16x64xf32> -> vector<16x64xf32>
    %82 = arith.truncf %81 : vector<16x64xf32> to vector<16x64xbf16>
    %c0_77 = arith.constant 0 : index
    %c0_78 = arith.constant 0 : index
    %83 = vector.load %arg11[%c0_77, %c0_78] : memref<64x256xbf16, #tpu.memory_space<vmem>>, vector<64x256xbf16>
    %cst_79 = arith.constant dense<0.000000e+00> : vector<16x256xf32>
    %84 = tpu.matmul %82, %83, %cst_79 {dimension_numbers = #tpu.dot_dimension_numbers<[1], [0], [0], [1], [0, 0, 1, 1], [], []>} : vector<16x64xbf16>, vector<64x256xbf16>, vector<16x256xf32> -> vector<16x256xf32>
    %c1_80 = arith.constant 1 : index
    %c16_81 = arith.constant 16 : index
    %85 = vector.load %arg19[%c1_80, %c16_81] : memref<18x288xf32, #tpu.memory_space<vmem>>, vector<16x256xf32>
    tpu.vector_store %arg19[%c1_80, %c16_81], %84 {strides = array<i32>} : memref<18x288xf32, #tpu.memory_space<vmem>>, vector<16x256xf32>,
    %cst_82 = arith.constant 0.000000e+00 : f32
    %86 = vector.broadcast %cst_82 : f32 to vector<16x256xf32>
    %c0_83 = arith.constant 0 : index
    %c0_84 = arith.constant 0 : index
    %87 = vector.load %arg18[%c0_83, %c0_84] : memref<18x288xf32, #tpu.memory_space<vmem>>, vector<16x288xf32>
    %88 = arith.truncf %87 : vector<16x288xf32> to vector<16x288xbf16>
    %c0_85 = arith.constant 0 : index
    %c0_86 = arith.constant 0 : index
    %c0_87 = arith.constant 0 : index
    %89 = vector.load %arg14[%c0_85, %c0_86, %c0_87] : memref<6x288x256xbf16, #tpu.memory_space<vmem>>, vector<1x288x256xbf16>
    %90 = vector.shape_cast %89 : vector<1x288x256xbf16> to vector<288x256xbf16>
    %cst_88 = arith.constant dense<0.000000e+00> : vector<16x256xf32>
    %91 = tpu.matmul %88, %90, %cst_88 {dimension_numbers = #tpu.dot_dimension_numbers<[1], [0], [0], [1], [0, 0, 1, 1], [], []>} : vector<16x288xbf16>, vector<288x256xbf16>, vector<16x256xf32> -> vector<16x256xf32>
    %92 = arith.addf %86, %91 : vector<16x256xf32>
    %c1_89 = arith.constant 1 : index
    %c0_90 = arith.constant 0 : index
    %93 = vector.load %arg18[%c1_89, %c0_90] : memref<18x288xf32, #tpu.memory_space<vmem>>, vector<16x288xf32>
    %94 = arith.truncf %93 : vector<16x288xf32> to vector<16x288xbf16>
    %c1_91 = arith.constant 1 : index
    %c0_92 = arith.constant 0 : index
    %c0_93 = arith.constant 0 : index
    %95 = vector.load %arg14[%c1_91, %c0_92, %c0_93] : memref<6x288x256xbf16, #tpu.memory_space<vmem>>, vector<1x288x256xbf16>
    %96 = vector.shape_cast %95 : vector<1x288x256xbf16> to vector<288x256xbf16>
    %cst_94 = arith.constant dense<0.000000e+00> : vector<16x256xf32>
    %97 = tpu.matmul %94, %96, %cst_94 {dimension_numbers = #tpu.dot_dimension_numbers<[1], [0], [0], [1], [0, 0, 1, 1], [], []>} : vector<16x288xbf16>, vector<288x256xbf16>, vector<16x256xf32> -> vector<16x256xf32>
    %98 = arith.addf %92, %97 : vector<16x256xf32>
    %c2_95 = arith.constant 2 : index
    %c0_96 = arith.constant 0 : index
    %99 = vector.load %arg18[%c2_95, %c0_96] : memref<18x288xf32, #tpu.memory_space<vmem>>, vector<16x288xf32>
    %100 = arith.truncf %99 : vector<16x288xf32> to vector<16x288xbf16>
    %c2_97 = arith.constant 2 : index
    %c0_98 = arith.constant 0 : index
    %c0_99 = arith.constant 0 : index
    %101 = vector.load %arg14[%c2_97, %c0_98, %c0_99] : memref<6x288x256xbf16, #tpu.memory_space<vmem>>, vector<1x288x256xbf16>
    %102 = vector.shape_cast %101 : vector<1x288x256xbf16> to vector<288x256xbf16>
    %cst_100 = arith.constant dense<0.000000e+00> : vector<16x256xf32>
    %103 = tpu.matmul %100, %102, %cst_100 {dimension_numbers = #tpu.dot_dimension_numbers<[1], [0], [0], [1], [0, 0, 1, 1], [], []>} : vector<16x288xbf16>, vector<288x256xbf16>, vector<16x256xf32> -> vector<16x256xf32>
    %104 = arith.addf %98, %103 : vector<16x256xf32>
    %c0_101 = arith.constant 0 : index
    %c0_102 = arith.constant 0 : index
    %105 = vector.load %arg19[%c0_101, %c0_102] : memref<18x288xf32, #tpu.memory_space<vmem>>, vector<16x288xf32>
    %106 = arith.truncf %105 : vector<16x288xf32> to vector<16x288xbf16>
    %c3_103 = arith.constant 3 : index
    %c0_104 = arith.constant 0 : index
    %c0_105 = arith.constant 0 : index
    %107 = vector.load %arg14[%c3_103, %c0_104, %c0_105] : memref<6x288x256xbf16, #tpu.memory_space<vmem>>, vector<1x288x256xbf16>
    %108 = vector.shape_cast %107 : vector<1x288x256xbf16> to vector<288x256xbf16>
    %cst_106 = arith.constant dense<0.000000e+00> : vector<16x256xf32>
    %109 = tpu.matmul %106, %108, %cst_106 {dimension_numbers = #tpu.dot_dimension_numbers<[1], [0], [0], [1], [0, 0, 1, 1], [], []>} : vector<16x288xbf16>, vector<288x256xbf16>, vector<16x256xf32> -> vector<16x256xf32>
    %110 = arith.addf %104, %109 : vector<16x256xf32>
    %c1_107 = arith.constant 1 : index
    %c0_108 = arith.constant 0 : index
    %111 = vector.load %arg19[%c1_107, %c0_108] : memref<18x288xf32, #tpu.memory_space<vmem>>, vector<16x288xf32>
    %112 = arith.truncf %111 : vector<16x288xf32> to vector<16x288xbf16>
    %c4_109 = arith.constant 4 : index
    %c0_110 = arith.constant 0 : index
    %c0_111 = arith.constant 0 : index
    %113 = vector.load %arg14[%c4_109, %c0_110, %c0_111] : memref<6x288x256xbf16, #tpu.memory_space<vmem>>, vector<1x288x256xbf16>
    %114 = vector.shape_cast %113 : vector<1x288x256xbf16> to vector<288x256xbf16>
    %cst_112 = arith.constant dense<0.000000e+00> : vector<16x256xf32>
    %115 = tpu.matmul %112, %114, %cst_112 {dimension_numbers = #tpu.dot_dimension_numbers<[1], [0], [0], [1], [0, 0, 1, 1], [], []>} : vector<16x288xbf16>, vector<288x256xbf16>, vector<16x256xf32> -> vector<16x256xf32>
    %116 = arith.addf %110, %115 : vector<16x256xf32>
    %c2_113 = arith.constant 2 : index
    %c0_114 = arith.constant 0 : index
    %117 = vector.load %arg19[%c2_113, %c0_114] : memref<18x288xf32, #tpu.memory_space<vmem>>, vector<16x288xf32>
    %118 = arith.truncf %117 : vector<16x288xf32> to vector<16x288xbf16>
    %c5_115 = arith.constant 5 : index
    %c0_116 = arith.constant 0 : index
    %c0_117 = arith.constant 0 : index
    %119 = vector.load %arg14[%c5_115, %c0_116, %c0_117] : memref<6x288x256xbf16, #tpu.memory_space<vmem>>, vector<1x288x256xbf16>
    %120 = vector.shape_cast %119 : vector<1x288x256xbf16> to vector<288x256xbf16>
    %cst_118 = arith.constant dense<0.000000e+00> : vector<16x256xf32>
    %121 = tpu.matmul %118, %120, %cst_118 {dimension_numbers = #tpu.dot_dimension_numbers<[1], [0], [0], [1], [0, 0, 1, 1], [], []>} : vector<16x288xbf16>, vector<288x256xbf16>, vector<16x256xf32> -> vector<16x256xf32>
    %122 = arith.addf %116, %121 : vector<16x256xf32>
    %c0_119 = arith.constant 0 : index
    %c0_120 = arith.constant 0 : index
    %123 = vector.load %arg15[%c0_119, %c0_120] : memref<1x256xf32, #tpu.memory_space<vmem>>, vector<1x256xf32>
    %124 = vector.broadcast %123 : vector<1x256xf32> to vector<16x256xf32>
    %125 = arith.addf %122, %124 : vector<16x256xf32>
    %cst_121 = arith.constant 0.000000e+00 : f32
    %126 = vector.broadcast %cst_121 : f32 to vector<16x256xf32>
    %127 = arith.maximumf %125, %126 : vector<16x256xf32>
    %c0_122 = arith.constant 0 : index
    %c0_123 = arith.constant 0 : index
    %c0_124 = arith.constant 0 : index
    %128 = vector.load %arg17[%c0_122, %c0_123, %c0_124] : memref<1x16x256xf32, #tpu.memory_space<vmem>>, vector<1x16x256xf32>
    %129 = vector.shape_cast %128 : vector<1x16x256xf32> to vector<16x256xf32>
    %130 = vector.shape_cast %127 : vector<16x256xf32> to vector<1x16x256xf32>
    tpu.vector_store %arg17[%c0_122, %c0_123, %c0_124], %130 {strides = array<i32>} : memref<1x16x256xf32, #tpu.memory_space<vmem>>, vector<1x16x256xf32>,
    return
  }
  func.func @transform_0(%arg0: i32) -> (i32, i32, i32) {
    %c0_i32 = arith.constant 0 : i32
    %c0_i32_0 = arith.constant 0 : i32
    %c0_i32_1 = arith.constant 0 : i32
    return %arg0, %c0_i32, %c0_i32_0 : i32, i32, i32
  }
  func.func @transform_1(%arg0: i32) -> (i32, i32, i32) {
    %c0_i32 = arith.constant 0 : i32
    %c0_i32_0 = arith.constant 0 : i32
    %c0_i32_1 = arith.constant 0 : i32
    return %arg0, %c0_i32, %c0_i32_0 : i32, i32, i32
  }
  func.func @transform_2(%arg0: i32) -> (i32, i32, i32) {
    %c0_i32 = arith.constant 0 : i32
    %c0_i32_0 = arith.constant 0 : i32
    %c0_i32_1 = arith.constant 0 : i32
    return %arg0, %c0_i32, %c0_i32_0 : i32, i32, i32
  }
  func.func @transform_3(%arg0: i32) -> (i32, i32) {
    %c0_i32 = arith.constant 0 : i32
    %c0_i32_0 = arith.constant 0 : i32
    %c0_i32_1 = arith.constant 0 : i32
    return %c0_i32, %c0_i32_0 : i32, i32
  }
  func.func @transform_4(%arg0: i32) -> (i32, i32) {
    %c0_i32 = arith.constant 0 : i32
    %c0_i32_0 = arith.constant 0 : i32
    %c0_i32_1 = arith.constant 0 : i32
    return %c0_i32, %c0_i32_0 : i32, i32
  }
  func.func @transform_5(%arg0: i32) -> (i32, i32) {
    %c0_i32 = arith.constant 0 : i32
    %c0_i32_0 = arith.constant 0 : i32
    %c0_i32_1 = arith.constant 0 : i32
    return %c0_i32, %c0_i32_0 : i32, i32
  }
  func.func @transform_6(%arg0: i32) -> (i32, i32) {
    %c0_i32 = arith.constant 0 : i32
    %c0_i32_0 = arith.constant 0 : i32
    %c0_i32_1 = arith.constant 0 : i32
    return %c0_i32, %c0_i32_0 : i32, i32
  }
  func.func @transform_7(%arg0: i32) -> (i32, i32) {
    %c0_i32 = arith.constant 0 : i32
    %c0_i32_0 = arith.constant 0 : i32
    %c0_i32_1 = arith.constant 0 : i32
    return %c0_i32, %c0_i32_0 : i32, i32
  }
  func.func @transform_8(%arg0: i32) -> (i32, i32) {
    %c0_i32 = arith.constant 0 : i32
    %c0_i32_0 = arith.constant 0 : i32
    %c0_i32_1 = arith.constant 0 : i32
    return %c0_i32, %c0_i32_0 : i32, i32
  }
  func.func @transform_9(%arg0: i32) -> (i32, i32) {
    %c0_i32 = arith.constant 0 : i32
    %c0_i32_0 = arith.constant 0 : i32
    %c0_i32_1 = arith.constant 0 : i32
    return %c0_i32, %c0_i32_0 : i32, i32
  }
  func.func @transform_10(%arg0: i32) -> (i32, i32) {
    %c0_i32 = arith.constant 0 : i32
    %c0_i32_0 = arith.constant 0 : i32
    %c0_i32_1 = arith.constant 0 : i32
    return %c0_i32, %c0_i32_0 : i32, i32
  }
  func.func @transform_11(%arg0: i32) -> (i32, i32, i32) {
    %c0_i32 = arith.constant 0 : i32
    %c0_i32_0 = arith.constant 0 : i32
    %c0_i32_1 = arith.constant 0 : i32
    %c0_i32_2 = arith.constant 0 : i32
    return %c0_i32, %c0_i32_0, %c0_i32_1 : i32, i32, i32
  }
  func.func @transform_12(%arg0: i32) -> (i32, i32) {
    %c0_i32 = arith.constant 0 : i32
    %c0_i32_0 = arith.constant 0 : i32
    %c0_i32_1 = arith.constant 0 : i32
    return %c0_i32, %c0_i32_0 : i32, i32
  }
  func.func @transform_13(%arg0: i32) -> (i32, i32, i32) {
    %c0_i32 = arith.constant 0 : i32
    %c0_i32_0 = arith.constant 0 : i32
    %c0_i32_1 = arith.constant 0 : i32
    %c0_i32_2 = arith.constant 0 : i32
    return %c0_i32, %c0_i32_0, %c0_i32_1 : i32, i32, i32
  }
  func.func @transform_14(%arg0: i32) -> (i32, i32) {
    %c0_i32 = arith.constant 0 : i32
    %c0_i32_0 = arith.constant 0 : i32
    %c0_i32_1 = arith.constant 0 : i32
    return %c0_i32, %c0_i32_0 : i32, i32
  }
  func.func @transform_15(%arg0: i32) -> (i32, i32, i32) {
    %c0_i32 = arith.constant 0 : i32
    %c0_i32_0 = arith.constant 0 : i32
    %c0_i32_1 = arith.constant 0 : i32
    return %arg0, %c0_i32, %c0_i32_0 : i32, i32, i32
  }
  func.func @transform_16(%arg0: i32) -> (i32, i32, i32) {
    %c0_i32 = arith.constant 0 : i32
    %c0_i32_0 = arith.constant 0 : i32
    %c0_i32_1 = arith.constant 0 : i32
    return %arg0, %c0_i32, %c0_i32_0 : i32, i32, i32
  }
}

</mosaic_0001>

<llo_original>
// kernel: tpu_custom_call.1
$region0: #{tpu_custom_call.1}
  #allocation0 [shape = 'u32[]', space=smem, size = 0x4, offset = 0x4, fixed_abs, tag = 'smem constant byte address 0x4 - core index']
  #allocation1 [shape = 'u32[144,128]{1,0:T(1,128)}', space=vmem, size = 0x12000, scoped, tag = 'internal scratch']
  #allocation2 [shape = 'f32[18,288]{1,0:T(8,128)}', space=vmem, size = 0x9000, scoped, tag = 'scratch operand']
  #allocation3 [shape = 'f32[18,288]{1,0:T(8,128)}', space=vmem, size = 0x9000, scoped, tag = 'scratch operand']
  %s0 = inlined_call_operand.hbm [shape: bf16[2,16,256], index: 0, kind: input, shape index: {}]
  %s1 = inlined_call_operand.vmem [shape: bf16[2,8,256], index: 1, kind: input, shape index: {}]
  %s2 = inlined_call_operand.vmem [shape: bf16[2,4,256], index: 2, kind: input, shape index: {}]
  %s3 = inlined_call_operand.vmem [shape: bf16[256,128], index: 3, kind: input, shape index: {}]
  %s4 = inlined_call_operand.hbm [shape: f32[1,128], index: 4, kind: input, shape index: {}]
  %s5 = inlined_call_operand.vmem [shape: bf16[16,8], index: 5, kind: input, shape index: {}]
  %s6 = inlined_call_operand.hbm [shape: bf16[128,256], index: 6, kind: input, shape index: {}]
  %s7 = inlined_call_operand.vmem [shape: bf16[256,64], index: 7, kind: input, shape index: {}]
  %s8 = inlined_call_operand.vmem [shape: f32[1,64], index: 8, kind: input, shape index: {}]
  %s9 = inlined_call_operand.vmem [shape: bf16[16,4], index: 9, kind: input, shape index: {}]
  %s10 = inlined_call_operand.vmem [shape: bf16[64,256], index: 10, kind: input, shape index: {}]
  %s11 = inlined_call_operand.hbm [shape: bf16[6,288,256], index: 11, kind: input, shape index: {}]
  %s12 = inlined_call_operand.vmem [shape: f32[1,256], index: 12, kind: input, shape index: {}]
  %s13 = inlined_call_operand.hbm [shape: bf16[6,288,256], index: 13, kind: input, shape index: {}]
  %s14 = inlined_call_operand.vmem [shape: f32[1,256], index: 14, kind: input, shape index: {}]
  %s15 = inlined_call_operand.hbm [shape: f32[2,16,256], index: 15, kind: output, shape index: {0}]
  %s16 = inlined_call_operand.hbm [shape: f32[2,16,256], index: 16, kind: output, shape index: {1}]
  %17 = xla_tuple %s15, %s16
  %s18 = sld [smem:[#allocation0]]
  $region121: #{tpu_custom_call.1} parent=0
    _
  %s20 = ssub.s32 1, %s18
  %s21 = scalar_select 0, %s20, %s18
  $region1: #{tpu_custom_call.1} parent=0
    #allocation4 [shape = 'u8[16384]{0}', space=vmem, size = 0x4000, scoped, tag = 'input window, operand 0']
    #allocation5 [shape = 's32[2]{0}', space=sflag, size = 0x8, scoped, tag = 'scoped memory for tpu_custom_call.1']
    #allocation6 [shape = 's32[2]{0}', space=sflag, size = 0x8, scoped, tag = 'scoped memory for tpu_custom_call.1']
    #allocation7 [shape = 'u8[512]{0}', space=vmem, size = 0x400, scoped, tag = 'input window, operand 4, single buffered']
    #allocation8 [shape = 's32[1]{0}', space=sflag, size = 0x4, scoped, tag = 'scoped memory for tpu_custom_call.1']
    #allocation9 [shape = 'u8[65536]{0}', space=vmem, size = 0x10000, scoped, tag = 'input window, operand 6, single buffered']
    #allocation10 [shape = 'u8[884736]{0}', space=vmem, size = 0xd8000, scoped, tag = 'input window, operand 11, single buffered']
    #allocation11 [shape = 's32[1]{0}', space=sflag, size = 0x4, scoped, tag = 'scoped memory for tpu_custom_call.1']
    #allocation12 [shape = 'u8[884736]{0}', space=vmem, size = 0xd8000, scoped, tag = 'input window, operand 13, single buffered']
    #allocation13 [shape = 'u8[32768]{0}', space=vmem, size = 0x8000, scoped, tag = 'output window, operand 0']
    #allocation14 [shape = 'u8[32768]{0}', space=vmem, size = 0x8000, scoped, tag = 'output window, operand 1']
    #allocation15 [shape = 's32[2]{0}', space=sflag, size = 0x8, scoped, tag = 'scoped memory for tpu_custom_call.1']
    %22 = vsyncpa [#allocation5], 0
    %s23 = scalar_lea.sflag [#allocation5], 1
    %24 = vsyncpa %s23, 0
    %25 = vsyncpa [#allocation8], 0
    %26 = vsyncpa [#allocation11], 0
    %27 = vsyncpa [#allocation6], 0
    %s28 = scalar_lea.sflag [#allocation6], 1
    %29 = vsyncpa %s28, 0
    %30 = vsyncpa [#allocation15], 0
    %s31 = scalar_lea.sflag [#allocation15], 1
    %32 = vsyncpa %s31, 0
    loop: start=0, step=1, limit=4
    $region2: #{tpu_custom_call.1} parent=1 // loop_pre_header
      _
    $region3: #{tpu_custom_call.1} parent=1 // loop_header
      %s34 = sphi 0, %s38
      %p35 = scmp.ge.s32.totalorder %s34, 4
      %s44 = sphi 0, %s46
      %s47 = sphi 0, %s44
      %s48 = sphi 0, %s47
      %s64 = sphi 0, %s48
      %s70 = sphi 0, %s72
      %s73 = sphi 0, %s70
      %s74 = sphi 0, %s73
      %s90 = sphi 0, %s74
      %s96 = sphi 0, %s98
      %s99 = sphi 0, %s96
      %s100 = sphi 0, %s99
      %s116 = sphi 0, %s100
      %s120 = sphi 0, %s120
      %s122 = sphi 0, %s120
      %s123 = sphi 0, %s122
      %s137 = sphi 0, %s123
      %s141 = sphi 0, %s141
      %s143 = sphi 0, %s141
      %s144 = sphi 0, %s143
      %s158 = sphi 0, %s144
      %s162 = sphi 0, %s162
      %s164 = sphi 0, %s162
      %s165 = sphi 0, %s164
      %s179 = sphi 0, %s165
      %s183 = sphi 0, %s183
      %s185 = sphi 0, %s183
      %s186 = sphi 0, %s185
      %s200 = sphi 0, %s186
      %s204 = sphi 0, %s204
      %s206 = sphi 0, %s204
      %s207 = sphi 0, %s206
      %s221 = sphi 0, %s207
      %s225 = sphi 0, %s225
      %s227 = sphi 0, %s225
      %s228 = sphi 0, %s227
      %s242 = sphi 0, %s228
      %s246 = sphi 0, %s246
      %s248 = sphi 0, %s246
      %s249 = sphi 0, %s248
      %s263 = sphi 0, %s249
      %s267 = sphi 0, %s267
      %s269 = sphi 0, %s267
      %s270 = sphi 0, %s269
      %s284 = sphi 0, %s270
      %s288 = sphi 0, %s288
      %s290 = sphi 0, %s288
      %s291 = sphi 0, %s290
      %s305 = sphi 0, %s291
      %s309 = sphi 0, %s309
      %s311 = sphi 0, %s309
      %s312 = sphi 0, %s311
      %s326 = sphi 0, %s312
      %s330 = sphi 0, %s330
      %s332 = sphi 0, %s330
      %s333 = sphi 0, %s332
      %s347 = sphi 0, %s333
      %s351 = sphi 0, %s351
      %s353 = sphi 0, %s351
      %s354 = sphi 0, %s353
      %s368 = sphi 0, %s354
      %s374 = sphi 0, %s376
      %s377 = sphi 0, %s374
      %s378 = sphi 0, %s377
      %s394 = sphi 0, %s378
      %s400 = sphi 0, %s402
      %s403 = sphi 0, %s400
      %s404 = sphi 0, %s403
      %s420 = sphi 0, %s404
    $region4: #{tpu_custom_call.1} parent=1 // loop_header_branch
      %37 = sbr.rel (%p35) target = $region8
    $region5: #{tpu_custom_call.1} parent=1 // loop_body
      %s39 = ssub.s32 %s34, 1
      %s40 = ssub.s32 %s34, 2
      %s41 = sadd.s32 %s34, 1
      %s42 = ssub.s32 %s34, %s41
      %p43 = scmp.eq.s32.totalorder %s42, 0
      %s45 = sadd.s32 %s44, 1
      %s46 = scalar_select %p43, %s44, %s45
      %p49 = pneg %p43
      %p50 = scmp.eq.s32.totalorder %s34, 1
      %p51 = por %p49, %p50
      %p52 = scmp.ne.s32.totalorder %s44, %s47
      %p53 = scmp.eq.s32.totalorder %s34, 0
      %p54 = por %p52, %p53
      %p55 = scmp.ne.s32.totalorder %s44, %s47
      %p56 = scmp.eq.s32.totalorder %s39, 1
      %p57 = por %p55, %p56
      %p58 = scmp.ne.s32.totalorder %s47, %s48
      %p59 = scmp.eq.s32.totalorder %s39, 0
      %p60 = por %p58, %p59
      %p61 = scmp.ne.s32.totalorder %s47, %s48
      %p62 = scmp.eq.s32.totalorder %s40, 1
      %p63 = por %p61, %p62
      %p65 = scmp.ne.s32.totalorder %s48, %s64
      %p66 = scmp.eq.s32.totalorder %s40, 0
      %p67 = por %p65, %p66
      %s68 = ssub.s32 %s34, %s41
      %p69 = scmp.eq.s32.totalorder %s68, 0
      %s71 = sadd.s32 %s70, 1
      %s72 = scalar_select %p69, %s70, %s71
      %p75 = pneg %p69
      %p76 = scmp.eq.s32.totalorder %s34, 1
      %p77 = por %p75, %p76
      %p78 = scmp.ne.s32.totalorder %s70, %s73
      %p79 = scmp.eq.s32.totalorder %s34, 0
      %p80 = por %p78, %p79
      %p81 = scmp.ne.s32.totalorder %s70, %s73
      %p82 = scmp.eq.s32.totalorder %s39, 1
      %p83 = por %p81, %p82
      %p84 = scmp.ne.s32.totalorder %s73, %s74
      %p85 = scmp.eq.s32.totalorder %s39, 0
      %p86 = por %p84, %p85
      %p87 = scmp.ne.s32.totalorder %s73, %s74
      %p88 = scmp.eq.s32.totalorder %s40, 1
      %p89 = por %p87, %p88
      %p91 = scmp.ne.s32.totalorder %s74, %s90
      %p92 = scmp.eq.s32.totalorder %s40, 0
      %p93 = por %p91, %p92
      %s94 = ssub.s32 %s34, %s41
      %p95 = scmp.eq.s32.totalorder %s94, 0
      %s97 = sadd.s32 %s96, 1
      %s98 = scalar_select %p95, %s96, %s97
      %p101 = pneg %p95
      %p102 = scmp.eq.s32.totalorder %s34, 1
      %p103 = por %p101, %p102
      %p104 = scmp.ne.s32.totalorder %s96, %s99
      %p105 = scmp.eq.s32.totalorder %s34, 0
      %p106 = por %p104, %p105
      %p107 = scmp.ne.s32.totalorder %s96, %s99
      %p108 = scmp.eq.s32.totalorder %s39, 1
      %p109 = por %p107, %p108
      %p110 = scmp.ne.s32.totalorder %s99, %s100
      %p111 = scmp.eq.s32.totalorder %s39, 0
      %p112 = por %p110, %p111
      %p113 = scmp.ne.s32.totalorder %s99, %s100
      %p114 = scmp.eq.s32.totalorder %s40, 1
      %p115 = por %p113, %p114
      %p117 = scmp.ne.s32.totalorder %s100, %s116
      %p118 = scmp.eq.s32.totalorder %s40, 0
      %p119 = por %p117, %p118
      %s121 = sadd.s32 %s120, 1
      %p124 = scmp.eq.s32.totalorder %s34, 1
      %p125 = scmp.ne.s32.totalorder %s120, %s122
      %p126 = scmp.eq.s32.totalorder %s34, 0
      %p127 = por %p125, %p126
      %p128 = scmp.ne.s32.totalorder %s120, %s122
      %p129 = scmp.eq.s32.totalorder %s39, 1
      %p130 = por %p128, %p129
      %p131 = scmp.ne.s32.totalorder %s122, %s123
      %p132 = scmp.eq.s32.totalorder %s39, 0
      %p133 = por %p131, %p132
      %p134 = scmp.ne.s32.totalorder %s122, %s123
      %p135 = scmp.eq.s32.totalorder %s40, 1
      %p136 = por %p134, %p135
      %p138 = scmp.ne.s32.totalorder %s123, %s137
      %p139 = scmp.eq.s32.totalorder %s40, 0
      %p140 = por %p138, %p139
      %s142 = sadd.s32 %s141, 1
      %p145 = scmp.eq.s32.totalorder %s34, 1
      %p146 = scmp.ne.s32.totalorder %s141, %s143
      %p147 = scmp.eq.s32.totalorder %s34, 0
      %p148 = por %p146, %p147
      %p149 = scmp.ne.s32.totalorder %s141, %s143
      %p150 = scmp.eq.s32.totalorder %s39, 1
      %p151 = por %p149, %p150
      %p152 = scmp.ne.s32.totalorder %s143, %s144
      %p153 = scmp.eq.s32.totalorder %s39, 0
      %p154 = por %p152, %p153
      %p155 = scmp.ne.s32.totalorder %s143, %s144
      %p156 = scmp.eq.s32.totalorder %s40, 1
      %p157 = por %p155, %p156
      %p159 = scmp.ne.s32.totalorder %s144, %s158
      %p160 = scmp.eq.s32.totalorder %s40, 0
      %p161 = por %p159, %p160
      %s163 = sadd.s32 %s162, 1
      %p166 = scmp.eq.s32.totalorder %s34, 1
      %p167 = scmp.ne.s32.totalorder %s162, %s164
      %p168 = scmp.eq.s32.totalorder %s34, 0
      %p169 = por %p167, %p168
      %p170 = scmp.ne.s32.totalorder %s162, %s164
      %p171 = scmp.eq.s32.totalorder %s39, 1
      %p172 = por %p170, %p171
      %p173 = scmp.ne.s32.totalorder %s164, %s165
      %p174 = scmp.eq.s32.totalorder %s39, 0
      %p175 = por %p173, %p174
      %p176 = scmp.ne.s32.totalorder %s164, %s165
      %p177 = scmp.eq.s32.totalorder %s40, 1
      %p178 = por %p176, %p177
      %p180 = scmp.ne.s32.totalorder %s165, %s179
      %p181 = scmp.eq.s32.totalorder %s40, 0
      %p182 = por %p180, %p181
      %s184 = sadd.s32 %s183, 1
      %p187 = scmp.eq.s32.totalorder %s34, 1
      %p188 = scmp.ne.s32.totalorder %s183, %s185
      %p189 = scmp.eq.s32.totalorder %s34, 0
      %p190 = por %p188, %p189
      %p191 = scmp.ne.s32.totalorder %s183, %s185
      %p192 = scmp.eq.s32.totalorder %s39, 1
      %p193 = por %p191, %p192
      %p194 = scmp.ne.s32.totalorder %s185, %s186
      %p195 = scmp.eq.s32.totalorder %s39, 0
      %p196 = por %p194, %p195
      %p197 = scmp.ne.s32.totalorder %s185, %s186
      %p198 = scmp.eq.s32.totalorder %s40, 1
      %p199 = por %p197, %p198
      %p201 = scmp.ne.s32.totalorder %s186, %s200
      %p202 = scmp.eq.s32.totalorder %s40, 0
      %p203 = por %p201, %p202
      %s205 = sadd.s32 %s204, 1
      %p208 = scmp.eq.s32.totalorder %s34, 1
      %p209 = scmp.ne.s32.totalorder %s204, %s206
      %p210 = scmp.eq.s32.totalorder %s34, 0
      %p211 = por %p209, %p210
      %p212 = scmp.ne.s32.totalorder %s204, %s206
      %p213 = scmp.eq.s32.totalorder %s39, 1
      %p214 = por %p212, %p213
      %p215 = scmp.ne.s32.totalorder %s206, %s207
      %p216 = scmp.eq.s32.totalorder %s39, 0
      %p217 = por %p215, %p216
      %p218 = scmp.ne.s32.totalorder %s206, %s207
      %p219 = scmp.eq.s32.totalorder %s40, 1
      %p220 = por %p218, %p219
      %p222 = scmp.ne.s32.totalorder %s207, %s221
      %p223 = scmp.eq.s32.totalorder %s40, 0
      %p224 = por %p222, %p223
      %s226 = sadd.s32 %s225, 1
      %p229 = scmp.eq.s32.totalorder %s34, 1
      %p230 = scmp.ne.s32.totalorder %s225, %s227
      %p231 = scmp.eq.s32.totalorder %s34, 0
      %p232 = por %p230, %p231
      %p233 = scmp.ne.s32.totalorder %s225, %s227
      %p234 = scmp.eq.s32.totalorder %s39, 1
      %p235 = por %p233, %p234
      %p236 = scmp.ne.s32.totalorder %s227, %s228
      %p237 = scmp.eq.s32.totalorder %s39, 0
      %p238 = por %p236, %p237
      %p239 = scmp.ne.s32.totalorder %s227, %s228
      %p240 = scmp.eq.s32.totalorder %s40, 1
      %p241 = por %p239, %p240
      %p243 = scmp.ne.s32.totalorder %s228, %s242
      %p244 = scmp.eq.s32.totalorder %s40, 0
      %p245 = por %p243, %p244
      %s247 = sadd.s32 %s246, 1
      %p250 = scmp.eq.s32.totalorder %s34, 1
      %p251 = scmp.ne.s32.totalorder %s246, %s248
      %p252 = scmp.eq.s32.totalorder %s34, 0
      %p253 = por %p251, %p252
      %p254 = scmp.ne.s32.totalorder %s246, %s248
      %p255 = scmp.eq.s32.totalorder %s39, 1
      %p256 = por %p254, %p255
      %p257 = scmp.ne.s32.totalorder %s248, %s249
      %p258 = scmp.eq.s32.totalorder %s39, 0
      %p259 = por %p257, %p258
      %p260 = scmp.ne.s32.totalorder %s248, %s249
      %p261 = scmp.eq.s32.totalorder %s40, 1
      %p262 = por %p260, %p261
      %p264 = scmp.ne.s32.totalorder %s249, %s263
      %p265 = scmp.eq.s32.totalorder %s40, 0
      %p266 = por %p264, %p265
      %s268 = sadd.s32 %s267, 1
      %p271 = scmp.eq.s32.totalorder %s34, 1
      %p272 = scmp.ne.s32.totalorder %s267, %s269
      %p273 = scmp.eq.s32.totalorder %s34, 0
      %p274 = por %p272, %p273
      %p275 = scmp.ne.s32.totalorder %s267, %s269
      %p276 = scmp.eq.s32.totalorder %s39, 1
      %p277 = por %p275, %p276
      %p278 = scmp.ne.s32.totalorder %s269, %s270
      %p279 = scmp.eq.s32.totalorder %s39, 0
      %p280 = por %p278, %p279
      %p281 = scmp.ne.s32.totalorder %s269, %s270
      %p282 = scmp.eq.s32.totalorder %s40, 1
      %p283 = por %p281, %p282
      %p285 = scmp.ne.s32.totalorder %s270, %s284
      %p286 = scmp.eq.s32.totalorder %s40, 0
      %p287 = por %p285, %p286
      %s289 = sadd.s32 %s288, 1
      %p292 = scmp.eq.s32.totalorder %s34, 1
      %p293 = scmp.ne.s32.totalorder %s288, %s290
      %p294 = scmp.eq.s32.totalorder %s34, 0
      %p295 = por %p293, %p294
      %p296 = scmp.ne.s32.totalorder %s288, %s290
      %p297 = scmp.eq.s32.totalorder %s39, 1
      %p298 = por %p296, %p297
      %p299 = scmp.ne.s32.totalorder %s290, %s291
      %p300 = scmp.eq.s32.totalorder %s39, 0
      %p301 = por %p299, %p300
      %p302 = scmp.ne.s32.totalorder %s290, %s291
      %p303 = scmp.eq.s32.totalorder %s40, 1
      %p304 = por %p302, %p303
      %p306 = scmp.ne.s32.totalorder %s291, %s305
      %p307 = scmp.eq.s32.totalorder %s40, 0
      %p308 = por %p306, %p307
      %s310 = sadd.s32 %s309, 1
      %p313 = scmp.eq.s32.totalorder %s34, 1
      %p314 = scmp.ne.s32.totalorder %s309, %s311
      %p315 = scmp.eq.s32.totalorder %s34, 0
      %p316 = por %p314, %p315
      %p317 = scmp.ne.s32.totalorder %s309, %s311
      %p318 = scmp.eq.s32.totalorder %s39, 1
      %p319 = por %p317, %p318
      %p320 = scmp.ne.s32.totalorder %s311, %s312
      %p321 = scmp.eq.s32.totalorder %s39, 0
      %p322 = por %p320, %p321
      %p323 = scmp.ne.s32.totalorder %s311, %s312
      %p324 = scmp.eq.s32.totalorder %s40, 1
      %p325 = por %p323, %p324
      %p327 = scmp.ne.s32.totalorder %s312, %s326
      %p328 = scmp.eq.s32.totalorder %s40, 0
      %p329 = por %p327, %p328
      %s331 = sadd.s32 %s330, 1
      %p334 = scmp.eq.s32.totalorder %s34, 1
      %p335 = scmp.ne.s32.totalorder %s330, %s332
      %p336 = scmp.eq.s32.totalorder %s34, 0
      %p337 = por %p335, %p336
      %p338 = scmp.ne.s32.totalorder %s330, %s332
      %p339 = scmp.eq.s32.totalorder %s39, 1
      %p340 = por %p338, %p339
      %p341 = scmp.ne.s32.totalorder %s332, %s333
      %p342 = scmp.eq.s32.totalorder %s39, 0
      %p343 = por %p341, %p342
      %p344 = scmp.ne.s32.totalorder %s332, %s333
      %p345 = scmp.eq.s32.totalorder %s40, 1
      %p346 = por %p344, %p345
      %p348 = scmp.ne.s32.totalorder %s333, %s347
      %p349 = scmp.eq.s32.totalorder %s40, 0
      %p350 = por %p348, %p349
      %s352 = sadd.s32 %s351, 1
      %p355 = scmp.eq.s32.totalorder %s34, 1
      %p356 = scmp.ne.s32.totalorder %s351, %s353
      %p357 = scmp.eq.s32.totalorder %s34, 0
      %p358 = por %p356, %p357
      %p359 = scmp.ne.s32.totalorder %s351, %s353
      %p360 = scmp.eq.s32.totalorder %s39, 1
      %p361 = por %p359, %p360
      %p362 = scmp.ne.s32.totalorder %s353, %s354
      %p363 = scmp.eq.s32.totalorder %s39, 0
      %p364 = por %p362, %p363
      %p365 = scmp.ne.s32.totalorder %s353, %s354
      %p366 = scmp.eq.s32.totalorder %s40, 1
      %p367 = por %p365, %p366
      %p369 = scmp.ne.s32.totalorder %s354, %s368
      %p370 = scmp.eq.s32.totalorder %s40, 0
      %p371 = por %p369, %p370
      %s372 = ssub.s32 %s34, %s41
      %p373 = scmp.eq.s32.totalorder %s372, 0
      %s375 = sadd.s32 %s374, 1
      %s376 = scalar_select %p373, %s374, %s375
      %p379 = pneg %p373
      %p380 = scmp.eq.s32.totalorder %s34, 1
      %p381 = por %p379, %p380
      %p382 = scmp.ne.s32.totalorder %s374, %s377
      %p383 = scmp.eq.s32.totalorder %s34, 0
      %p384 = por %p382, %p383
      %p385 = scmp.ne.s32.totalorder %s374, %s377
      %p386 = scmp.eq.s32.totalorder %s39, 1
      %p387 = por %p385, %p386
      %p388 = scmp.ne.s32.totalorder %s377, %s378
      %p389 = scmp.eq.s32.totalorder %s39, 0
      %p390 = por %p388, %p389
      %p391 = scmp.ne.s32.totalorder %s377, %s378
      %p392 = scmp.eq.s32.totalorder %s40, 1
      %p393 = por %p391, %p392
      %p395 = scmp.ne.s32.totalorder %s378, %s394
      %p396 = scmp.eq.s32.totalorder %s40, 0
      %p397 = por %p395, %p396
      %s398 = ssub.s32 %s34, %s41
      %p399 = scmp.eq.s32.totalorder %s398, 0
      %s401 = sadd.s32 %s400, 1
      %s402 = scalar_select %p399, %s400, %s401
      %p405 = pneg %p399
      %p406 = scmp.eq.s32.totalorder %s34, 1
      %p407 = por %p405, %p406
      %p408 = scmp.ne.s32.totalorder %s400, %s403
      %p409 = scmp.eq.s32.totalorder %s34, 0
      %p410 = por %p408, %p409
      %p411 = scmp.ne.s32.totalorder %s400, %s403
      %p412 = scmp.eq.s32.totalorder %s39, 1
      %p413 = por %p411, %p412
      %p414 = scmp.ne.s32.totalorder %s403, %s404
      %p415 = scmp.eq.s32.totalorder %s39, 0
      %p416 = por %p414, %p415
      %p417 = scmp.ne.s32.totalorder %s403, %s404
      %p418 = scmp.eq.s32.totalorder %s40, 1
      %p419 = por %p417, %p418
      %p421 = scmp.ne.s32.totalorder %s404, %s420
      %p422 = scmp.eq.s32.totalorder %s40, 0
      %p423 = por %p421, %p422
      %p424 = scmp.le.s32.totalorder 1, %s34
      %p425 = scmp.lt.s32.totalorder %s34, 3
      %p426 = pnand %p424, %p425
      %p427 = pneg %p426
      // Predicated region
      $region9: #{tpu_custom_call.1} parent=5 // pred_check
        _
      $region10: #{tpu_custom_call.1} parent=5 // pred_check_branch
        %429 = sbr.rel (%p426) target = $region12
      $region11: #{tpu_custom_call.1} parent=5 // pred_region
        %s430 = ssub.s32 %s34, 1
        // Predicated region
        $region13: #{tpu_custom_call.1} parent=11 // pred_check
          %p431 = pneg %p133
        $region14: #{tpu_custom_call.1} parent=11 // pred_check_branch
          %433 = sbr.rel (%p431) target = $region16
        $region15: #{tpu_custom_call.1} parent=11 // pred_region
          _
        $region16: #{tpu_custom_call.1} parent=11 // pred_fallthru
          _
        // Predicated region
        $region17: #{tpu_custom_call.1} parent=11 // pred_check
          %p434 = pneg %p154
        $region18: #{tpu_custom_call.1} parent=11 // pred_check_branch
          %436 = sbr.rel (%p434) target = $region20
        $region19: #{tpu_custom_call.1} parent=11 // pred_region
          %s438 = ssub.s32 16, 16
          %439 = vsyncadd [#allocation8], %s438
          %s441 = sshll.u32 [#allocation7], 4
          %s442 = int_to_ptr.vmem [resolvable:$true] %s441
          %444 = dma.hbm_to_vmem [thread:$0]  %s4, 16, %s442, [#allocation8]
        $region20: #{tpu_custom_call.1} parent=11 // pred_fallthru
          _
        // Predicated region
        $region21: #{tpu_custom_call.1} parent=11 // pred_check
          %p445 = pneg %p175
        $region22: #{tpu_custom_call.1} parent=11 // pred_check_branch
          %447 = sbr.rel (%p445) target = $region24
        $region23: #{tpu_custom_call.1} parent=11 // pred_region
          _
        $region24: #{tpu_custom_call.1} parent=11 // pred_fallthru
          _
        // Predicated region
        $region25: #{tpu_custom_call.1} parent=11 // pred_check
          %p448 = pneg %p196
        $region26: #{tpu_custom_call.1} parent=11 // pred_check_branch
          %450 = sbr.rel (%p448) target = $region28
        $region27: #{tpu_custom_call.1} parent=11 // pred_region
          %s452 = ssub.s32 2048, 2048
          %453 = vsyncadd [#allocation8], %s452
          %s454 = sshll.u32 [#allocation9], 4
          %s455 = int_to_ptr.vmem [resolvable:$true] %s454
          %460 = dma.hbm_to_vmem [thread:$0]  %s6, 2048, %s455, [#allocation8], 128, 128, 8
        $region28: #{tpu_custom_call.1} parent=11 // pred_fallthru
          _
        // Predicated region
        $region29: #{tpu_custom_call.1} parent=11 // pred_check
          %p461 = pneg %p217
        $region30: #{tpu_custom_call.1} parent=11 // pred_check_branch
          %463 = sbr.rel (%p461) target = $region32
        $region31: #{tpu_custom_call.1} parent=11 // pred_region
          _
        $region32: #{tpu_custom_call.1} parent=11 // pred_fallthru
          _
        // Predicated region
        $region33: #{tpu_custom_call.1} parent=11 // pred_check
          %p464 = pneg %p238
        $region34: #{tpu_custom_call.1} parent=11 // pred_check_branch
          %466 = sbr.rel (%p464) target = $region36
        $region35: #{tpu_custom_call.1} parent=11 // pred_region
          _
        $region36: #{tpu_custom_call.1} parent=11 // pred_fallthru
          _
        // Predicated region
        $region37: #{tpu_custom_call.1} parent=11 // pred_check
          %p467 = pneg %p259
        $region38: #{tpu_custom_call.1} parent=11 // pred_check_branch
          %469 = sbr.rel (%p467) target = $region40
        $region39: #{tpu_custom_call.1} parent=11 // pred_region
          _
        $region40: #{tpu_custom_call.1} parent=11 // pred_fallthru
          _
        // Predicated region
        $region41: #{tpu_custom_call.1} parent=11 // pred_check
          %p470 = pneg %p280
        $region42: #{tpu_custom_call.1} parent=11 // pred_check_branch
          %472 = sbr.rel (%p470) target = $region44
        $region43: #{tpu_custom_call.1} parent=11 // pred_region
          _
        $region44: #{tpu_custom_call.1} parent=11 // pred_fallthru
          _
        // Predicated region
        $region45: #{tpu_custom_call.1} parent=11 // pred_check
          %p473 = pneg %p301
        $region46: #{tpu_custom_call.1} parent=11 // pred_check_branch
          %475 = sbr.rel (%p473) target = $region48
        $region47: #{tpu_custom_call.1} parent=11 // pred_region
          %s477 = ssub.s32 27648, 27648
          %478 = vsyncadd [#allocation11], %s477
          %s479 = sshll.u32 [#allocation10], 4
          %s480 = int_to_ptr.vmem [resolvable:$true] %s479
          %485 = dma.hbm_to_vmem [thread:$0]  %s11, 27648, %s480, [#allocation11], 128, 128, 8
        $region48: #{tpu_custom_call.1} parent=11 // pred_fallthru
          _
        // Predicated region
        $region49: #{tpu_custom_call.1} parent=11 // pred_check
          %p486 = pneg %p322
        $region50: #{tpu_custom_call.1} parent=11 // pred_check_branch
          %488 = sbr.rel (%p486) target = $region52
        $region51: #{tpu_custom_call.1} parent=11 // pred_region
          _
        $region52: #{tpu_custom_call.1} parent=11 // pred_fallthru
          _
        // Predicated region
        $region53: #{tpu_custom_call.1} parent=11 // pred_check
          %p489 = pneg %p343
        $region54: #{tpu_custom_call.1} parent=11 // pred_check_branch
          %491 = sbr.rel (%p489) target = $region56
        $region55: #{tpu_custom_call.1} parent=11 // pred_region
          %s493 = ssub.s32 27648, 27648
          %494 = vsyncadd [#allocation11], %s493
          %s495 = sshll.u32 [#allocation12], 4
          %s496 = int_to_ptr.vmem [resolvable:$true] %s495
          %501 = dma.hbm_to_vmem [thread:$0]  %s13, 27648, %s496, [#allocation11], 128, 128, 8
        $region56: #{tpu_custom_call.1} parent=11 // pred_fallthru
          _
        // Predicated region
        $region57: #{tpu_custom_call.1} parent=11 // pred_check
          %p502 = pneg %p364
        $region58: #{tpu_custom_call.1} parent=11 // pred_check_branch
          %504 = sbr.rel (%p502) target = $region60
        $region59: #{tpu_custom_call.1} parent=11 // pred_region
          _
        $region60: #{tpu_custom_call.1} parent=11 // pred_fallthru
          _
      $region12: #{tpu_custom_call.1} parent=5 // pred_fallthru
        _
      %p505 = scmp.lt.s32.totalorder %s34, 2
      // Predicated region
      $region61: #{tpu_custom_call.1} parent=5 // pred_check
        %p506 = pneg %p505
      $region62: #{tpu_custom_call.1} parent=5 // pred_check_branch
        %508 = sbr.rel (%p506) target = $region64
      $region63: #{tpu_custom_call.1} parent=5 // pred_region
        // Predicated region
        $region65: #{tpu_custom_call.1} parent=63 // pred_check
          %p509 = pneg %p54
        $region66: #{tpu_custom_call.1} parent=63 // pred_check_branch
          %511 = sbr.rel (%p509) target = $region68
        $region67: #{tpu_custom_call.1} parent=63 // pred_region
          %s512 = sand.u32 %s44, 1
          %s513 = scalar_lea.sflag [#allocation5], %s512
          %s514 = sand.u32 %s44, 1
          %s515 = smul.addr %s514, 16
          %s516 = scalar_lea.vmem [#allocation4], %s515
          %s518 = ssub.s32 256, 256
          %519 = vsyncadd %s513, %s518
          %s520 = smul.addr %s34, 4
          %s521 = smul.addr %s520, 64
          %s522 = scalar_lea.hbm %s0, %s521
          %s523 = sshll.u32 %s516, 4
          %s524 = int_to_ptr.vmem [resolvable:$true] %s523
          %529 = dma.hbm_to_vmem [thread:$0]  %s522, 256, %s524, %s513, 128, 128, 8
        $region68: #{tpu_custom_call.1} parent=63 // pred_fallthru
          _
        // Predicated region
        $region69: #{tpu_custom_call.1} parent=63 // pred_check
          %p530 = pneg %p80
        $region70: #{tpu_custom_call.1} parent=63 // pred_check_branch
          %532 = sbr.rel (%p530) target = $region72
        $region71: #{tpu_custom_call.1} parent=63 // pred_region
          %p533 = scmp.lt.s32.totalorder %s34, 1
          %s534 = scalar_select %p533, %s34, 1
          %s535 = smul.addr %s534, 2
          %s536 = smul.addr %s535, 4
          %s537 = scalar_lea.vmem %s1, %s536
        $region72: #{tpu_custom_call.1} parent=63 // pred_fallthru
          _
        // Predicated region
        $region73: #{tpu_custom_call.1} parent=63 // pred_check
          %p538 = pneg %p106
        $region74: #{tpu_custom_call.1} parent=63 // pred_check_branch
          %540 = sbr.rel (%p538) target = $region76
        $region75: #{tpu_custom_call.1} parent=63 // pred_region
          %p541 = scmp.lt.s32.totalorder %s34, 1
          %s542 = scalar_select %p541, %s34, 1
          %s543 = smul.addr %s542, 2
          %s544 = smul.addr %s543, 2
          %s545 = scalar_lea.vmem %s2, %s544
        $region76: #{tpu_custom_call.1} parent=63 // pred_fallthru
          _
      $region64: #{tpu_custom_call.1} parent=5 // pred_fallthru
        _
      %p546 = scmp.le.s32.totalorder 1, %s34
      %p547 = scmp.lt.s32.totalorder %s34, 3
      %p548 = pnand %p546, %p547
      %p549 = pneg %p548
      // Predicated region
      $region77: #{tpu_custom_call.1} parent=5 // pred_check
        _
      $region78: #{tpu_custom_call.1} parent=5 // pred_check_branch
        %551 = sbr.rel (%p548) target = $region80
      $region79: #{tpu_custom_call.1} parent=5 // pred_region
        %s552 = ssub.s32 %s34, 1
        %s553 = sand.u32 %s47, 1
        %s554 = scalar_lea.sflag [#allocation5], %s553
        %s555 = sand.u32 %s47, 1
        %s556 = smul.addr %s555, 16
        %s557 = scalar_lea.vmem [#allocation4], %s556
        // Predicated region
        $region81: #{tpu_custom_call.1} parent=79 // pred_check
          %p558 = pneg %p60
        $region82: #{tpu_custom_call.1} parent=79 // pred_check_branch
          %560 = sbr.rel (%p558) target = $region84
        $region83: #{tpu_custom_call.1} parent=79 // pred_region
          %561 = dma.done %s554, 256
        $region84: #{tpu_custom_call.1} parent=79 // pred_fallthru
          _
        // Predicated region
        $region85: #{tpu_custom_call.1} parent=79 // pred_check
          %p562 = pneg %p154
        $region86: #{tpu_custom_call.1} parent=79 // pred_check_branch
          %564 = sbr.rel (%p562) target = $region88
        $region87: #{tpu_custom_call.1} parent=79 // pred_region
          %565 = dma.done [#allocation8], 16
        $region88: #{tpu_custom_call.1} parent=79 // pred_fallthru
          _
        // Predicated region
        $region89: #{tpu_custom_call.1} parent=79 // pred_check
          %p566 = pneg %p196
        $region90: #{tpu_custom_call.1} parent=79 // pred_check_branch
          %568 = sbr.rel (%p566) target = $region92
        $region91: #{tpu_custom_call.1} parent=79 // pred_region
          %569 = dma.done [#allocation8], 2048
        $region92: #{tpu_custom_call.1} parent=79 // pred_fallthru
          _
        // Predicated region
        $region93: #{tpu_custom_call.1} parent=79 // pred_check
          %p570 = pneg %p301
        $region94: #{tpu_custom_call.1} parent=79 // pred_check_branch
          %572 = sbr.rel (%p570) target = $region96
        $region95: #{tpu_custom_call.1} parent=79 // pred_region
          %573 = dma.done [#allocation11], 27648
        $region96: #{tpu_custom_call.1} parent=79 // pred_fallthru
          _
        // Predicated region
        $region97: #{tpu_custom_call.1} parent=79 // pred_check
          %p574 = pneg %p343
        $region98: #{tpu_custom_call.1} parent=79 // pred_check_branch
          %576 = sbr.rel (%p574) target = $region100
        $region99: #{tpu_custom_call.1} parent=79 // pred_region
          %577 = dma.done [#allocation11], 27648
        $region100: #{tpu_custom_call.1} parent=79 // pred_fallthru
          _
        %s578 = sand.u32 %s47, 1
        %s579 = scalar_lea.sflag [#allocation5], %s578
        %s580 = sand.u32 %s47, 1
        %s581 = smul.addr %s580, 16
        %s582 = scalar_lea.vmem [#allocation4], %s581
        %p583 = pneg %p60
        %p584 = pneg %p57
        %p585 = scmp.lt.s32.totalorder %s39, 1
        %s586 = scalar_select %p585, %s39, 1
        %s587 = smul.addr %s586, 2
        %s588 = smul.addr %s587, 4
        %s589 = scalar_lea.vmem %s1, %s588
        %p590 = pneg %p86
        %p591 = pneg %p83
        %p592 = scmp.lt.s32.totalorder %s39, 1
        %s593 = scalar_select %p592, %s39, 1
        %s594 = smul.addr %s593, 2
        %s595 = smul.addr %s594, 2
        %s596 = scalar_lea.vmem %s2, %s595
        %p597 = pneg %p112
        %p598 = pneg %p109
        %p599 = pneg %p133
        %p600 = pneg %p130
        %p601 = pneg %p154
        %p602 = pneg %p151
        %p603 = pneg %p175
        %p604 = pneg %p172
        %p605 = pneg %p196
        %p606 = pneg %p193
        %p607 = pneg %p217
        %p608 = pneg %p214
        %p609 = pneg %p238
        %p610 = pneg %p235
        %p611 = pneg %p259
        %p612 = pneg %p256
        %p613 = pneg %p280
        %p614 = pneg %p277
        %p615 = pneg %p301
        %p616 = pneg %p298
        %p617 = pneg %p322
        %p618 = pneg %p319
        %p619 = pneg %p343
        %p620 = pneg %p340
        %p621 = pneg %p364
        %p622 = pneg %p361
        %p623 = pneg %p390
        %p624 = pneg %p387
        %s625 = sand.u32 %s377, 1
        %s626 = scalar_lea.sflag [#allocation6], %s625
        %s627 = sand.u32 %s377, 1
        %s628 = smul.addr %s627, 32
        %s629 = scalar_lea.vmem [#allocation13], %s628
        %p630 = pneg %p416
        %p631 = pneg %p413
        %s632 = sand.u32 %s403, 1
        %s633 = scalar_lea.sflag [#allocation15], %s632
        %s634 = sand.u32 %s403, 1
        %s635 = smul.addr %s634, 32
        %s636 = scalar_lea.vmem [#allocation14], %s635
        %p637 = scmp.lt.s32.totalorder %s39, 1
        %s638 = scalar_select %p637, %s39, 1
        %s639 = smul.addr %s638, 2
        %s640 = smul.addr %s639, 4
        %s641 = scalar_lea.vmem %s1, %s640
        %p642 = scmp.lt.s32.totalorder %s39, 1
        %s643 = scalar_select %p642, %s39, 1
        %s644 = smul.addr %s643, 2
        %s645 = smul.addr %s644, 2
        %s646 = scalar_lea.vmem %s2, %s645
        %648 = vst [vmem:[#allocation2] sm:$0xff] 0.0
        %649 = vst [vmem:[#allocation2 + $0x8] sm:$0xff] 0.0
        %vm650 = vcmask 261120
        %651 = vst.msk [vmem:[#allocation2 + $0x10] sm:$0xff] %vm650, 0.0
        %652 = vst [vmem:[#allocation2 + $0x18] sm:$0xff] 0.0
        %653 = vst [vmem:[#allocation2 + $0x20] sm:$0xff] 0.0
        %654 = vst.msk [vmem:[#allocation2 + $0x28] sm:$0xff] %vm650, 0.0
        %655 = vst [vmem:[#allocation2 + $0x30] sm:$0x3] 0.0
        %656 = vst [vmem:[#allocation2 + $0x38] sm:$0x3] 0.0
        %vm657 = vcmask 254976
        %658 = vst.msk [vmem:[#allocation2 + $0x40] sm:$0x3] %vm657, 0.0
        %659 = vst [vmem:[#allocation3] sm:$0xff] 0.0
        %660 = vst [vmem:[#allocation3 + $0x8] sm:$0xff] 0.0
        %661 = vst.msk [vmem:[#allocation3 + $0x10] sm:$0xff] %vm650, 0.0
        %662 = vst [vmem:[#allocation3 + $0x18] sm:$0xff] 0.0
        %663 = vst [vmem:[#allocation3 + $0x20] sm:$0xff] 0.0
        %664 = vst.msk [vmem:[#allocation3 + $0x28] sm:$0xff] %vm650, 0.0
        %665 = vst [vmem:[#allocation3 + $0x30] sm:$0x3] 0.0
        %666 = vst [vmem:[#allocation3 + $0x38] sm:$0x3] 0.0
        %667 = vst.msk [vmem:[#allocation3 + $0x40] sm:$0x3] %vm657, 0.0
        %v668 = vld [vmem:[%s557] sm:$0xff]
        %v669 = vld [vmem:[%s557 + $0x8] sm:$0xff]
        %v670 = vunpack.c.l.bf16 %v668
        %v671 = vunpack.c.h.bf16 %v668
        %v672 = vunpack.c.l.bf16 %v669
        %v673 = vunpack.c.h.bf16 %v669
        %vm678 = vcmask 1040384
        %v679 = vrot.slane %v670, 7
        %v680 = vrot.slane %v671, 7
        %v681 = vrot.slane %v672, 7
        %v682 = vsel %vm678, %v679, %v681
        %v683 = vrot.slane %v673, 7
        %v684 = vsel %vm678, %v680, %v683
        %685 = vrot.lane.b32.xlu0 %v679, 16
        %v686 = vpop.permute.xlu0 %685
        %687 = vrot.lane.b32.xlu0 %v680, 16
        %v688 = vpop.permute.xlu0 %687
        %689 = vrot.lane.b32.xlu0 %v682, 16
        %v690 = vpop.permute.xlu0 %689
        %691 = vrot.lane.b32.xlu0 %v684, 16
        %v692 = vpop.permute.xlu0 %691
        %693 = vrot.lane.b32.xlu0 %v681, 16
        %v694 = vpop.permute.xlu0 %693
        %695 = vrot.lane.b32.xlu0 %v683, 16
        %v696 = vpop.permute.xlu0 %695
        %vm697 = vcmask 130048
        %v698 = vsel %vm697, %v686, %v688
        %v699 = vsel %vm697, %v690, %v692
        %v700 = vsel %vm697, %v694, %v696
        %vm710 = vcmask 1047681
        %711 = vst.msk [vmem:[#allocation2] sm:$0xfe] %vm710, %v686
        %712 = vst [vmem:[#allocation2 + $0x8] sm:$0xfe] %v698
        %vm713 = vcmask 130049
        %714 = vst.msk [vmem:[#allocation2 + $0x10] sm:$0xfe] %vm713, %v688
        %vm715 = vcmask 1047680
        %716 = vst.msk [vmem:[#allocation2 + $0x18] sm:$0xff] %vm715, %v690
        %717 = vst [vmem:[#allocation2 + $0x20] sm:$0xff] %v699
        %718 = vst.msk [vmem:[#allocation2 + $0x28] sm:$0xff] %vm697, %v692
        %vm719 = vcmask 1040512
        %720 = vst.msk [vmem:[#allocation2 + $0x30] sm:$0x1] %vm719, %v694
        %721 = vst [vmem:[#allocation2 + $0x38] sm:$0x1] %v700
        %vm722 = vcmask 122880
        %723 = vst.msk [vmem:[#allocation2 + $0x40] sm:$0x1] %vm722, %v696
        %v724 = vld [vmem:[%s641] sm:$0xff]
        %v725 = vld [vmem:[%s3] sm:$0xf]
        %v726 = vld [vmem:[%s3 + $0x4] sm:$0xf]
        %v727 = vld [vmem:[%s3 + $0x8] sm:$0xf]
        %v728 = vld [vmem:[%s3 + $0xc] sm:$0xf]
        %v729 = vld [vmem:[%s3 + $0x10] sm:$0xf]
        %v730 = vld [vmem:[%s3 + $0x14] sm:$0xf]
        %v731 = vld [vmem:[%s3 + $0x18] sm:$0xf]
        %v732 = vld [vmem:[%s3 + $0x1c] sm:$0xf]
        %v733 = vld [vmem:[%s3 + $0x20] sm:$0xf]
        %v734 = vld [vmem:[%s3 + $0x24] sm:$0xf]
        %v735 = vld [vmem:[%s3 + $0x28] sm:$0xf]
        %v736 = vld [vmem:[%s3 + $0x2c] sm:$0xf]
        %v737 = vld [vmem:[%s3 + $0x30] sm:$0xf]
        %v738 = vld [vmem:[%s3 + $0x34] sm:$0xf]
        %v739 = vld [vmem:[%s3 + $0x38] sm:$0xf]
        %v740 = vld [vmem:[%s3 + $0x3c] sm:$0xf]
        %v741 = vld [vmem:[%s3 + $0x40] sm:$0xf]
        %v742 = vld [vmem:[%s3 + $0x44] sm:$0xf]
        %v743 = vld [vmem:[%s3 + $0x48] sm:$0xf]
        %v744 = vld [vmem:[%s3 + $0x4c] sm:$0xf]
        %v745 = vld [vmem:[%s3 + $0x50] sm:$0xf]
        %v746 = vld [vmem:[%s3 + $0x54] sm:$0xf]
        %v747 = vld [vmem:[%s3 + $0x58] sm:$0xf]
        %v748 = vld [vmem:[%s3 + $0x5c] sm:$0xf]
        %v749 = vld [vmem:[%s3 + $0x60] sm:$0xf]
        %v750 = vld [vmem:[%s3 + $0x64] sm:$0xf]
        %v751 = vld [vmem:[%s3 + $0x68] sm:$0xf]
        %v752 = vld [vmem:[%s3 + $0x6c] sm:$0xf]
        %v753 = vld [vmem:[%s3 + $0x70] sm:$0xf]
        %v754 = vld [vmem:[%s3 + $0x74] sm:$0xf]
        %v755 = vld [vmem:[%s3 + $0x78] sm:$0xf]
        %v756 = vld [vmem:[%s3 + $0x7c] sm:$0xf]
        %v757 = vld [vmem:[#allocation7] sm:$0x1]
        %v759 = vlaneseq
        %v760 = vshrl.u32 %v759, 7
        %v761 = vsub.s32 0, %v760
        %v762 = vrot.slane %v757, %v761
        %v765 = vunpack.c.l.b16 %v724
        %v766 = vunpack.c.h.b16 %v724
        %v767 = vpack.c.b16 %v765, %v765
        %v768 = vpack.c.b16 %v766, %v766
        %v803 = vunpack.c.l.b16 %v725
        %v804 = vunpack.c.l.b16 %v726
        %v805 = vunpack.c.l.b16 %v727
        %v806 = vunpack.c.l.b16 %v728
        %v807 = vunpack.c.l.b16 %v729
        %v808 = vunpack.c.l.b16 %v730
        %v809 = vunpack.c.l.b16 %v731
        %v810 = vunpack.c.l.b16 %v732
        %v811 = vunpack.c.l.b16 %v733
        %v812 = vunpack.c.l.b16 %v734
        %v813 = vunpack.c.l.b16 %v735
        %v814 = vunpack.c.l.b16 %v736
        %v815 = vunpack.c.l.b16 %v737
        %v816 = vunpack.c.l.b16 %v738
        %v817 = vunpack.c.l.b16 %v739
        %v818 = vunpack.c.l.b16 %v740
        %v819 = vunpack.c.l.b16 %v741
        %v820 = vunpack.c.l.b16 %v742
        %v821 = vunpack.c.l.b16 %v743
        %v822 = vunpack.c.l.b16 %v744
        %v823 = vunpack.c.l.b16 %v745
        %v824 = vunpack.c.l.b16 %v746
        %v825 = vunpack.c.l.b16 %v747
        %v826 = vunpack.c.l.b16 %v748
        %v827 = vunpack.c.l.b16 %v749
        %v828 = vunpack.c.l.b16 %v750
        %v829 = vunpack.c.l.b16 %v751
        %v830 = vunpack.c.l.b16 %v752
        %v831 = vunpack.c.l.b16 %v753
        %v832 = vunpack.c.l.b16 %v754
        %v833 = vunpack.c.l.b16 %v755
        %v834 = vunpack.c.l.b16 %v756
        %v835 = vpack.c.b16 %v804, %v803
        %v836 = vpack.c.b16 %v806, %v805
        %v837 = vpack.c.b16 %v808, %v807
        %v838 = vpack.c.b16 %v810, %v809
        %v839 = vpack.c.b16 %v812, %v811
        %v840 = vpack.c.b16 %v814, %v813
        %v841 = vpack.c.b16 %v816, %v815
        %v842 = vpack.c.b16 %v818, %v817
        %v843 = vpack.c.b16 %v820, %v819
        %v844 = vpack.c.b16 %v822, %v821
        %v845 = vpack.c.b16 %v824, %v823
        %v846 = vpack.c.b16 %v826, %v825
        %v847 = vpack.c.b16 %v828, %v827
        %v848 = vpack.c.b16 %v830, %v829
        %v849 = vpack.c.b16 %v832, %v831
        %v850 = vpack.c.b16 %v834, %v833
        %867 = vmatprep.subr.bf16.mxu0 0
        %868 = vmatpush1.bf16.msra.mxu0 %v842
        %869 = vmatprep.subr.bf16.mxu0 0
        %870 = vmatpush1.bf16.msra.mxu0 %v841
        %871 = vmatprep.subr.bf16.mxu0 0
        %872 = vmatpush1.bf16.msra.mxu0 %v840
        %873 = vmatprep.subr.bf16.mxu0 0
        %874 = vmatpush1.bf16.msra.mxu0 %v839
        %875 = vmatprep.subr.bf16.mxu0 0
        %876 = vmatpush1.bf16.msra.mxu0 %v838
        %877 = vmatprep.subr.bf16.mxu0 0
        %878 = vmatpush1.bf16.msra.mxu0 %v837
        %879 = vmatprep.subr.bf16.mxu0 0
        %880 = vmatpush1.bf16.msra.mxu0 %v836
        %881 = vmatprep.subr.bf16.mxu0 0
        %882 = vmatpush1.bf16.msra.mxu0 %v835
        %883 = vmatprep.subr.bf16.mxu0 0
        %884 = vmatpush2.bf16.msra.mxu0 %v850
        %885 = vmatprep.subr.bf16.mxu0 0
        %886 = vmatpush2.bf16.msra.mxu0 %v849
        %887 = vmatprep.subr.bf16.mxu0 0
        %888 = vmatpush2.bf16.msra.mxu0 %v848
        %889 = vmatprep.subr.bf16.mxu0 0
        %890 = vmatpush2.bf16.msra.mxu0 %v847
        %891 = vmatprep.subr.bf16.mxu0 0
        %892 = vmatpush2.bf16.msra.mxu0 %v846
        %893 = vmatprep.subr.bf16.mxu0 0
        %894 = vmatpush2.bf16.msra.mxu0 %v845
        %895 = vmatprep.subr.bf16.mxu0 0
        %896 = vmatpush2.bf16.msra.mxu0 %v844
        %897 = vmatprep.subr.bf16.mxu0 0
        %898 = vmatpush2.bf16.msra.mxu0 %v843
        %899 = vmatprep.mubr.bf16.mxu0 %v768
        %900 = vmatmul.mubr.bf16.gmra.mxu0 %v767
        %v901 = vpop.f32.mrf.mxu0
        %v902 = vadd.f32 %v762, %v901
        %v903 = vpop.f32.mrf.mxu0
        %v904 = vpop.f32.mrf.mxu0
        %v905 = vpop.f32.mrf.mxu0
        %906 = vdwg.mxu0
        %v907 = vmax.f32 %v902, 0.0
        %v908 = vld [vmem:[%s5] sm:$0xf]
        %v909 = vld [vmem:[%s5 + $0x4] sm:$0xf]
        %v910 = vpack.c.bf16 %v907, %v907
        %v913 = vunpack.c.l.b16 %v908
        %v914 = vunpack.c.l.b16 %v909
        %v915 = vpack.c.b16 %v914, %v913
        %vm916 = vcmask 64512
        %v918 = vsel %vm916, %v915, 0
        %vm920 = vcmask 1043456
        %v922 = vsel %vm920, %v910, 0
        %924 = vmatprep.subr.bf16.mxu0 0
        %925 = vmatpush1.bf16.msra.mxu0 0
        %926 = vmatprep.subr.bf16.mxu0 0
        %927 = vmatpush1.bf16.msra.mxu0 0
        %928 = vmatprep.subr.bf16.mxu0 0
        %929 = vmatpush1.bf16.msra.mxu0 0
        %930 = vmatprep.subr.bf16.mxu0 0
        %931 = vmatpush1.bf16.msra.mxu0 0
        %932 = vmatprep.subr.bf16.mxu0 0
        %933 = vmatpush1.bf16.msra.mxu0 0
        %934 = vmatprep.subr.bf16.mxu0 0
        %935 = vmatpush1.bf16.msra.mxu0 0
        %936 = vmatprep.subr.bf16.mxu0 0
        %937 = vmatpush1.bf16.msra.mxu0 0
        %938 = vmatprep.subr.bf16.mxu0 0
        %939 = vmatpush1.bf16.msra.mxu0 %v922
        %940 = vmatprep.subr.bf16.mxu0 0
        %941 = vmatpush2.bf16.msra.mxu0 0
        %942 = vmatprep.subr.bf16.mxu0 0
        %943 = vmatpush2.bf16.msra.mxu0 0
        %944 = vmatprep.subr.bf16.mxu0 0
        %945 = vmatpush2.bf16.msra.mxu0 0
        %946 = vmatprep.subr.bf16.mxu0 0
        %947 = vmatpush2.bf16.msra.mxu0 0
        %948 = vmatprep.subr.bf16.mxu0 0
        %949 = vmatpush2.bf16.msra.mxu0 0
        %950 = vmatprep.subr.bf16.mxu0 0
        %951 = vmatpush2.bf16.msra.mxu0 0
        %952 = vmatprep.subr.bf16.mxu0 0
        %953 = vmatpush2.bf16.msra.mxu0 0
        %954 = vmatprep.subr.bf16.mxu0 0
        %955 = vmatpush2.bf16.msra.mxu0 0
        %956 = vmatprep.mubr.bf16.mxu0 0
        %957 = vmatmul.mubr.bf16.gmra.mxu0 %v918
        %v958 = vpop.f32.mrf.mxu0
        %v959 = vadd.f32 0.0, %v958
        %v960 = vpop.f32.mrf.mxu0
        %v961 = vpop.f32.mrf.mxu0
        %v962 = vadd.f32 0.0, %v961
        %v963 = vpop.f32.mrf.mxu0
        %964 = vdwg.mxu0
        %v965 = vpack.c.bf16 %v962, %v959
        %v966 = vld [vmem:[#allocation9] sm:$0xff]
        %v967 = vld [vmem:[#allocation9 + $0x8] sm:$0xff]
        %v968 = vld [vmem:[#allocation9 + $0x10] sm:$0xff]
        %v969 = vld [vmem:[#allocation9 + $0x18] sm:$0xff]
        %v970 = vld [vmem:[#allocation9 + $0x20] sm:$0xff]
        %v971 = vld [vmem:[#allocation9 + $0x28] sm:$0xff]
        %v972 = vld [vmem:[#allocation9 + $0x30] sm:$0xff]
        %v973 = vld [vmem:[#allocation9 + $0x38] sm:$0xff]
        %v974 = vld [vmem:[#allocation9 + $0x40] sm:$0xff]
        %v975 = vld [vmem:[#allocation9 + $0x48] sm:$0xff]
        %v976 = vld [vmem:[#allocation9 + $0x50] sm:$0xff]
        %v977 = vld [vmem:[#allocation9 + $0x58] sm:$0xff]
        %v978 = vld [vmem:[#allocation9 + $0x60] sm:$0xff]
        %v979 = vld [vmem:[#allocation9 + $0x68] sm:$0xff]
        %v980 = vld [vmem:[#allocation9 + $0x70] sm:$0xff]
        %v981 = vld [vmem:[#allocation9 + $0x78] sm:$0xff]
        %v998 = vunpack.c.l.b16 %v966
        %v999 = vunpack.c.h.b16 %v966
        %v1000 = vunpack.c.l.b16 %v967
        %v1001 = vunpack.c.h.b16 %v967
        %v1002 = vunpack.c.l.b16 %v968
        %v1003 = vunpack.c.h.b16 %v968
        %v1004 = vunpack.c.l.b16 %v969
        %v1005 = vunpack.c.h.b16 %v969
        %v1006 = vunpack.c.l.b16 %v970
        %v1007 = vunpack.c.h.b16 %v970
        %v1008 = vunpack.c.l.b16 %v971
        %v1009 = vunpack.c.h.b16 %v971
        %v1010 = vunpack.c.l.b16 %v972
        %v1011 = vunpack.c.h.b16 %v972
        %v1012 = vunpack.c.l.b16 %v973
        %v1013 = vunpack.c.h.b16 %v973
        %v1014 = vunpack.c.l.b16 %v974
        %v1015 = vunpack.c.h.b16 %v974
        %v1016 = vunpack.c.l.b16 %v975
        %v1017 = vunpack.c.h.b16 %v975
        %v1018 = vunpack.c.l.b16 %v976
        %v1019 = vunpack.c.h.b16 %v976
        %v1020 = vunpack.c.l.b16 %v977
        %v1021 = vunpack.c.h.b16 %v977
        %v1022 = vunpack.c.l.b16 %v978
        %v1023 = vunpack.c.h.b16 %v978
        %v1024 = vunpack.c.l.b16 %v979
        %v1025 = vunpack.c.h.b16 %v979
        %v1026 = vunpack.c.l.b16 %v980
        %v1027 = vunpack.c.h.b16 %v980
        %v1028 = vunpack.c.l.b16 %v981
        %v1029 = vunpack.c.h.b16 %v981
        %v1030 = vpack.c.b16 %v1000, %v998
        %v1031 = vpack.c.b16 %v1001, %v999
        %v1032 = vpack.c.b16 %v1004, %v1002
        %v1033 = vpack.c.b16 %v1005, %v1003
        %v1034 = vpack.c.b16 %v1008, %v1006
        %v1035 = vpack.c.b16 %v1009, %v1007
        %v1036 = vpack.c.b16 %v1012, %v1010
        %v1037 = vpack.c.b16 %v1013, %v1011
        %v1038 = vpack.c.b16 %v1016, %v1014
        %v1039 = vpack.c.b16 %v1017, %v1015
        %v1040 = vpack.c.b16 %v1020, %v1018
        %v1041 = vpack.c.b16 %v1021, %v1019
        %v1042 = vpack.c.b16 %v1024, %v1022
        %v1043 = vpack.c.b16 %v1025, %v1023
        %v1044 = vpack.c.b16 %v1028, %v1026
        %v1045 = vpack.c.b16 %v1029, %v1027
        %1062 = vmatprep.subr.bf16.mxu0 %v1045
        %1063 = vmatpush1.bf16.msra.mxu0 %v1044
        %1064 = vmatprep.subr.bf16.mxu0 %v1043
        %1065 = vmatpush1.bf16.msra.mxu0 %v1042
        %1066 = vmatprep.subr.bf16.mxu0 %v1041
        %1067 = vmatpush1.bf16.msra.mxu0 %v1040
        %1068 = vmatprep.subr.bf16.mxu0 %v1039
        %1069 = vmatpush1.bf16.msra.mxu0 %v1038
        %1070 = vmatprep.subr.bf16.mxu0 %v1037
        %1071 = vmatpush1.bf16.msra.mxu0 %v1036
        %1072 = vmatprep.subr.bf16.mxu0 %v1035
        %1073 = vmatpush1.bf16.msra.mxu0 %v1034
        %1074 = vmatprep.subr.bf16.mxu0 %v1033
        %1075 = vmatpush1.bf16.msra.mxu0 %v1032
        %1076 = vmatprep.subr.bf16.mxu0 %v1031
        %1077 = vmatpush1.bf16.msra.mxu0 %v1030
        %1078 = vmatprep.subr.bf16.mxu0 0
        %1079 = vmatpush2.bf16.msra.mxu0 0
        %1080 = vmatprep.subr.bf16.mxu0 0
        %1081 = vmatpush2.bf16.msra.mxu0 0
        %1082 = vmatprep.subr.bf16.mxu0 0
        %1083 = vmatpush2.bf16.msra.mxu0 0
        %1084 = vmatprep.subr.bf16.mxu0 0
        %1085 = vmatpush2.bf16.msra.mxu0 0
        %1086 = vmatprep.subr.bf16.mxu0 0
        %1087 = vmatpush2.bf16.msra.mxu0 0
        %1088 = vmatprep.subr.bf16.mxu0 0
        %1089 = vmatpush2.bf16.msra.mxu0 0
        %1090 = vmatprep.subr.bf16.mxu0 0
        %1091 = vmatpush2.bf16.msra.mxu0 0
        %1092 = vmatprep.subr.bf16.mxu0 0
        %1093 = vmatpush2.bf16.msra.mxu0 0
        %1094 = vmatprep.mubr.bf16.mxu0 0
        %1095 = vmatmul.mubr.bf16.gmra.mxu0 %v965
        %v1096 = vpop.f32.mrf.mxu0
        %v1097 = vadd.f32 0.0, %v1096
        %v1098 = vpop.f32.mrf.mxu0
        %v1099 = vadd.f32 0.0, %v1098
        %v1100 = vpop.f32.mrf.mxu0
        %v1101 = vadd.f32 0.0, %v1100
        %v1102 = vpop.f32.mrf.mxu0
        %v1103 = vadd.f32 0.0, %v1102
        %1104 = vdwg.mxu0
        %v1109 = vrot.slane %v1097, 7
        %v1110 = vrot.slane %v1099, 7
        %v1111 = vrot.slane %v1101, 7
        %v1112 = vsel %vm678, %v1109, %v1111
        %v1113 = vrot.slane %v1103, 7
        %v1114 = vsel %vm678, %v1110, %v1113
        %1115 = vrot.lane.b32.xlu0 %v1109, 16
        %v1116 = vpop.permute.xlu0 %1115
        %1117 = vrot.lane.b32.xlu0 %v1110, 16
        %v1118 = vpop.permute.xlu0 %1117
        %1119 = vrot.lane.b32.xlu0 %v1112, 16
        %v1120 = vpop.permute.xlu0 %1119
        %1121 = vrot.lane.b32.xlu0 %v1114, 16
        %v1122 = vpop.permute.xlu0 %1121
        %1123 = vrot.lane.b32.xlu0 %v1111, 16
        %v1124 = vpop.permute.xlu0 %1123
        %1125 = vrot.lane.b32.xlu0 %v1113, 16
        %v1126 = vpop.permute.xlu0 %1125
        %v1127 = vsel %vm697, %v1116, %v1118
        %v1128 = vsel %vm697, %v1120, %v1122
        %v1129 = vsel %vm697, %v1124, %v1126
        %1139 = vst.msk [vmem:[#allocation3] sm:$0xfe] %vm710, %v1116
        %1140 = vst [vmem:[#allocation3 + $0x8] sm:$0xfe] %v1127
        %1141 = vst.msk [vmem:[#allocation3 + $0x10] sm:$0xfe] %vm713, %v1118
        %1142 = vst.msk [vmem:[#allocation3 + $0x18] sm:$0xff] %vm715, %v1120
        %1143 = vst [vmem:[#allocation3 + $0x20] sm:$0xff] %v1128
        %1144 = vst.msk [vmem:[#allocation3 + $0x28] sm:$0xff] %vm697, %v1122
        %1145 = vst.msk [vmem:[#allocation3 + $0x30] sm:$0x1] %vm719, %v1124
        %1146 = vst [vmem:[#allocation3 + $0x38] sm:$0x1] %v1129
        %1147 = vst.msk [vmem:[#allocation3 + $0x40] sm:$0x1] %vm722, %v1126
        %v1148 = vld [vmem:[#allocation2] sm:$0xff]
        %v1149 = vld [vmem:[#allocation2 + $0x8] sm:$0xff]
        %v1150 = vld [vmem:[#allocation2 + $0x10] sm:$0xff]
        %v1151 = vld [vmem:[#allocation2 + $0x18] sm:$0xff]
        %v1152 = vld [vmem:[#allocation2 + $0x20] sm:$0xff]
        %v1153 = vld [vmem:[#allocation2 + $0x28] sm:$0xff]
        %v1154 = vpack.c.bf16 %v1151, %v1148
        %v1155 = vpack.c.bf16 %v1152, %v1149
        %v1156 = vpack.c.bf16 %v1153, %v1150
        %v1157 = vld [vmem:[#allocation10] sm:$0xff]
        %v1158 = vld [vmem:[#allocation10 + $0x8] sm:$0xff]
        %v1159 = vld [vmem:[#allocation10 + $0x10] sm:$0xff]
        %v1160 = vld [vmem:[#allocation10 + $0x18] sm:$0xff]
        %v1161 = vld [vmem:[#allocation10 + $0x20] sm:$0xff]
        %v1162 = vld [vmem:[#allocation10 + $0x28] sm:$0xff]
        %v1163 = vld [vmem:[#allocation10 + $0x30] sm:$0xff]
        %v1164 = vld [vmem:[#allocation10 + $0x38] sm:$0xff]
        %v1165 = vld [vmem:[#allocation10 + $0x40] sm:$0xff]
        %v1166 = vld [vmem:[#allocation10 + $0x48] sm:$0xff]
        %v1167 = vld [vmem:[#allocation10 + $0x50] sm:$0xff]
        %v1168 = vld [vmem:[#allocation10 + $0x58] sm:$0xff]
        %v1169 = vld [vmem:[#allocation10 + $0x60] sm:$0xff]
        %v1170 = vld [vmem:[#allocation10 + $0x68] sm:$0xff]
        %v1171 = vld [vmem:[#allocation10 + $0x70] sm:$0xff]
        %v1172 = vld [vmem:[#allocation10 + $0x78] sm:$0xff]
        %v1173 = vld [vmem:[#allocation10 + $0x80] sm:$0xff]
        %v1174 = vld [vmem:[#allocation10 + $0x88] sm:$0xff]
        %v1175 = vld [vmem:[#allocation10 + $0x90] sm:$0xff]
        %v1176 = vld [vmem:[#allocation10 + $0x98] sm:$0xff]
        %v1177 = vld [vmem:[#allocation10 + $0xa0] sm:$0xff]
        %v1178 = vld [vmem:[#allocation10 + $0xa8] sm:$0xff]
        %v1179 = vld [vmem:[#allocation10 + $0xb0] sm:$0xff]
        %v1180 = vld [vmem:[#allocation10 + $0xb8] sm:$0xff]
        %v1181 = vld [vmem:[#allocation10 + $0xc0] sm:$0xff]
        %v1182 = vld [vmem:[#allocation10 + $0xc8] sm:$0xff]
        %v1183 = vld [vmem:[#allocation10 + $0xd0] sm:$0xff]
        %v1184 = vld [vmem:[#allocation10 + $0xd8] sm:$0xff]
        %v1185 = vld [vmem:[#allocation10 + $0xe0] sm:$0xff]
        %v1186 = vld [vmem:[#allocation10 + $0xe8] sm:$0xff]
        %v1187 = vld [vmem:[#allocation10 + $0xf0] sm:$0xff]
        %v1188 = vld [vmem:[#allocation10 + $0xf8] sm:$0xff]
        %v1189 = vld [vmem:[#allocation10 + $0x100] sm:$0xff]
        %v1190 = vld [vmem:[#allocation10 + $0x108] sm:$0xff]
        %v1191 = vld [vmem:[#allocation10 + $0x110] sm:$0xff]
        %v1192 = vld [vmem:[#allocation10 + $0x118] sm:$0xff]
        %v1193 = vld [vmem:[#allocation2] sm:$0xfe]
        %v1194 = vld [vmem:[#allocation2 + $0x8] sm:$0xfe]
        %v1195 = vld [vmem:[#allocation2 + $0x10] sm:$0xfe]
        %v1196 = vld [vmem:[#allocation2 + $0x30] sm:$0x1]
        %v1197 = vld [vmem:[#allocation2 + $0x38] sm:$0x1]
        %v1198 = vld [vmem:[#allocation2 + $0x40] sm:$0x1]
        %v1199 = vpack.c.bf16 %v1151, %v1193
        %v1200 = vpack.c.bf16 %v1152, %v1194
        %v1201 = vpack.c.bf16 %v1153, %v1195
        %v1202 = vpack.c.bf16 %v1196, %v1196
        %v1203 = vpack.c.bf16 %v1197, %v1197
        %v1204 = vpack.c.bf16 %v1198, %v1198
        %s1205 = scalar_lea.vmem [#allocation10], 288
        %v1206 = vld [vmem:[%s1205] sm:$0xff]
        %v1207 = vld [vmem:[%s1205 + $0x8] sm:$0xff]
        %v1208 = vld [vmem:[%s1205 + $0x10] sm:$0xff]
        %v1209 = vld [vmem:[%s1205 + $0x18] sm:$0xff]
        %v1210 = vld [vmem:[%s1205 + $0x20] sm:$0xff]
        %v1211 = vld [vmem:[%s1205 + $0x28] sm:$0xff]
        %v1212 = vld [vmem:[%s1205 + $0x30] sm:$0xff]
        %v1213 = vld [vmem:[%s1205 + $0x38] sm:$0xff]
        %v1214 = vld [vmem:[%s1205 + $0x40] sm:$0xff]
        %v1215 = vld [vmem:[%s1205 + $0x48] sm:$0xff]
        %v1216 = vld [vmem:[%s1205 + $0x50] sm:$0xff]
        %v1217 = vld [vmem:[%s1205 + $0x58] sm:$0xff]
        %v1218 = vld [vmem:[%s1205 + $0x60] sm:$0xff]
        %v1219 = vld [vmem:[%s1205 + $0x68] sm:$0xff]
        %v1220 = vld [vmem:[%s1205 + $0x70] sm:$0xff]
        %v1221 = vld [vmem:[%s1205 + $0x78] sm:$0xff]
        %v1222 = vld [vmem:[%s1205 + $0x80] sm:$0xff]
        %v1223 = vld [vmem:[%s1205 + $0x88] sm:$0xff]
        %v1224 = vld [vmem:[%s1205 + $0x90] sm:$0xff]
        %v1225 = vld [vmem:[%s1205 + $0x98] sm:$0xff]
        %v1226 = vld [vmem:[%s1205 + $0xa0] sm:$0xff]
        %v1227 = vld [vmem:[%s1205 + $0xa8] sm:$0xff]
        %v1228 = vld [vmem:[%s1205 + $0xb0] sm:$0xff]
        %v1229 = vld [vmem:[%s1205 + $0xb8] sm:$0xff]
        %v1230 = vld [vmem:[%s1205 + $0xc0] sm:$0xff]
        %v1231 = vld [vmem:[%s1205 + $0xc8] sm:$0xff]
        %v1232 = vld [vmem:[%s1205 + $0xd0] sm:$0xff]
        %v1233 = vld [vmem:[%s1205 + $0xd8] sm:$0xff]
        %v1234 = vld [vmem:[%s1205 + $0xe0] sm:$0xff]
        %v1235 = vld [vmem:[%s1205 + $0xe8] sm:$0xff]
        %v1236 = vld [vmem:[%s1205 + $0xf0] sm:$0xff]
        %v1237 = vld [vmem:[%s1205 + $0xf8] sm:$0xff]
        %v1238 = vld [vmem:[%s1205 + $0x100] sm:$0xff]
        %v1239 = vld [vmem:[%s1205 + $0x108] sm:$0xff]
        %v1240 = vld [vmem:[%s1205 + $0x110] sm:$0xff]
        %v1241 = vld [vmem:[%s1205 + $0x118] sm:$0xff]
        %vm1242 = vsmask.f32 7424
        %v1244 = vshrl.u32 %v1199, 16
        %v1246 = vshll.u32 %v1199, 16
        %v1248 = vrot.slane %v1246, 1
        %v1249 = vor.u32 %v1244, %v1248
        %v1251 = vshll.u32 %v1202, 16
        %v1253 = vrot.slane %v1251, 1
        %v1254 = vsel %vm1242, %v1249, %v1253
        %v1256 = vshrl.u32 %v1200, 16
        %v1258 = vshll.u32 %v1200, 16
        %v1260 = vrot.slane %v1258, 1
        %v1261 = vor.u32 %v1256, %v1260
        %v1263 = vshll.u32 %v1203, 16
        %v1265 = vrot.slane %v1263, 1
        %v1266 = vsel %vm1242, %v1261, %v1265
        %v1268 = vshrl.u32 %v1201, 16
        %v1270 = vshll.u32 %v1201, 16
        %v1272 = vrot.slane %v1270, 1
        %v1273 = vor.u32 %v1268, %v1272
        %v1275 = vshll.u32 %v1204, 16
        %v1277 = vrot.slane %v1275, 1
        %v1278 = vsel %vm1242, %v1273, %v1277
        %v1317 = vunpack.c.l.b16 %v1206
        %v1318 = vunpack.c.h.b16 %v1206
        %v1319 = vunpack.c.l.b16 %v1207
        %v1320 = vunpack.c.h.b16 %v1207
        %v1321 = vunpack.c.l.b16 %v1208
        %v1322 = vunpack.c.h.b16 %v1208
        %v1323 = vunpack.c.l.b16 %v1209
        %v1324 = vunpack.c.h.b16 %v1209
        %v1325 = vunpack.c.l.b16 %v1210
        %v1326 = vunpack.c.h.b16 %v1210
        %v1327 = vunpack.c.l.b16 %v1211
        %v1328 = vunpack.c.h.b16 %v1211
        %v1329 = vunpack.c.l.b16 %v1212
        %v1330 = vunpack.c.h.b16 %v1212
        %v1331 = vunpack.c.l.b16 %v1213
        %v1332 = vunpack.c.h.b16 %v1213
        %v1333 = vunpack.c.l.b16 %v1214
        %v1334 = vunpack.c.h.b16 %v1214
        %v1335 = vunpack.c.l.b16 %v1215
        %v1336 = vunpack.c.h.b16 %v1215
        %v1337 = vunpack.c.l.b16 %v1216
        %v1338 = vunpack.c.h.b16 %v1216
        %v1339 = vunpack.c.l.b16 %v1217
        %v1340 = vunpack.c.h.b16 %v1217
        %v1341 = vunpack.c.l.b16 %v1218
        %v1342 = vunpack.c.h.b16 %v1218
        %v1343 = vunpack.c.l.b16 %v1219
        %v1344 = vunpack.c.h.b16 %v1219
        %v1345 = vunpack.c.l.b16 %v1220
        %v1346 = vunpack.c.h.b16 %v1220
        %v1347 = vunpack.c.l.b16 %v1221
        %v1348 = vunpack.c.h.b16 %v1221
        %v1349 = vunpack.c.l.b16 %v1222
        %v1350 = vunpack.c.h.b16 %v1222
        %v1351 = vunpack.c.l.b16 %v1223
        %v1352 = vunpack.c.h.b16 %v1223
        %v1353 = vunpack.c.l.b16 %v1224
        %v1354 = vunpack.c.h.b16 %v1224
        %v1355 = vunpack.c.l.b16 %v1225
        %v1356 = vunpack.c.h.b16 %v1225
        %v1357 = vunpack.c.l.b16 %v1226
        %v1358 = vunpack.c.h.b16 %v1226
        %v1359 = vunpack.c.l.b16 %v1227
        %v1360 = vunpack.c.h.b16 %v1227
        %v1361 = vunpack.c.l.b16 %v1228
        %v1362 = vunpack.c.h.b16 %v1228
        %v1363 = vunpack.c.l.b16 %v1229
        %v1364 = vunpack.c.h.b16 %v1229
        %v1365 = vunpack.c.l.b16 %v1230
        %v1366 = vunpack.c.h.b16 %v1230
        %v1367 = vunpack.c.l.b16 %v1231
        %v1368 = vunpack.c.h.b16 %v1231
        %v1369 = vunpack.c.l.b16 %v1232
        %v1370 = vunpack.c.h.b16 %v1232
        %v1371 = vunpack.c.l.b16 %v1233
        %v1372 = vunpack.c.h.b16 %v1233
        %v1373 = vunpack.c.l.b16 %v1234
        %v1374 = vunpack.c.h.b16 %v1234
        %v1375 = vunpack.c.l.b16 %v1235
        %v1376 = vunpack.c.h.b16 %v1235
        %v1377 = vunpack.c.l.b16 %v1236
        %v1378 = vunpack.c.h.b16 %v1236
        %v1379 = vunpack.c.l.b16 %v1237
        %v1380 = vunpack.c.h.b16 %v1237
        %v1381 = vunpack.c.l.b16 %v1238
        %v1382 = vunpack.c.h.b16 %v1238
        %v1383 = vunpack.c.l.b16 %v1239
        %v1384 = vunpack.c.h.b16 %v1239
        %v1385 = vunpack.c.l.b16 %v1240
        %v1386 = vunpack.c.h.b16 %v1240
        %v1387 = vunpack.c.l.b16 %v1241
        %v1388 = vunpack.c.h.b16 %v1241
        %v1389 = vpack.c.b16 %v1319, %v1317
        %v1390 = vpack.c.b16 %v1320, %v1318
        %v1391 = vpack.c.b16 %v1323, %v1321
        %v1392 = vpack.c.b16 %v1324, %v1322
        %v1393 = vpack.c.b16 %v1327, %v1325
        %v1394 = vpack.c.b16 %v1328, %v1326
        %v1395 = vpack.c.b16 %v1331, %v1329
        %v1396 = vpack.c.b16 %v1332, %v1330
        %v1397 = vpack.c.b16 %v1335, %v1333
        %v1398 = vpack.c.b16 %v1336, %v1334
        %v1399 = vpack.c.b16 %v1339, %v1337
        %v1400 = vpack.c.b16 %v1340, %v1338
        %v1401 = vpack.c.b16 %v1343, %v1341
        %v1402 = vpack.c.b16 %v1344, %v1342
        %v1403 = vpack.c.b16 %v1347, %v1345
        %v1404 = vpack.c.b16 %v1348, %v1346
        %v1405 = vpack.c.b16 %v1351, %v1349
        %v1406 = vpack.c.b16 %v1352, %v1350
        %v1407 = vpack.c.b16 %v1355, %v1353
        %v1408 = vpack.c.b16 %v1356, %v1354
        %v1409 = vpack.c.b16 %v1359, %v1357
        %v1410 = vpack.c.b16 %v1360, %v1358
        %v1411 = vpack.c.b16 %v1363, %v1361
        %v1412 = vpack.c.b16 %v1364, %v1362
        %v1413 = vpack.c.b16 %v1367, %v1365
        %v1414 = vpack.c.b16 %v1368, %v1366
        %v1415 = vpack.c.b16 %v1371, %v1369
        %v1416 = vpack.c.b16 %v1372, %v1370
        %v1417 = vpack.c.b16 %v1375, %v1373
        %v1418 = vpack.c.b16 %v1376, %v1374
        %v1419 = vpack.c.b16 %v1379, %v1377
        %v1420 = vpack.c.b16 %v1380, %v1378
        %v1421 = vpack.c.b16 %v1383, %v1381
        %v1422 = vpack.c.b16 %v1384, %v1382
        %v1423 = vpack.c.b16 %v1387, %v1385
        %v1424 = vpack.c.b16 %v1388, %v1386
        %v1462 = vsel %vm650, %v1278, 0
        %1464 = vmatprep.subr.bf16.mxu0 %v1404
        %1465 = vmatpush1.bf16.msra.mxu0 %v1403
        %1466 = vmatprep.subr.bf16.mxu0 %v1402
        %1467 = vmatpush1.bf16.msra.mxu0 %v1401
        %1468 = vmatprep.subr.bf16.mxu0 %v1400
        %1469 = vmatpush1.bf16.msra.mxu0 %v1399
        %1470 = vmatprep.subr.bf16.mxu0 %v1398
        %1471 = vmatpush1.bf16.msra.mxu0 %v1397
        %1472 = vmatprep.subr.bf16.mxu0 %v1396
        %1473 = vmatpush1.bf16.msra.mxu0 %v1395
        %1474 = vmatprep.subr.bf16.mxu0 %v1394
        %1475 = vmatpush1.bf16.msra.mxu0 %v1393
        %1476 = vmatprep.subr.bf16.mxu0 %v1392
        %1477 = vmatpush1.bf16.msra.mxu0 %v1391
        %1478 = vmatprep.subr.bf16.mxu0 %v1390
        %1479 = vmatpush1.bf16.msra.mxu0 %v1389
        %1480 = vmatprep.subr.bf16.mxu0 %v1420
        %1481 = vmatpush2.bf16.msra.mxu0 %v1419
        %1482 = vmatprep.subr.bf16.mxu0 %v1418
        %1483 = vmatpush2.bf16.msra.mxu0 %v1417
        %1484 = vmatprep.subr.bf16.mxu0 %v1416
        %1485 = vmatpush2.bf16.msra.mxu0 %v1415
        %1486 = vmatprep.subr.bf16.mxu0 %v1414
        %1487 = vmatpush2.bf16.msra.mxu0 %v1413
        %1488 = vmatprep.subr.bf16.mxu0 %v1412
        %1489 = vmatpush2.bf16.msra.mxu0 %v1411
        %1490 = vmatprep.subr.bf16.mxu0 %v1410
        %1491 = vmatpush2.bf16.msra.mxu0 %v1409
        %1492 = vmatprep.subr.bf16.mxu0 %v1408
        %1493 = vmatpush2.bf16.msra.mxu0 %v1407
        %1494 = vmatprep.subr.bf16.mxu0 %v1406
        %1495 = vmatpush2.bf16.msra.mxu0 %v1405
        %1496 = vmatprep.mubr.bf16.mxu0 %v1266
        %1497 = vmatmul.mubr.bf16.gmra.mxu0 %v1254
        %v1498 = vpop.f32.mrf.mxu0
        %v1499 = vadd.f32 0.0, %v1498
        %v1500 = vpop.f32.mrf.mxu0
        %v1501 = vadd.f32 0.0, %v1500
        %v1502 = vpop.f32.mrf.mxu0
        %v1503 = vadd.f32 0.0, %v1502
        %v1504 = vpop.f32.mrf.mxu0
        %v1505 = vadd.f32 0.0, %v1504
        %1506 = vdwg.mxu0
        %1507 = vmatprep.subr.bf16.mxu0 0
        %1508 = vmatpush1.bf16.msra.mxu0 0
        %1509 = vmatprep.subr.bf16.mxu0 0
        %1510 = vmatpush1.bf16.msra.mxu0 0
        %1511 = vmatprep.subr.bf16.mxu0 0
        %1512 = vmatpush1.bf16.msra.mxu0 0
        %1513 = vmatprep.subr.bf16.mxu0 0
        %1514 = vmatpush1.bf16.msra.mxu0 0
        %1515 = vmatprep.subr.bf16.mxu0 0
        %1516 = vmatpush1.bf16.msra.mxu0 0
        %1517 = vmatprep.subr.bf16.mxu0 0
        %1518 = vmatpush1.bf16.msra.mxu0 0
        %1519 = vmatprep.subr.bf16.mxu0 %v1424
        %1520 = vmatpush1.bf16.msra.mxu0 %v1423
        %1521 = vmatprep.subr.bf16.mxu0 %v1422
        %1522 = vmatpush1.bf16.msra.mxu0 %v1421
        %1523 = vmatprep.subr.bf16.mxu0 0
        %1524 = vmatpush2.bf16.msra.mxu0 0
        %1525 = vmatprep.subr.bf16.mxu0 0
        %1526 = vmatpush2.bf16.msra.mxu0 0
        %1527 = vmatprep.subr.bf16.mxu0 0
        %1528 = vmatpush2.bf16.msra.mxu0 0
        %1529 = vmatprep.subr.bf16.mxu0 0
        %1530 = vmatpush2.bf16.msra.mxu0 0
        %1531 = vmatprep.subr.bf16.mxu0 0
        %1532 = vmatpush2.bf16.msra.mxu0 0
        %1533 = vmatprep.subr.bf16.mxu0 0
        %1534 = vmatpush2.bf16.msra.mxu0 0
        %1535 = vmatprep.subr.bf16.mxu0 0
        %1536 = vmatpush2.bf16.msra.mxu0 0
        %1537 = vmatprep.subr.bf16.mxu0 0
        %1538 = vmatpush2.bf16.msra.mxu0 0
        %1539 = vmatprep.mubr.bf16.mxu0 0
        %1540 = vmatmul.mubr.bf16.gmra.mxu0 %v1462
        %v1541 = vpop.f32.mrf.mxu0
        %v1542 = vadd.f32 %v1499, %v1541
        %v1543 = vpop.f32.mrf.mxu0
        %v1544 = vadd.f32 %v1501, %v1543
        %v1545 = vpop.f32.mrf.mxu0
        %v1546 = vadd.f32 %v1503, %v1545
        %v1547 = vpop.f32.mrf.mxu0
        %v1548 = vadd.f32 %v1505, %v1547
        %1549 = vdwg.mxu0
        %v1586 = vunpack.c.l.b16 %v1157
        %v1587 = vunpack.c.h.b16 %v1157
        %v1588 = vunpack.c.l.b16 %v1158
        %v1589 = vunpack.c.h.b16 %v1158
        %v1590 = vunpack.c.l.b16 %v1159
        %v1591 = vunpack.c.h.b16 %v1159
        %v1592 = vunpack.c.l.b16 %v1160
        %v1593 = vunpack.c.h.b16 %v1160
        %v1594 = vunpack.c.l.b16 %v1161
        %v1595 = vunpack.c.h.b16 %v1161
        %v1596 = vunpack.c.l.b16 %v1162
        %v1597 = vunpack.c.h.b16 %v1162
        %v1598 = vunpack.c.l.b16 %v1163
        %v1599 = vunpack.c.h.b16 %v1163
        %v1600 = vunpack.c.l.b16 %v1164
        %v1601 = vunpack.c.h.b16 %v1164
        %v1602 = vunpack.c.l.b16 %v1165
        %v1603 = vunpack.c.h.b16 %v1165
        %v1604 = vunpack.c.l.b16 %v1166
        %v1605 = vunpack.c.h.b16 %v1166
        %v1606 = vunpack.c.l.b16 %v1167
        %v1607 = vunpack.c.h.b16 %v1167
        %v1608 = vunpack.c.l.b16 %v1168
        %v1609 = vunpack.c.h.b16 %v1168
        %v1610 = vunpack.c.l.b16 %v1169
        %v1611 = vunpack.c.h.b16 %v1169
        %v1612 = vunpack.c.l.b16 %v1170
        %v1613 = vunpack.c.h.b16 %v1170
        %v1614 = vunpack.c.l.b16 %v1171
        %v1615 = vunpack.c.h.b16 %v1171
        %v1616 = vunpack.c.l.b16 %v1172
        %v1617 = vunpack.c.h.b16 %v1172
        %v1618 = vunpack.c.l.b16 %v1173
        %v1619 = vunpack.c.h.b16 %v1173
        %v1620 = vunpack.c.l.b16 %v1174
        %v1621 = vunpack.c.h.b16 %v1174
        %v1622 = vunpack.c.l.b16 %v1175
        %v1623 = vunpack.c.h.b16 %v1175
        %v1624 = vunpack.c.l.b16 %v1176
        %v1625 = vunpack.c.h.b16 %v1176
        %v1626 = vunpack.c.l.b16 %v1177
        %v1627 = vunpack.c.h.b16 %v1177
        %v1628 = vunpack.c.l.b16 %v1178
        %v1629 = vunpack.c.h.b16 %v1178
        %v1630 = vunpack.c.l.b16 %v1179
        %v1631 = vunpack.c.h.b16 %v1179
        %v1632 = vunpack.c.l.b16 %v1180
        %v1633 = vunpack.c.h.b16 %v1180
        %v1634 = vunpack.c.l.b16 %v1181
        %v1635 = vunpack.c.h.b16 %v1181
        %v1636 = vunpack.c.l.b16 %v1182
        %v1637 = vunpack.c.h.b16 %v1182
        %v1638 = vunpack.c.l.b16 %v1183
        %v1639 = vunpack.c.h.b16 %v1183
        %v1640 = vunpack.c.l.b16 %v1184
        %v1641 = vunpack.c.h.b16 %v1184
        %v1642 = vunpack.c.l.b16 %v1185
        %v1643 = vunpack.c.h.b16 %v1185
        %v1644 = vunpack.c.l.b16 %v1186
        %v1645 = vunpack.c.h.b16 %v1186
        %v1646 = vunpack.c.l.b16 %v1187
        %v1647 = vunpack.c.h.b16 %v1187
        %v1648 = vunpack.c.l.b16 %v1188
        %v1649 = vunpack.c.h.b16 %v1188
        %v1650 = vunpack.c.l.b16 %v1189
        %v1651 = vunpack.c.h.b16 %v1189
        %v1652 = vunpack.c.l.b16 %v1190
        %v1653 = vunpack.c.h.b16 %v1190
        %v1654 = vunpack.c.l.b16 %v1191
        %v1655 = vunpack.c.h.b16 %v1191
        %v1656 = vunpack.c.l.b16 %v1192
        %v1657 = vunpack.c.h.b16 %v1192
        %v1658 = vpack.c.b16 %v1588, %v1586
        %v1659 = vpack.c.b16 %v1589, %v1587
        %v1660 = vpack.c.b16 %v1592, %v1590
        %v1661 = vpack.c.b16 %v1593, %v1591
        %v1662 = vpack.c.b16 %v1596, %v1594
        %v1663 = vpack.c.b16 %v1597, %v1595
        %v1664 = vpack.c.b16 %v1600, %v1598
        %v1665 = vpack.c.b16 %v1601, %v1599
        %v1666 = vpack.c.b16 %v1604, %v1602
        %v1667 = vpack.c.b16 %v1605, %v1603
        %v1668 = vpack.c.b16 %v1608, %v1606
        %v1669 = vpack.c.b16 %v1609, %v1607
        %v1670 = vpack.c.b16 %v1612, %v1610
        %v1671 = vpack.c.b16 %v1613, %v1611
        %v1672 = vpack.c.b16 %v1616, %v1614
        %v1673 = vpack.c.b16 %v1617, %v1615
        %v1674 = vpack.c.b16 %v1620, %v1618
        %v1675 = vpack.c.b16 %v1621, %v1619
        %v1676 = vpack.c.b16 %v1624, %v1622
        %v1677 = vpack.c.b16 %v1625, %v1623
        %v1678 = vpack.c.b16 %v1628, %v1626
        %v1679 = vpack.c.b16 %v1629, %v1627
        %v1680 = vpack.c.b16 %v1632, %v1630
        %v1681 = vpack.c.b16 %v1633, %v1631
        %v1682 = vpack.c.b16 %v1636, %v1634
        %v1683 = vpack.c.b16 %v1637, %v1635
        %v1684 = vpack.c.b16 %v1640, %v1638
        %v1685 = vpack.c.b16 %v1641, %v1639
        %v1686 = vpack.c.b16 %v1644, %v1642
        %v1687 = vpack.c.b16 %v1645, %v1643
        %v1688 = vpack.c.b16 %v1648, %v1646
        %v1689 = vpack.c.b16 %v1649, %v1647
        %v1690 = vpack.c.b16 %v1652, %v1650
        %v1691 = vpack.c.b16 %v1653, %v1651
        %v1692 = vpack.c.b16 %v1656, %v1654
        %v1693 = vpack.c.b16 %v1657, %v1655
        %v1731 = vsel %vm650, %v1156, 0
        %1733 = vmatprep.subr.bf16.mxu0 %v1673
        %1734 = vmatpush1.bf16.msra.mxu0 %v1672
        %1735 = vmatprep.subr.bf16.mxu0 %v1671
        %1736 = vmatpush1.bf16.msra.mxu0 %v1670
        %1737 = vmatprep.subr.bf16.mxu0 %v1669
        %1738 = vmatpush1.bf16.msra.mxu0 %v1668
        %1739 = vmatprep.subr.bf16.mxu0 %v1667
        %1740 = vmatpush1.bf16.msra.mxu0 %v1666
        %1741 = vmatprep.subr.bf16.mxu0 %v1665
        %1742 = vmatpush1.bf16.msra.mxu0 %v1664
        %1743 = vmatprep.subr.bf16.mxu0 %v1663
        %1744 = vmatpush1.bf16.msra.mxu0 %v1662
        %1745 = vmatprep.subr.bf16.mxu0 %v1661
        %1746 = vmatpush1.bf16.msra.mxu0 %v1660
        %1747 = vmatprep.subr.bf16.mxu0 %v1659
        %1748 = vmatpush1.bf16.msra.mxu0 %v1658
        %1749 = vmatprep.subr.bf16.mxu0 %v1689
        %1750 = vmatpush2.bf16.msra.mxu0 %v1688
        %1751 = vmatprep.subr.bf16.mxu0 %v1687
        %1752 = vmatpush2.bf16.msra.mxu0 %v1686
        %1753 = vmatprep.subr.bf16.mxu0 %v1685
        %1754 = vmatpush2.bf16.msra.mxu0 %v1684
        %1755 = vmatprep.subr.bf16.mxu0 %v1683
        %1756 = vmatpush2.bf16.msra.mxu0 %v1682
        %1757 = vmatprep.subr.bf16.mxu0 %v1681
        %1758 = vmatpush2.bf16.msra.mxu0 %v1680
        %1759 = vmatprep.subr.bf16.mxu0 %v1679
        %1760 = vmatpush2.bf16.msra.mxu0 %v1678
        %1761 = vmatprep.subr.bf16.mxu0 %v1677
        %1762 = vmatpush2.bf16.msra.mxu0 %v1676
        %1763 = vmatprep.subr.bf16.mxu0 %v1675
        %1764 = vmatpush2.bf16.msra.mxu0 %v1674
        %1765 = vmatprep.mubr.bf16.mxu0 %v1155
        %1766 = vmatmul.mubr.bf16.gmra.mxu0 %v1154
        %v1767 = vpop.f32.mrf.mxu0
        %v1768 = vadd.f32 %v1542, %v1767
        %v1769 = vpop.f32.mrf.mxu0
        %v1770 = vadd.f32 %v1544, %v1769
        %v1771 = vpop.f32.mrf.mxu0
        %v1772 = vadd.f32 %v1546, %v1771
        %v1773 = vpop.f32.mrf.mxu0
        %v1774 = vadd.f32 %v1548, %v1773
        %1775 = vdwg.mxu0
        %1776 = vmatprep.subr.bf16.mxu0 0
        %1777 = vmatpush1.bf16.msra.mxu0 0
        %1778 = vmatprep.subr.bf16.mxu0 0
        %1779 = vmatpush1.bf16.msra.mxu0 0
        %1780 = vmatprep.subr.bf16.mxu0 0
        %1781 = vmatpush1.bf16.msra.mxu0 0
        %1782 = vmatprep.subr.bf16.mxu0 0
        %1783 = vmatpush1.bf16.msra.mxu0 0
        %1784 = vmatprep.subr.bf16.mxu0 0
        %1785 = vmatpush1.bf16.msra.mxu0 0
        %1786 = vmatprep.subr.bf16.mxu0 0
        %1787 = vmatpush1.bf16.msra.mxu0 0
        %1788 = vmatprep.subr.bf16.mxu0 %v1693
        %1789 = vmatpush1.bf16.msra.mxu0 %v1692
        %1790 = vmatprep.subr.bf16.mxu0 %v1691
        %1791 = vmatpush1.bf16.msra.mxu0 %v1690
        %1792 = vmatprep.subr.bf16.mxu0 0
        %1793 = vmatpush2.bf16.msra.mxu0 0
        %1794 = vmatprep.subr.bf16.mxu0 0
        %1795 = vmatpush2.bf16.msra.mxu0 0
        %1796 = vmatprep.subr.bf16.mxu0 0
        %1797 = vmatpush2.bf16.msra.mxu0 0
        %1798 = vmatprep.subr.bf16.mxu0 0
        %1799 = vmatpush2.bf16.msra.mxu0 0
        %1800 = vmatprep.subr.bf16.mxu0 0
        %1801 = vmatpush2.bf16.msra.mxu0 0
        %1802 = vmatprep.subr.bf16.mxu0 0
        %1803 = vmatpush2.bf16.msra.mxu0 0
        %1804 = vmatprep.subr.bf16.mxu0 0
        %1805 = vmatpush2.bf16.msra.mxu0 0
        %1806 = vmatprep.subr.bf16.mxu0 0
        %1807 = vmatpush2.bf16.msra.mxu0 0
        %1808 = vmatprep.mubr.bf16.mxu0 0
        %1809 = vmatmul.mubr.bf16.gmra.mxu0 %v1731
        %v1810 = vpop.f32.mrf.mxu0
        %v1811 = vadd.f32 %v1768, %v1810
        %v1812 = vpop.f32.mrf.mxu0
        %v1813 = vadd.f32 %v1770, %v1812
        %v1814 = vpop.f32.mrf.mxu0
        %v1815 = vadd.f32 %v1772, %v1814
        %v1816 = vpop.f32.mrf.mxu0
        %v1817 = vadd.f32 %v1774, %v1816
        %1818 = vdwg.mxu0
        %v1819 = vld [vmem:[#allocation2] sm:$0xfc]
        %v1820 = vld [vmem:[#allocation2 + $0x8] sm:$0xfc]
        %v1821 = vld [vmem:[#allocation2 + $0x10] sm:$0xfc]
        %v1822 = vld [vmem:[#allocation2 + $0x30] sm:$0x3]
        %v1823 = vld [vmem:[#allocation2 + $0x38] sm:$0x3]
        %v1824 = vld [vmem:[#allocation2 + $0x40] sm:$0x3]
        %v1825 = vpack.c.bf16 %v1151, %v1819
        %v1826 = vpack.c.bf16 %v1152, %v1820
        %v1827 = vpack.c.bf16 %v1153, %v1821
        %v1828 = vpack.c.bf16 %v1822, %v1822
        %v1829 = vpack.c.bf16 %v1823, %v1823
        %v1830 = vpack.c.bf16 %v1824, %v1824
        %s1831 = scalar_lea.vmem [#allocation10], 576
        %v1832 = vld [vmem:[%s1831] sm:$0xff]
        %v1833 = vld [vmem:[%s1831 + $0x8] sm:$0xff]
        %v1834 = vld [vmem:[%s1831 + $0x10] sm:$0xff]
        %v1835 = vld [vmem:[%s1831 + $0x18] sm:$0xff]
        %v1836 = vld [vmem:[%s1831 + $0x20] sm:$0xff]
        %v1837 = vld [vmem:[%s1831 + $0x28] sm:$0xff]
        %v1838 = vld [vmem:[%s1831 + $0x30] sm:$0xff]
        %v1839 = vld [vmem:[%s1831 + $0x38] sm:$0xff]
        %v1840 = vld [vmem:[%s1831 + $0x40] sm:$0xff]
        %v1841 = vld [vmem:[%s1831 + $0x48] sm:$0xff]
        %v1842 = vld [vmem:[%s1831 + $0x50] sm:$0xff]
        %v1843 = vld [vmem:[%s1831 + $0x58] sm:$0xff]
        %v1844 = vld [vmem:[%s1831 + $0x60] sm:$0xff]
        %v1845 = vld [vmem:[%s1831 + $0x68] sm:$0xff]
        %v1846 = vld [vmem:[%s1831 + $0x70] sm:$0xff]
        %v1847 = vld [vmem:[%s1831 + $0x78] sm:$0xff]
        %v1848 = vld [vmem:[%s1831 + $0x80] sm:$0xff]
        %v1849 = vld [vmem:[%s1831 + $0x88] sm:$0xff]
        %v1850 = vld [vmem:[%s1831 + $0x90] sm:$0xff]
        %v1851 = vld [vmem:[%s1831 + $0x98] sm:$0xff]
        %v1852 = vld [vmem:[%s1831 + $0xa0] sm:$0xff]
        %v1853 = vld [vmem:[%s1831 + $0xa8] sm:$0xff]
        %v1854 = vld [vmem:[%s1831 + $0xb0] sm:$0xff]
        %v1855 = vld [vmem:[%s1831 + $0xb8] sm:$0xff]
        %v1856 = vld [vmem:[%s1831 + $0xc0] sm:$0xff]
        %v1857 = vld [vmem:[%s1831 + $0xc8] sm:$0xff]
        %v1858 = vld [vmem:[%s1831 + $0xd0] sm:$0xff]
        %v1859 = vld [vmem:[%s1831 + $0xd8] sm:$0xff]
        %v1860 = vld [vmem:[%s1831 + $0xe0] sm:$0xff]
        %v1861 = vld [vmem:[%s1831 + $0xe8] sm:$0xff]
        %v1862 = vld [vmem:[%s1831 + $0xf0] sm:$0xff]
        %v1863 = vld [vmem:[%s1831 + $0xf8] sm:$0xff]
        %v1864 = vld [vmem:[%s1831 + $0x100] sm:$0xff]
        %v1865 = vld [vmem:[%s1831 + $0x108] sm:$0xff]
        %v1866 = vld [vmem:[%s1831 + $0x110] sm:$0xff]
        %v1867 = vld [vmem:[%s1831 + $0x118] sm:$0xff]
        %vm1874 = vcmask 1046528
        %v1875 = vrot.slane %v1825, 1
        %v1876 = vrot.slane %v1828, 1
        %v1877 = vsel %vm1874, %v1875, %v1876
        %v1878 = vrot.slane %v1826, 1
        %v1879 = vrot.slane %v1829, 1
        %v1880 = vsel %vm1874, %v1878, %v1879
        %v1881 = vrot.slane %v1827, 1
        %v1882 = vrot.slane %v1830, 1
        %v1883 = vsel %vm1874, %v1881, %v1882
        %v1922 = vunpack.c.l.b16 %v1832
        %v1923 = vunpack.c.h.b16 %v1832
        %v1924 = vunpack.c.l.b16 %v1833
        %v1925 = vunpack.c.h.b16 %v1833
        %v1926 = vunpack.c.l.b16 %v1834
        %v1927 = vunpack.c.h.b16 %v1834
        %v1928 = vunpack.c.l.b16 %v1835
        %v1929 = vunpack.c.h.b16 %v1835
        %v1930 = vunpack.c.l.b16 %v1836
        %v1931 = vunpack.c.h.b16 %v1836
        %v1932 = vunpack.c.l.b16 %v1837
        %v1933 = vunpack.c.h.b16 %v1837
        %v1934 = vunpack.c.l.b16 %v1838
        %v1935 = vunpack.c.h.b16 %v1838
        %v1936 = vunpack.c.l.b16 %v1839
        %v1937 = vunpack.c.h.b16 %v1839
        %v1938 = vunpack.c.l.b16 %v1840
        %v1939 = vunpack.c.h.b16 %v1840
        %v1940 = vunpack.c.l.b16 %v1841
        %v1941 = vunpack.c.h.b16 %v1841
        %v1942 = vunpack.c.l.b16 %v1842
        %v1943 = vunpack.c.h.b16 %v1842
        %v1944 = vunpack.c.l.b16 %v1843
        %v1945 = vunpack.c.h.b16 %v1843
        %v1946 = vunpack.c.l.b16 %v1844
        %v1947 = vunpack.c.h.b16 %v1844
        %v1948 = vunpack.c.l.b16 %v1845
        %v1949 = vunpack.c.h.b16 %v1845
        %v1950 = vunpack.c.l.b16 %v1846
        %v1951 = vunpack.c.h.b16 %v1846
        %v1952 = vunpack.c.l.b16 %v1847
        %v1953 = vunpack.c.h.b16 %v1847
        %v1954 = vunpack.c.l.b16 %v1848
        %v1955 = vunpack.c.h.b16 %v1848
        %v1956 = vunpack.c.l.b16 %v1849
        %v1957 = vunpack.c.h.b16 %v1849
        %v1958 = vunpack.c.l.b16 %v1850
        %v1959 = vunpack.c.h.b16 %v1850
        %v1960 = vunpack.c.l.b16 %v1851
        %v1961 = vunpack.c.h.b16 %v1851
        %v1962 = vunpack.c.l.b16 %v1852
        %v1963 = vunpack.c.h.b16 %v1852
        %v1964 = vunpack.c.l.b16 %v1853
        %v1965 = vunpack.c.h.b16 %v1853
        %v1966 = vunpack.c.l.b16 %v1854
        %v1967 = vunpack.c.h.b16 %v1854
        %v1968 = vunpack.c.l.b16 %v1855
        %v1969 = vunpack.c.h.b16 %v1855
        %v1970 = vunpack.c.l.b16 %v1856
        %v1971 = vunpack.c.h.b16 %v1856
        %v1972 = vunpack.c.l.b16 %v1857
        %v1973 = vunpack.c.h.b16 %v1857
        %v1974 = vunpack.c.l.b16 %v1858
        %v1975 = vunpack.c.h.b16 %v1858
        %v1976 = vunpack.c.l.b16 %v1859
        %v1977 = vunpack.c.h.b16 %v1859
        %v1978 = vunpack.c.l.b16 %v1860
        %v1979 = vunpack.c.h.b16 %v1860
        %v1980 = vunpack.c.l.b16 %v1861
        %v1981 = vunpack.c.h.b16 %v1861
        %v1982 = vunpack.c.l.b16 %v1862
        %v1983 = vunpack.c.h.b16 %v1862
        %v1984 = vunpack.c.l.b16 %v1863
        %v1985 = vunpack.c.h.b16 %v1863
        %v1986 = vunpack.c.l.b16 %v1864
        %v1987 = vunpack.c.h.b16 %v1864
        %v1988 = vunpack.c.l.b16 %v1865
        %v1989 = vunpack.c.h.b16 %v1865
        %v1990 = vunpack.c.l.b16 %v1866
        %v1991 = vunpack.c.h.b16 %v1866
        %v1992 = vunpack.c.l.b16 %v1867
        %v1993 = vunpack.c.h.b16 %v1867
        %v1994 = vpack.c.b16 %v1924, %v1922
        %v1995 = vpack.c.b16 %v1925, %v1923
        %v1996 = vpack.c.b16 %v1928, %v1926
        %v1997 = vpack.c.b16 %v1929, %v1927
        %v1998 = vpack.c.b16 %v1932, %v1930
        %v1999 = vpack.c.b16 %v1933, %v1931
        %v2000 = vpack.c.b16 %v1936, %v1934
        %v2001 = vpack.c.b16 %v1937, %v1935
        %v2002 = vpack.c.b16 %v1940, %v1938
        %v2003 = vpack.c.b16 %v1941, %v1939
        %v2004 = vpack.c.b16 %v1944, %v1942
        %v2005 = vpack.c.b16 %v1945, %v1943
        %v2006 = vpack.c.b16 %v1948, %v1946
        %v2007 = vpack.c.b16 %v1949, %v1947
        %v2008 = vpack.c.b16 %v1952, %v1950
        %v2009 = vpack.c.b16 %v1953, %v1951
        %v2010 = vpack.c.b16 %v1956, %v1954
        %v2011 = vpack.c.b16 %v1957, %v1955
        %v2012 = vpack.c.b16 %v1960, %v1958
        %v2013 = vpack.c.b16 %v1961, %v1959
        %v2014 = vpack.c.b16 %v1964, %v1962
        %v2015 = vpack.c.b16 %v1965, %v1963
        %v2016 = vpack.c.b16 %v1968, %v1966
        %v2017 = vpack.c.b16 %v1969, %v1967
        %v2018 = vpack.c.b16 %v1972, %v1970
        %v2019 = vpack.c.b16 %v1973, %v1971
        %v2020 = vpack.c.b16 %v1976, %v1974
        %v2021 = vpack.c.b16 %v1977, %v1975
        %v2022 = vpack.c.b16 %v1980, %v1978
        %v2023 = vpack.c.b16 %v1981, %v1979
        %v2024 = vpack.c.b16 %v1984, %v1982
        %v2025 = vpack.c.b16 %v1985, %v1983
        %v2026 = vpack.c.b16 %v1988, %v1986
        %v2027 = vpack.c.b16 %v1989, %v1987
        %v2028 = vpack.c.b16 %v1992, %v1990
        %v2029 = vpack.c.b16 %v1993, %v1991
        %v2067 = vsel %vm650, %v1883, 0
        %2069 = vmatprep.subr.bf16.mxu0 %v2009
        %2070 = vmatpush1.bf16.msra.mxu0 %v2008
        %2071 = vmatprep.subr.bf16.mxu0 %v2007
        %2072 = vmatpush1.bf16.msra.mxu0 %v2006
        %2073 = vmatprep.subr.bf16.mxu0 %v2005
        %2074 = vmatpush1.bf16.msra.mxu0 %v2004
        %2075 = vmatprep.subr.bf16.mxu0 %v2003
        %2076 = vmatpush1.bf16.msra.mxu0 %v2002
        %2077 = vmatprep.subr.bf16.mxu0 %v2001
        %2078 = vmatpush1.bf16.msra.mxu0 %v2000
        %2079 = vmatprep.subr.bf16.mxu0 %v1999
        %2080 = vmatpush1.bf16.msra.mxu0 %v1998
        %2081 = vmatprep.subr.bf16.mxu0 %v1997
        %2082 = vmatpush1.bf16.msra.mxu0 %v1996
        %2083 = vmatprep.subr.bf16.mxu0 %v1995
        %2084 = vmatpush1.bf16.msra.mxu0 %v1994
        %2085 = vmatprep.subr.bf16.mxu0 %v2025
        %2086 = vmatpush2.bf16.msra.mxu0 %v2024
        %2087 = vmatprep.subr.bf16.mxu0 %v2023
        %2088 = vmatpush2.bf16.msra.mxu0 %v2022
        %2089 = vmatprep.subr.bf16.mxu0 %v2021
        %2090 = vmatpush2.bf16.msra.mxu0 %v2020
        %2091 = vmatprep.subr.bf16.mxu0 %v2019
        %2092 = vmatpush2.bf16.msra.mxu0 %v2018
        %2093 = vmatprep.subr.bf16.mxu0 %v2017
        %2094 = vmatpush2.bf16.msra.mxu0 %v2016
        %2095 = vmatprep.subr.bf16.mxu0 %v2015
        %2096 = vmatpush2.bf16.msra.mxu0 %v2014
        %2097 = vmatprep.subr.bf16.mxu0 %v2013
        %2098 = vmatpush2.bf16.msra.mxu0 %v2012
        %2099 = vmatprep.subr.bf16.mxu0 %v2011
        %2100 = vmatpush2.bf16.msra.mxu0 %v2010
        %2101 = vmatprep.mubr.bf16.mxu0 %v1880
        %2102 = vmatmul.mubr.bf16.gmra.mxu0 %v1877
        %v2103 = vpop.f32.mrf.mxu0
        %v2104 = vadd.f32 0.0, %v2103
        %v2105 = vpop.f32.mrf.mxu0
        %v2106 = vadd.f32 0.0, %v2105
        %v2107 = vpop.f32.mrf.mxu0
        %v2108 = vadd.f32 0.0, %v2107
        %v2109 = vpop.f32.mrf.mxu0
        %v2110 = vadd.f32 0.0, %v2109
        %2111 = vdwg.mxu0
        %2112 = vmatprep.subr.bf16.mxu0 0
        %2113 = vmatpush1.bf16.msra.mxu0 0
        %2114 = vmatprep.subr.bf16.mxu0 0
        %2115 = vmatpush1.bf16.msra.mxu0 0
        %2116 = vmatprep.subr.bf16.mxu0 0
        %2117 = vmatpush1.bf16.msra.mxu0 0
        %2118 = vmatprep.subr.bf16.mxu0 0
        %2119 = vmatpush1.bf16.msra.mxu0 0
        %2120 = vmatprep.subr.bf16.mxu0 0
        %2121 = vmatpush1.bf16.msra.mxu0 0
        %2122 = vmatprep.subr.bf16.mxu0 0
        %2123 = vmatpush1.bf16.msra.mxu0 0
        %2124 = vmatprep.subr.bf16.mxu0 %v2029
        %2125 = vmatpush1.bf16.msra.mxu0 %v2028
        %2126 = vmatprep.subr.bf16.mxu0 %v2027
        %2127 = vmatpush1.bf16.msra.mxu0 %v2026
        %2128 = vmatprep.subr.bf16.mxu0 0
        %2129 = vmatpush2.bf16.msra.mxu0 0
        %2130 = vmatprep.subr.bf16.mxu0 0
        %2131 = vmatpush2.bf16.msra.mxu0 0
        %2132 = vmatprep.subr.bf16.mxu0 0
        %2133 = vmatpush2.bf16.msra.mxu0 0
        %2134 = vmatprep.subr.bf16.mxu0 0
        %2135 = vmatpush2.bf16.msra.mxu0 0
        %2136 = vmatprep.subr.bf16.mxu0 0
        %2137 = vmatpush2.bf16.msra.mxu0 0
        %2138 = vmatprep.subr.bf16.mxu0 0
        %2139 = vmatpush2.bf16.msra.mxu0 0
        %2140 = vmatprep.subr.bf16.mxu0 0
        %2141 = vmatpush2.bf16.msra.mxu0 0
        %2142 = vmatprep.subr.bf16.mxu0 0
        %2143 = vmatpush2.bf16.msra.mxu0 0
        %2144 = vmatprep.mubr.bf16.mxu0 0
        %2145 = vmatmul.mubr.bf16.gmra.mxu0 %v2067
        %v2146 = vpop.f32.mrf.mxu0
        %v2147 = vadd.f32 %v2104, %v2146
        %v2148 = vpop.f32.mrf.mxu0
        %v2149 = vadd.f32 %v2106, %v2148
        %v2150 = vpop.f32.mrf.mxu0
        %v2151 = vadd.f32 %v2108, %v2150
        %v2152 = vpop.f32.mrf.mxu0
        %v2153 = vadd.f32 %v2110, %v2152
        %2154 = vdwg.mxu0
        %v2155 = vadd.f32 %v1811, %v2147
        %v2156 = vadd.f32 %v1813, %v2149
        %v2157 = vadd.f32 %v1815, %v2151
        %v2158 = vadd.f32 %v1817, %v2153
        %v2159 = vld [vmem:[#allocation3] sm:$0xff]
        %v2160 = vld [vmem:[#allocation3 + $0x8] sm:$0xff]
        %v2161 = vld [vmem:[#allocation3 + $0x10] sm:$0xff]
        %v2162 = vld [vmem:[#allocation3 + $0x18] sm:$0xff]
        %v2163 = vld [vmem:[#allocation3 + $0x20] sm:$0xff]
        %v2164 = vld [vmem:[#allocation3 + $0x28] sm:$0xff]
        %v2165 = vpack.c.bf16 %v2162, %v2159
        %v2166 = vpack.c.bf16 %v2163, %v2160
        %v2167 = vpack.c.bf16 %v2164, %v2161
        %s2168 = scalar_lea.vmem [#allocation10], 864
        %v2169 = vld [vmem:[%s2168] sm:$0xff]
        %v2170 = vld [vmem:[%s2168 + $0x8] sm:$0xff]
        %v2171 = vld [vmem:[%s2168 + $0x10] sm:$0xff]
        %v2172 = vld [vmem:[%s2168 + $0x18] sm:$0xff]
        %v2173 = vld [vmem:[%s2168 + $0x20] sm:$0xff]
        %v2174 = vld [vmem:[%s2168 + $0x28] sm:$0xff]
        %v2175 = vld [vmem:[%s2168 + $0x30] sm:$0xff]
        %v2176 = vld [vmem:[%s2168 + $0x38] sm:$0xff]
        %v2177 = vld [vmem:[%s2168 + $0x40] sm:$0xff]
        %v2178 = vld [vmem:[%s2168 + $0x48] sm:$0xff]
        %v2179 = vld [vmem:[%s2168 + $0x50] sm:$0xff]
        %v2180 = vld [vmem:[%s2168 + $0x58] sm:$0xff]
        %v2181 = vld [vmem:[%s2168 + $0x60] sm:$0xff]
        %v2182 = vld [vmem:[%s2168 + $0x68] sm:$0xff]
        %v2183 = vld [vmem:[%s2168 + $0x70] sm:$0xff]
        %v2184 = vld [vmem:[%s2168 + $0x78] sm:$0xff]
        %v2185 = vld [vmem:[%s2168 + $0x80] sm:$0xff]
        %v2186 = vld [vmem:[%s2168 + $0x88] sm:$0xff]
        %v2187 = vld [vmem:[%s2168 + $0x90] sm:$0xff]
        %v2188 = vld [vmem:[%s2168 + $0x98] sm:$0xff]
        %v2189 = vld [vmem:[%s2168 + $0xa0] sm:$0xff]
        %v2190 = vld [vmem:[%s2168 + $0xa8] sm:$0xff]
        %v2191 = vld [vmem:[%s2168 + $0xb0] sm:$0xff]
        %v2192 = vld [vmem:[%s2168 + $0xb8] sm:$0xff]
        %v2193 = vld [vmem:[%s2168 + $0xc0] sm:$0xff]
        %v2194 = vld [vmem:[%s2168 + $0xc8] sm:$0xff]
        %v2195 = vld [vmem:[%s2168 + $0xd0] sm:$0xff]
        %v2196 = vld [vmem:[%s2168 + $0xd8] sm:$0xff]
        %v2197 = vld [vmem:[%s2168 + $0xe0] sm:$0xff]
        %v2198 = vld [vmem:[%s2168 + $0xe8] sm:$0xff]
        %v2199 = vld [vmem:[%s2168 + $0xf0] sm:$0xff]
        %v2200 = vld [vmem:[%s2168 + $0xf8] sm:$0xff]
        %v2201 = vld [vmem:[%s2168 + $0x100] sm:$0xff]
        %v2202 = vld [vmem:[%s2168 + $0x108] sm:$0xff]
        %v2203 = vld [vmem:[%s2168 + $0x110] sm:$0xff]
        %v2204 = vld [vmem:[%s2168 + $0x118] sm:$0xff]
        %v2241 = vunpack.c.l.b16 %v2169
        %v2242 = vunpack.c.h.b16 %v2169
        %v2243 = vunpack.c.l.b16 %v2170
        %v2244 = vunpack.c.h.b16 %v2170
        %v2245 = vunpack.c.l.b16 %v2171
        %v2246 = vunpack.c.h.b16 %v2171
        %v2247 = vunpack.c.l.b16 %v2172
        %v2248 = vunpack.c.h.b16 %v2172
        %v2249 = vunpack.c.l.b16 %v2173
        %v2250 = vunpack.c.h.b16 %v2173
        %v2251 = vunpack.c.l.b16 %v2174
        %v2252 = vunpack.c.h.b16 %v2174
        %v2253 = vunpack.c.l.b16 %v2175
        %v2254 = vunpack.c.h.b16 %v2175
        %v2255 = vunpack.c.l.b16 %v2176
        %v2256 = vunpack.c.h.b16 %v2176
        %v2257 = vunpack.c.l.b16 %v2177
        %v2258 = vunpack.c.h.b16 %v2177
        %v2259 = vunpack.c.l.b16 %v2178
        %v2260 = vunpack.c.h.b16 %v2178
        %v2261 = vunpack.c.l.b16 %v2179
        %v2262 = vunpack.c.h.b16 %v2179
        %v2263 = vunpack.c.l.b16 %v2180
        %v2264 = vunpack.c.h.b16 %v2180
        %v2265 = vunpack.c.l.b16 %v2181
        %v2266 = vunpack.c.h.b16 %v2181
        %v2267 = vunpack.c.l.b16 %v2182
        %v2268 = vunpack.c.h.b16 %v2182
        %v2269 = vunpack.c.l.b16 %v2183
        %v2270 = vunpack.c.h.b16 %v2183
        %v2271 = vunpack.c.l.b16 %v2184
        %v2272 = vunpack.c.h.b16 %v2184
        %v2273 = vunpack.c.l.b16 %v2185
        %v2274 = vunpack.c.h.b16 %v2185
        %v2275 = vunpack.c.l.b16 %v2186
        %v2276 = vunpack.c.h.b16 %v2186
        %v2277 = vunpack.c.l.b16 %v2187
        %v2278 = vunpack.c.h.b16 %v2187
        %v2279 = vunpack.c.l.b16 %v2188
        %v2280 = vunpack.c.h.b16 %v2188
        %v2281 = vunpack.c.l.b16 %v2189
        %v2282 = vunpack.c.h.b16 %v2189
        %v2283 = vunpack.c.l.b16 %v2190
        %v2284 = vunpack.c.h.b16 %v2190
        %v2285 = vunpack.c.l.b16 %v2191
        %v2286 = vunpack.c.h.b16 %v2191
        %v2287 = vunpack.c.l.b16 %v2192
        %v2288 = vunpack.c.h.b16 %v2192
        %v2289 = vunpack.c.l.b16 %v2193
        %v2290 = vunpack.c.h.b16 %v2193
        %v2291 = vunpack.c.l.b16 %v2194
        %v2292 = vunpack.c.h.b16 %v2194
        %v2293 = vunpack.c.l.b16 %v2195
        %v2294 = vunpack.c.h.b16 %v2195
        %v2295 = vunpack.c.l.b16 %v2196
        %v2296 = vunpack.c.h.b16 %v2196
        %v2297 = vunpack.c.l.b16 %v2197
        %v2298 = vunpack.c.h.b16 %v2197
        %v2299 = vunpack.c.l.b16 %v2198
        %v2300 = vunpack.c.h.b16 %v2198
        %v2301 = vunpack.c.l.b16 %v2199
        %v2302 = vunpack.c.h.b16 %v2199
        %v2303 = vunpack.c.l.b16 %v2200
        %v2304 = vunpack.c.h.b16 %v2200
        %v2305 = vunpack.c.l.b16 %v2201
        %v2306 = vunpack.c.h.b16 %v2201
        %v2307 = vunpack.c.l.b16 %v2202
        %v2308 = vunpack.c.h.b16 %v2202
        %v2309 = vunpack.c.l.b16 %v2203
        %v2310 = vunpack.c.h.b16 %v2203
        %v2311 = vunpack.c.l.b16 %v2204
        %v2312 = vunpack.c.h.b16 %v2204
        %v2313 = vpack.c.b16 %v2243, %v2241
        %v2314 = vpack.c.b16 %v2244, %v2242
        %v2315 = vpack.c.b16 %v2247, %v2245
        %v2316 = vpack.c.b16 %v2248, %v2246
        %v2317 = vpack.c.b16 %v2251, %v2249
        %v2318 = vpack.c.b16 %v2252, %v2250
        %v2319 = vpack.c.b16 %v2255, %v2253
        %v2320 = vpack.c.b16 %v2256, %v2254
        %v2321 = vpack.c.b16 %v2259, %v2257
        %v2322 = vpack.c.b16 %v2260, %v2258
        %v2323 = vpack.c.b16 %v2263, %v2261
        %v2324 = vpack.c.b16 %v2264, %v2262
        %v2325 = vpack.c.b16 %v2267, %v2265
        %v2326 = vpack.c.b16 %v2268, %v2266
        %v2327 = vpack.c.b16 %v2271, %v2269
        %v2328 = vpack.c.b16 %v2272, %v2270
        %v2329 = vpack.c.b16 %v2275, %v2273
        %v2330 = vpack.c.b16 %v2276, %v2274
        %v2331 = vpack.c.b16 %v2279, %v2277
        %v2332 = vpack.c.b16 %v2280, %v2278
        %v2333 = vpack.c.b16 %v2283, %v2281
        %v2334 = vpack.c.b16 %v2284, %v2282
        %v2335 = vpack.c.b16 %v2287, %v2285
        %v2336 = vpack.c.b16 %v2288, %v2286
        %v2337 = vpack.c.b16 %v2291, %v2289
        %v2338 = vpack.c.b16 %v2292, %v2290
        %v2339 = vpack.c.b16 %v2295, %v2293
        %v2340 = vpack.c.b16 %v2296, %v2294
        %v2341 = vpack.c.b16 %v2299, %v2297
        %v2342 = vpack.c.b16 %v2300, %v2298
        %v2343 = vpack.c.b16 %v2303, %v2301
        %v2344 = vpack.c.b16 %v2304, %v2302
        %v2345 = vpack.c.b16 %v2307, %v2305
        %v2346 = vpack.c.b16 %v2308, %v2306
        %v2347 = vpack.c.b16 %v2311, %v2309
        %v2348 = vpack.c.b16 %v2312, %v2310
        %v2386 = vsel %vm650, %v2167, 0
        %2388 = vmatprep.subr.bf16.mxu0 %v2328
        %2389 = vmatpush1.bf16.msra.mxu0 %v2327
        %2390 = vmatprep.subr.bf16.mxu0 %v2326
        %2391 = vmatpush1.bf16.msra.mxu0 %v2325
        %2392 = vmatprep.subr.bf16.mxu0 %v2324
        %2393 = vmatpush1.bf16.msra.mxu0 %v2323
        %2394 = vmatprep.subr.bf16.mxu0 %v2322
        %2395 = vmatpush1.bf16.msra.mxu0 %v2321
        %2396 = vmatprep.subr.bf16.mxu0 %v2320
        %2397 = vmatpush1.bf16.msra.mxu0 %v2319
        %2398 = vmatprep.subr.bf16.mxu0 %v2318
        %2399 = vmatpush1.bf16.msra.mxu0 %v2317
        %2400 = vmatprep.subr.bf16.mxu0 %v2316
        %2401 = vmatpush1.bf16.msra.mxu0 %v2315
        %2402 = vmatprep.subr.bf16.mxu0 %v2314
        %2403 = vmatpush1.bf16.msra.mxu0 %v2313
        %2404 = vmatprep.subr.bf16.mxu0 %v2344
        %2405 = vmatpush2.bf16.msra.mxu0 %v2343
        %2406 = vmatprep.subr.bf16.mxu0 %v2342
        %2407 = vmatpush2.bf16.msra.mxu0 %v2341
        %2408 = vmatprep.subr.bf16.mxu0 %v2340
        %2409 = vmatpush2.bf16.msra.mxu0 %v2339
        %2410 = vmatprep.subr.bf16.mxu0 %v2338
        %2411 = vmatpush2.bf16.msra.mxu0 %v2337
        %2412 = vmatprep.subr.bf16.mxu0 %v2336
        %2413 = vmatpush2.bf16.msra.mxu0 %v2335
        %2414 = vmatprep.subr.bf16.mxu0 %v2334
        %2415 = vmatpush2.bf16.msra.mxu0 %v2333
        %2416 = vmatprep.subr.bf16.mxu0 %v2332
        %2417 = vmatpush2.bf16.msra.mxu0 %v2331
        %2418 = vmatprep.subr.bf16.mxu0 %v2330
        %2419 = vmatpush2.bf16.msra.mxu0 %v2329
        %2420 = vmatprep.mubr.bf16.mxu0 %v2166
        %2421 = vmatmul.mubr.bf16.gmra.mxu0 %v2165
        %v2422 = vpop.f32.mrf.mxu0
        %v2423 = vadd.f32 0.0, %v2422
        %v2424 = vpop.f32.mrf.mxu0
        %v2425 = vadd.f32 0.0, %v2424
        %v2426 = vpop.f32.mrf.mxu0
        %v2427 = vadd.f32 0.0, %v2426
        %v2428 = vpop.f32.mrf.mxu0
        %v2429 = vadd.f32 0.0, %v2428
        %2430 = vdwg.mxu0
        %2431 = vmatprep.subr.bf16.mxu0 0
        %2432 = vmatpush1.bf16.msra.mxu0 0
        %2433 = vmatprep.subr.bf16.mxu0 0
        %2434 = vmatpush1.bf16.msra.mxu0 0
        %2435 = vmatprep.subr.bf16.mxu0 0
        %2436 = vmatpush1.bf16.msra.mxu0 0
        %2437 = vmatprep.subr.bf16.mxu0 0
        %2438 = vmatpush1.bf16.msra.mxu0 0
        %2439 = vmatprep.subr.bf16.mxu0 0
        %2440 = vmatpush1.bf16.msra.mxu0 0
        %2441 = vmatprep.subr.bf16.mxu0 0
        %2442 = vmatpush1.bf16.msra.mxu0 0
        %2443 = vmatprep.subr.bf16.mxu0 %v2348
        %2444 = vmatpush1.bf16.msra.mxu0 %v2347
        %2445 = vmatprep.subr.bf16.mxu0 %v2346
        %2446 = vmatpush1.bf16.msra.mxu0 %v2345
        %2447 = vmatprep.subr.bf16.mxu0 0
        %2448 = vmatpush2.bf16.msra.mxu0 0
        %2449 = vmatprep.subr.bf16.mxu0 0
        %2450 = vmatpush2.bf16.msra.mxu0 0
        %2451 = vmatprep.subr.bf16.mxu0 0
        %2452 = vmatpush2.bf16.msra.mxu0 0
        %2453 = vmatprep.subr.bf16.mxu0 0
        %2454 = vmatpush2.bf16.msra.mxu0 0
        %2455 = vmatprep.subr.bf16.mxu0 0
        %2456 = vmatpush2.bf16.msra.mxu0 0
        %2457 = vmatprep.subr.bf16.mxu0 0
        %2458 = vmatpush2.bf16.msra.mxu0 0
        %2459 = vmatprep.subr.bf16.mxu0 0
        %2460 = vmatpush2.bf16.msra.mxu0 0
        %2461 = vmatprep.subr.bf16.mxu0 0
        %2462 = vmatpush2.bf16.msra.mxu0 0
        %2463 = vmatprep.mubr.bf16.mxu0 0
        %2464 = vmatmul.mubr.bf16.gmra.mxu0 %v2386
        %v2465 = vpop.f32.mrf.mxu0
        %v2466 = vadd.f32 %v2423, %v2465
        %v2467 = vpop.f32.mrf.mxu0
        %v2468 = vadd.f32 %v2425, %v2467
        %v2469 = vpop.f32.mrf.mxu0
        %v2470 = vadd.f32 %v2427, %v2469
        %v2471 = vpop.f32.mrf.mxu0
        %v2472 = vadd.f32 %v2429, %v2471
        %2473 = vdwg.mxu0
        %v2474 = vadd.f32 %v2155, %v2466
        %v2475 = vadd.f32 %v2156, %v2468
        %v2476 = vadd.f32 %v2157, %v2470
        %v2477 = vadd.f32 %v2158, %v2472
        %v2478 = vld [vmem:[#allocation3] sm:$0xfe]
        %v2479 = vld [vmem:[#allocation3 + $0x8] sm:$0xfe]
        %v2480 = vld [vmem:[#allocation3 + $0x10] sm:$0xfe]
        %v2481 = vld [vmem:[#allocation3 + $0x18] sm:$0xff]
        %v2482 = vld [vmem:[#allocation3 + $0x20] sm:$0xff]
        %v2483 = vld [vmem:[#allocation3 + $0x28] sm:$0xff]
        %v2484 = vld [vmem:[#allocation3 + $0x30] sm:$0x1]
        %v2485 = vld [vmem:[#allocation3 + $0x38] sm:$0x1]
        %v2486 = vld [vmem:[#allocation3 + $0x40] sm:$0x1]
        %v2487 = vpack.c.bf16 %v2481, %v2478
        %v2488 = vpack.c.bf16 %v2482, %v2479
        %v2489 = vpack.c.bf16 %v2483, %v2480
        %v2490 = vpack.c.bf16 %v2484, %v2484
        %v2491 = vpack.c.bf16 %v2485, %v2485
        %v2492 = vpack.c.bf16 %v2486, %v2486
        %s2493 = scalar_lea.vmem [#allocation10], 1152
        %v2494 = vld [vmem:[%s2493] sm:$0xff]
        %v2495 = vld [vmem:[%s2493 + $0x8] sm:$0xff]
        %v2496 = vld [vmem:[%s2493 + $0x10] sm:$0xff]
        %v2497 = vld [vmem:[%s2493 + $0x18] sm:$0xff]
        %v2498 = vld [vmem:[%s2493 + $0x20] sm:$0xff]
        %v2499 = vld [vmem:[%s2493 + $0x28] sm:$0xff]
        %v2500 = vld [vmem:[%s2493 + $0x30] sm:$0xff]
        %v2501 = vld [vmem:[%s2493 + $0x38] sm:$0xff]
        %v2502 = vld [vmem:[%s2493 + $0x40] sm:$0xff]
        %v2503 = vld [vmem:[%s2493 + $0x48] sm:$0xff]
        %v2504 = vld [vmem:[%s2493 + $0x50] sm:$0xff]
        %v2505 = vld [vmem:[%s2493 + $0x58] sm:$0xff]
        %v2506 = vld [vmem:[%s2493 + $0x60] sm:$0xff]
        %v2507 = vld [vmem:[%s2493 + $0x68] sm:$0xff]
        %v2508 = vld [vmem:[%s2493 + $0x70] sm:$0xff]
        %v2509 = vld [vmem:[%s2493 + $0x78] sm:$0xff]
        %v2510 = vld [vmem:[%s2493 + $0x80] sm:$0xff]
        %v2511 = vld [vmem:[%s2493 + $0x88] sm:$0xff]
        %v2512 = vld [vmem:[%s2493 + $0x90] sm:$0xff]
        %v2513 = vld [vmem:[%s2493 + $0x98] sm:$0xff]
        %v2514 = vld [vmem:[%s2493 + $0xa0] sm:$0xff]
        %v2515 = vld [vmem:[%s2493 + $0xa8] sm:$0xff]
        %v2516 = vld [vmem:[%s2493 + $0xb0] sm:$0xff]
        %v2517 = vld [vmem:[%s2493 + $0xb8] sm:$0xff]
        %v2518 = vld [vmem:[%s2493 + $0xc0] sm:$0xff]
        %v2519 = vld [vmem:[%s2493 + $0xc8] sm:$0xff]
        %v2520 = vld [vmem:[%s2493 + $0xd0] sm:$0xff]
        %v2521 = vld [vmem:[%s2493 + $0xd8] sm:$0xff]
        %v2522 = vld [vmem:[%s2493 + $0xe0] sm:$0xff]
        %v2523 = vld [vmem:[%s2493 + $0xe8] sm:$0xff]
        %v2524 = vld [vmem:[%s2493 + $0xf0] sm:$0xff]
        %v2525 = vld [vmem:[%s2493 + $0xf8] sm:$0xff]
        %v2526 = vld [vmem:[%s2493 + $0x100] sm:$0xff]
        %v2527 = vld [vmem:[%s2493 + $0x108] sm:$0xff]
        %v2528 = vld [vmem:[%s2493 + $0x110] sm:$0xff]
        %v2529 = vld [vmem:[%s2493 + $0x118] sm:$0xff]
        %v2531 = vshrl.u32 %v2487, 16
        %v2533 = vshll.u32 %v2487, 16
        %v2535 = vrot.slane %v2533, 1
        %v2536 = vor.u32 %v2531, %v2535
        %v2538 = vshll.u32 %v2490, 16
        %v2540 = vrot.slane %v2538, 1
        %v2541 = vsel %vm1242, %v2536, %v2540
        %v2543 = vshrl.u32 %v2488, 16
        %v2545 = vshll.u32 %v2488, 16
        %v2547 = vrot.slane %v2545, 1
        %v2548 = vor.u32 %v2543, %v2547
        %v2550 = vshll.u32 %v2491, 16
        %v2552 = vrot.slane %v2550, 1
        %v2553 = vsel %vm1242, %v2548, %v2552
        %v2555 = vshrl.u32 %v2489, 16
        %v2557 = vshll.u32 %v2489, 16
        %v2559 = vrot.slane %v2557, 1
        %v2560 = vor.u32 %v2555, %v2559
        %v2562 = vshll.u32 %v2492, 16
        %v2564 = vrot.slane %v2562, 1
        %v2565 = vsel %vm1242, %v2560, %v2564
        %v2604 = vunpack.c.l.b16 %v2494
        %v2605 = vunpack.c.h.b16 %v2494
        %v2606 = vunpack.c.l.b16 %v2495
        %v2607 = vunpack.c.h.b16 %v2495
        %v2608 = vunpack.c.l.b16 %v2496
        %v2609 = vunpack.c.h.b16 %v2496
        %v2610 = vunpack.c.l.b16 %v2497
        %v2611 = vunpack.c.h.b16 %v2497
        %v2612 = vunpack.c.l.b16 %v2498
        %v2613 = vunpack.c.h.b16 %v2498
        %v2614 = vunpack.c.l.b16 %v2499
        %v2615 = vunpack.c.h.b16 %v2499
        %v2616 = vunpack.c.l.b16 %v2500
        %v2617 = vunpack.c.h.b16 %v2500
        %v2618 = vunpack.c.l.b16 %v2501
        %v2619 = vunpack.c.h.b16 %v2501
        %v2620 = vunpack.c.l.b16 %v2502
        %v2621 = vunpack.c.h.b16 %v2502
        %v2622 = vunpack.c.l.b16 %v2503
        %v2623 = vunpack.c.h.b16 %v2503
        %v2624 = vunpack.c.l.b16 %v2504
        %v2625 = vunpack.c.h.b16 %v2504
        %v2626 = vunpack.c.l.b16 %v2505
        %v2627 = vunpack.c.h.b16 %v2505
        %v2628 = vunpack.c.l.b16 %v2506
        %v2629 = vunpack.c.h.b16 %v2506
        %v2630 = vunpack.c.l.b16 %v2507
        %v2631 = vunpack.c.h.b16 %v2507
        %v2632 = vunpack.c.l.b16 %v2508
        %v2633 = vunpack.c.h.b16 %v2508
        %v2634 = vunpack.c.l.b16 %v2509
        %v2635 = vunpack.c.h.b16 %v2509
        %v2636 = vunpack.c.l.b16 %v2510
        %v2637 = vunpack.c.h.b16 %v2510
        %v2638 = vunpack.c.l.b16 %v2511
        %v2639 = vunpack.c.h.b16 %v2511
        %v2640 = vunpack.c.l.b16 %v2512
        %v2641 = vunpack.c.h.b16 %v2512
        %v2642 = vunpack.c.l.b16 %v2513
        %v2643 = vunpack.c.h.b16 %v2513
        %v2644 = vunpack.c.l.b16 %v2514
        %v2645 = vunpack.c.h.b16 %v2514
        %v2646 = vunpack.c.l.b16 %v2515
        %v2647 = vunpack.c.h.b16 %v2515
        %v2648 = vunpack.c.l.b16 %v2516
        %v2649 = vunpack.c.h.b16 %v2516
        %v2650 = vunpack.c.l.b16 %v2517
        %v2651 = vunpack.c.h.b16 %v2517
        %v2652 = vunpack.c.l.b16 %v2518
        %v2653 = vunpack.c.h.b16 %v2518
        %v2654 = vunpack.c.l.b16 %v2519
        %v2655 = vunpack.c.h.b16 %v2519
        %v2656 = vunpack.c.l.b16 %v2520
        %v2657 = vunpack.c.h.b16 %v2520
        %v2658 = vunpack.c.l.b16 %v2521
        %v2659 = vunpack.c.h.b16 %v2521
        %v2660 = vunpack.c.l.b16 %v2522
        %v2661 = vunpack.c.h.b16 %v2522
        %v2662 = vunpack.c.l.b16 %v2523
        %v2663 = vunpack.c.h.b16 %v2523
        %v2664 = vunpack.c.l.b16 %v2524
        %v2665 = vunpack.c.h.b16 %v2524
        %v2666 = vunpack.c.l.b16 %v2525
        %v2667 = vunpack.c.h.b16 %v2525
        %v2668 = vunpack.c.l.b16 %v2526
        %v2669 = vunpack.c.h.b16 %v2526
        %v2670 = vunpack.c.l.b16 %v2527
        %v2671 = vunpack.c.h.b16 %v2527
        %v2672 = vunpack.c.l.b16 %v2528
        %v2673 = vunpack.c.h.b16 %v2528
        %v2674 = vunpack.c.l.b16 %v2529
        %v2675 = vunpack.c.h.b16 %v2529
        %v2676 = vpack.c.b16 %v2606, %v2604
        %v2677 = vpack.c.b16 %v2607, %v2605
        %v2678 = vpack.c.b16 %v2610, %v2608
        %v2679 = vpack.c.b16 %v2611, %v2609
        %v2680 = vpack.c.b16 %v2614, %v2612
        %v2681 = vpack.c.b16 %v2615, %v2613
        %v2682 = vpack.c.b16 %v2618, %v2616
        %v2683 = vpack.c.b16 %v2619, %v2617
        %v2684 = vpack.c.b16 %v2622, %v2620
        %v2685 = vpack.c.b16 %v2623, %v2621
        %v2686 = vpack.c.b16 %v2626, %v2624
        %v2687 = vpack.c.b16 %v2627, %v2625
        %v2688 = vpack.c.b16 %v2630, %v2628
        %v2689 = vpack.c.b16 %v2631, %v2629
        %v2690 = vpack.c.b16 %v2634, %v2632
        %v2691 = vpack.c.b16 %v2635, %v2633
        %v2692 = vpack.c.b16 %v2638, %v2636
        %v2693 = vpack.c.b16 %v2639, %v2637
        %v2694 = vpack.c.b16 %v2642, %v2640
        %v2695 = vpack.c.b16 %v2643, %v2641
        %v2696 = vpack.c.b16 %v2646, %v2644
        %v2697 = vpack.c.b16 %v2647, %v2645
        %v2698 = vpack.c.b16 %v2650, %v2648
        %v2699 = vpack.c.b16 %v2651, %v2649
        %v2700 = vpack.c.b16 %v2654, %v2652
        %v2701 = vpack.c.b16 %v2655, %v2653
        %v2702 = vpack.c.b16 %v2658, %v2656
        %v2703 = vpack.c.b16 %v2659, %v2657
        %v2704 = vpack.c.b16 %v2662, %v2660
        %v2705 = vpack.c.b16 %v2663, %v2661
        %v2706 = vpack.c.b16 %v2666, %v2664
        %v2707 = vpack.c.b16 %v2667, %v2665
        %v2708 = vpack.c.b16 %v2670, %v2668
        %v2709 = vpack.c.b16 %v2671, %v2669
        %v2710 = vpack.c.b16 %v2674, %v2672
        %v2711 = vpack.c.b16 %v2675, %v2673
        %v2749 = vsel %vm650, %v2565, 0
        %2751 = vmatprep.subr.bf16.mxu0 %v2691
        %2752 = vmatpush1.bf16.msra.mxu0 %v2690
        %2753 = vmatprep.subr.bf16.mxu0 %v2689
        %2754 = vmatpush1.bf16.msra.mxu0 %v2688
        %2755 = vmatprep.subr.bf16.mxu0 %v2687
        %2756 = vmatpush1.bf16.msra.mxu0 %v2686
        %2757 = vmatprep.subr.bf16.mxu0 %v2685
        %2758 = vmatpush1.bf16.msra.mxu0 %v2684
        %2759 = vmatprep.subr.bf16.mxu0 %v2683
        %2760 = vmatpush1.bf16.msra.mxu0 %v2682
        %2761 = vmatprep.subr.bf16.mxu0 %v2681
        %2762 = vmatpush1.bf16.msra.mxu0 %v2680
        %2763 = vmatprep.subr.bf16.mxu0 %v2679
        %2764 = vmatpush1.bf16.msra.mxu0 %v2678
        %2765 = vmatprep.subr.bf16.mxu0 %v2677
        %2766 = vmatpush1.bf16.msra.mxu0 %v2676
        %2767 = vmatprep.subr.bf16.mxu0 %v2707
        %2768 = vmatpush2.bf16.msra.mxu0 %v2706
        %2769 = vmatprep.subr.bf16.mxu0 %v2705
        %2770 = vmatpush2.bf16.msra.mxu0 %v2704
        %2771 = vmatprep.subr.bf16.mxu0 %v2703
        %2772 = vmatpush2.bf16.msra.mxu0 %v2702
        %2773 = vmatprep.subr.bf16.mxu0 %v2701
        %2774 = vmatpush2.bf16.msra.mxu0 %v2700
        %2775 = vmatprep.subr.bf16.mxu0 %v2699
        %2776 = vmatpush2.bf16.msra.mxu0 %v2698
        %2777 = vmatprep.subr.bf16.mxu0 %v2697
        %2778 = vmatpush2.bf16.msra.mxu0 %v2696
        %2779 = vmatprep.subr.bf16.mxu0 %v2695
        %2780 = vmatpush2.bf16.msra.mxu0 %v2694
        %2781 = vmatprep.subr.bf16.mxu0 %v2693
        %2782 = vmatpush2.bf16.msra.mxu0 %v2692
        %2783 = vmatprep.mubr.bf16.mxu0 %v2553
        %2784 = vmatmul.mubr.bf16.gmra.mxu0 %v2541
        %v2785 = vpop.f32.mrf.mxu0
        %v2786 = vadd.f32 0.0, %v2785
        %v2787 = vpop.f32.mrf.mxu0
        %v2788 = vadd.f32 0.0, %v2787
        %v2789 = vpop.f32.mrf.mxu0
        %v2790 = vadd.f32 0.0, %v2789
        %v2791 = vpop.f32.mrf.mxu0
        %v2792 = vadd.f32 0.0, %v2791
        %2793 = vdwg.mxu0
        %2794 = vmatprep.subr.bf16.mxu0 0
        %2795 = vmatpush1.bf16.msra.mxu0 0
        %2796 = vmatprep.subr.bf16.mxu0 0
        %2797 = vmatpush1.bf16.msra.mxu0 0
        %2798 = vmatprep.subr.bf16.mxu0 0
        %2799 = vmatpush1.bf16.msra.mxu0 0
        %2800 = vmatprep.subr.bf16.mxu0 0
        %2801 = vmatpush1.bf16.msra.mxu0 0
        %2802 = vmatprep.subr.bf16.mxu0 0
        %2803 = vmatpush1.bf16.msra.mxu0 0
        %2804 = vmatprep.subr.bf16.mxu0 0
        %2805 = vmatpush1.bf16.msra.mxu0 0
        %2806 = vmatprep.subr.bf16.mxu0 %v2711
        %2807 = vmatpush1.bf16.msra.mxu0 %v2710
        %2808 = vmatprep.subr.bf16.mxu0 %v2709
        %2809 = vmatpush1.bf16.msra.mxu0 %v2708
        %2810 = vmatprep.subr.bf16.mxu0 0
        %2811 = vmatpush2.bf16.msra.mxu0 0
        %2812 = vmatprep.subr.bf16.mxu0 0
        %2813 = vmatpush2.bf16.msra.mxu0 0
        %2814 = vmatprep.subr.bf16.mxu0 0
        %2815 = vmatpush2.bf16.msra.mxu0 0
        %2816 = vmatprep.subr.bf16.mxu0 0
        %2817 = vmatpush2.bf16.msra.mxu0 0
        %2818 = vmatprep.subr.bf16.mxu0 0
        %2819 = vmatpush2.bf16.msra.mxu0 0
        %2820 = vmatprep.subr.bf16.mxu0 0
        %2821 = vmatpush2.bf16.msra.mxu0 0
        %2822 = vmatprep.subr.bf16.mxu0 0
        %2823 = vmatpush2.bf16.msra.mxu0 0
        %2824 = vmatprep.subr.bf16.mxu0 0
        %2825 = vmatpush2.bf16.msra.mxu0 0
        %2826 = vmatprep.mubr.bf16.mxu0 0
        %2827 = vmatmul.mubr.bf16.gmra.mxu0 %v2749
        %v2828 = vpop.f32.mrf.mxu0
        %v2829 = vadd.f32 %v2786, %v2828
        %v2830 = vpop.f32.mrf.mxu0
        %v2831 = vadd.f32 %v2788, %v2830
        %v2832 = vpop.f32.mrf.mxu0
        %v2833 = vadd.f32 %v2790, %v2832
        %v2834 = vpop.f32.mrf.mxu0
        %v2835 = vadd.f32 %v2792, %v2834
        %2836 = vdwg.mxu0
        %v2837 = vadd.f32 %v2474, %v2829
        %v2838 = vadd.f32 %v2475, %v2831
        %v2839 = vadd.f32 %v2476, %v2833
        %v2840 = vadd.f32 %v2477, %v2835
        %v2841 = vld [vmem:[#allocation3] sm:$0xfc]
        %v2842 = vld [vmem:[#allocation3 + $0x8] sm:$0xfc]
        %v2843 = vld [vmem:[#allocation3 + $0x10] sm:$0xfc]
        %v2844 = vld [vmem:[#allocation3 + $0x30] sm:$0x3]
        %v2845 = vld [vmem:[#allocation3 + $0x38] sm:$0x3]
        %v2846 = vld [vmem:[#allocation3 + $0x40] sm:$0x3]
        %v2847 = vpack.c.bf16 %v2481, %v2841
        %v2848 = vpack.c.bf16 %v2482, %v2842
        %v2849 = vpack.c.bf16 %v2483, %v2843
        %v2850 = vpack.c.bf16 %v2844, %v2844
        %v2851 = vpack.c.bf16 %v2845, %v2845
        %v2852 = vpack.c.bf16 %v2846, %v2846
        %s2853 = scalar_lea.vmem [#allocation10], 1440
        %v2854 = vld [vmem:[%s2853] sm:$0xff]
        %v2855 = vld [vmem:[%s2853 + $0x8] sm:$0xff]
        %v2856 = vld [vmem:[%s2853 + $0x10] sm:$0xff]
        %v2857 = vld [vmem:[%s2853 + $0x18] sm:$0xff]
        %v2858 = vld [vmem:[%s2853 + $0x20] sm:$0xff]
        %v2859 = vld [vmem:[%s2853 + $0x28] sm:$0xff]
        %v2860 = vld [vmem:[%s2853 + $0x30] sm:$0xff]
        %v2861 = vld [vmem:[%s2853 + $0x38] sm:$0xff]
        %v2862 = vld [vmem:[%s2853 + $0x40] sm:$0xff]
        %v2863 = vld [vmem:[%s2853 + $0x48] sm:$0xff]
        %v2864 = vld [vmem:[%s2853 + $0x50] sm:$0xff]
        %v2865 = vld [vmem:[%s2853 + $0x58] sm:$0xff]
        %v2866 = vld [vmem:[%s2853 + $0x60] sm:$0xff]
        %v2867 = vld [vmem:[%s2853 + $0x68] sm:$0xff]
        %v2868 = vld [vmem:[%s2853 + $0x70] sm:$0xff]
        %v2869 = vld [vmem:[%s2853 + $0x78] sm:$0xff]
        %v2870 = vld [vmem:[%s2853 + $0x80] sm:$0xff]
        %v2871 = vld [vmem:[%s2853 + $0x88] sm:$0xff]
        %v2872 = vld [vmem:[%s2853 + $0x90] sm:$0xff]
        %v2873 = vld [vmem:[%s2853 + $0x98] sm:$0xff]
        %v2874 = vld [vmem:[%s2853 + $0xa0] sm:$0xff]
        %v2875 = vld [vmem:[%s2853 + $0xa8] sm:$0xff]
        %v2876 = vld [vmem:[%s2853 + $0xb0] sm:$0xff]
        %v2877 = vld [vmem:[%s2853 + $0xb8] sm:$0xff]
        %v2878 = vld [vmem:[%s2853 + $0xc0] sm:$0xff]
        %v2879 = vld [vmem:[%s2853 + $0xc8] sm:$0xff]
        %v2880 = vld [vmem:[%s2853 + $0xd0] sm:$0xff]
        %v2881 = vld [vmem:[%s2853 + $0xd8] sm:$0xff]
        %v2882 = vld [vmem:[%s2853 + $0xe0] sm:$0xff]
        %v2883 = vld [vmem:[%s2853 + $0xe8] sm:$0xff]
        %v2884 = vld [vmem:[%s2853 + $0xf0] sm:$0xff]
        %v2885 = vld [vmem:[%s2853 + $0xf8] sm:$0xff]
        %v2886 = vld [vmem:[%s2853 + $0x100] sm:$0xff]
        %v2887 = vld [vmem:[%s2853 + $0x108] sm:$0xff]
        %v2888 = vld [vmem:[%s2853 + $0x110] sm:$0xff]
        %v2889 = vld [vmem:[%s2853 + $0x118] sm:$0xff]
        %v2896 = vrot.slane %v2847, 1
        %v2897 = vrot.slane %v2850, 1
        %v2898 = vsel %vm1874, %v2896, %v2897
        %v2899 = vrot.slane %v2848, 1
        %v2900 = vrot.slane %v2851, 1
        %v2901 = vsel %vm1874, %v2899, %v2900
        %v2902 = vrot.slane %v2849, 1
        %v2903 = vrot.slane %v2852, 1
        %v2904 = vsel %vm1874, %v2902, %v2903
        %v2943 = vunpack.c.l.b16 %v2854
        %v2944 = vunpack.c.h.b16 %v2854
        %v2945 = vunpack.c.l.b16 %v2855
        %v2946 = vunpack.c.h.b16 %v2855
        %v2947 = vunpack.c.l.b16 %v2856
        %v2948 = vunpack.c.h.b16 %v2856
        %v2949 = vunpack.c.l.b16 %v2857
        %v2950 = vunpack.c.h.b16 %v2857
        %v2951 = vunpack.c.l.b16 %v2858
        %v2952 = vunpack.c.h.b16 %v2858
        %v2953 = vunpack.c.l.b16 %v2859
        %v2954 = vunpack.c.h.b16 %v2859
        %v2955 = vunpack.c.l.b16 %v2860
        %v2956 = vunpack.c.h.b16 %v2860
        %v2957 = vunpack.c.l.b16 %v2861
        %v2958 = vunpack.c.h.b16 %v2861
        %v2959 = vunpack.c.l.b16 %v2862
        %v2960 = vunpack.c.h.b16 %v2862
        %v2961 = vunpack.c.l.b16 %v2863
        %v2962 = vunpack.c.h.b16 %v2863
        %v2963 = vunpack.c.l.b16 %v2864
        %v2964 = vunpack.c.h.b16 %v2864
        %v2965 = vunpack.c.l.b16 %v2865
        %v2966 = vunpack.c.h.b16 %v2865
        %v2967 = vunpack.c.l.b16 %v2866
        %v2968 = vunpack.c.h.b16 %v2866
        %v2969 = vunpack.c.l.b16 %v2867
        %v2970 = vunpack.c.h.b16 %v2867
        %v2971 = vunpack.c.l.b16 %v2868
        %v2972 = vunpack.c.h.b16 %v2868
        %v2973 = vunpack.c.l.b16 %v2869
        %v2974 = vunpack.c.h.b16 %v2869
        %v2975 = vunpack.c.l.b16 %v2870
        %v2976 = vunpack.c.h.b16 %v2870
        %v2977 = vunpack.c.l.b16 %v2871
        %v2978 = vunpack.c.h.b16 %v2871
        %v2979 = vunpack.c.l.b16 %v2872
        %v2980 = vunpack.c.h.b16 %v2872
        %v2981 = vunpack.c.l.b16 %v2873
        %v2982 = vunpack.c.h.b16 %v2873
        %v2983 = vunpack.c.l.b16 %v2874
        %v2984 = vunpack.c.h.b16 %v2874
        %v2985 = vunpack.c.l.b16 %v2875
        %v2986 = vunpack.c.h.b16 %v2875
        %v2987 = vunpack.c.l.b16 %v2876
        %v2988 = vunpack.c.h.b16 %v2876
        %v2989 = vunpack.c.l.b16 %v2877
        %v2990 = vunpack.c.h.b16 %v2877
        %v2991 = vunpack.c.l.b16 %v2878
        %v2992 = vunpack.c.h.b16 %v2878
        %v2993 = vunpack.c.l.b16 %v2879
        %v2994 = vunpack.c.h.b16 %v2879
        %v2995 = vunpack.c.l.b16 %v2880
        %v2996 = vunpack.c.h.b16 %v2880
        %v2997 = vunpack.c.l.b16 %v2881
        %v2998 = vunpack.c.h.b16 %v2881
        %v2999 = vunpack.c.l.b16 %v2882
        %v3000 = vunpack.c.h.b16 %v2882
        %v3001 = vunpack.c.l.b16 %v2883
        %v3002 = vunpack.c.h.b16 %v2883
        %v3003 = vunpack.c.l.b16 %v2884
        %v3004 = vunpack.c.h.b16 %v2884
        %v3005 = vunpack.c.l.b16 %v2885
        %v3006 = vunpack.c.h.b16 %v2885
        %v3007 = vunpack.c.l.b16 %v2886
        %v3008 = vunpack.c.h.b16 %v2886
        %v3009 = vunpack.c.l.b16 %v2887
        %v3010 = vunpack.c.h.b16 %v2887
        %v3011 = vunpack.c.l.b16 %v2888
        %v3012 = vunpack.c.h.b16 %v2888
        %v3013 = vunpack.c.l.b16 %v2889
        %v3014 = vunpack.c.h.b16 %v2889
        %v3015 = vpack.c.b16 %v2945, %v2943
        %v3016 = vpack.c.b16 %v2946, %v2944
        %v3017 = vpack.c.b16 %v2949, %v2947
        %v3018 = vpack.c.b16 %v2950, %v2948
        %v3019 = vpack.c.b16 %v2953, %v2951
        %v3020 = vpack.c.b16 %v2954, %v2952
        %v3021 = vpack.c.b16 %v2957, %v2955
        %v3022 = vpack.c.b16 %v2958, %v2956
        %v3023 = vpack.c.b16 %v2961, %v2959
        %v3024 = vpack.c.b16 %v2962, %v2960
        %v3025 = vpack.c.b16 %v2965, %v2963
        %v3026 = vpack.c.b16 %v2966, %v2964
        %v3027 = vpack.c.b16 %v2969, %v2967
        %v3028 = vpack.c.b16 %v2970, %v2968
        %v3029 = vpack.c.b16 %v2973, %v2971
        %v3030 = vpack.c.b16 %v2974, %v2972
        %v3031 = vpack.c.b16 %v2977, %v2975
        %v3032 = vpack.c.b16 %v2978, %v2976
        %v3033 = vpack.c.b16 %v2981, %v2979
        %v3034 = vpack.c.b16 %v2982, %v2980
        %v3035 = vpack.c.b16 %v2985, %v2983
        %v3036 = vpack.c.b16 %v2986, %v2984
        %v3037 = vpack.c.b16 %v2989, %v2987
        %v3038 = vpack.c.b16 %v2990, %v2988
        %v3039 = vpack.c.b16 %v2993, %v2991
        %v3040 = vpack.c.b16 %v2994, %v2992
        %v3041 = vpack.c.b16 %v2997, %v2995
        %v3042 = vpack.c.b16 %v2998, %v2996
        %v3043 = vpack.c.b16 %v3001, %v2999
        %v3044 = vpack.c.b16 %v3002, %v3000
        %v3045 = vpack.c.b16 %v3005, %v3003
        %v3046 = vpack.c.b16 %v3006, %v3004
        %v3047 = vpack.c.b16 %v3009, %v3007
        %v3048 = vpack.c.b16 %v3010, %v3008
        %v3049 = vpack.c.b16 %v3013, %v3011
        %v3050 = vpack.c.b16 %v3014, %v3012
        %v3088 = vsel %vm650, %v2904, 0
        %3090 = vmatprep.subr.bf16.mxu0 %v3030
        %3091 = vmatpush1.bf16.msra.mxu0 %v3029
        %3092 = vmatprep.subr.bf16.mxu0 %v3028
        %3093 = vmatpush1.bf16.msra.mxu0 %v3027
        %3094 = vmatprep.subr.bf16.mxu0 %v3026
        %3095 = vmatpush1.bf16.msra.mxu0 %v3025
        %3096 = vmatprep.subr.bf16.mxu0 %v3024
        %3097 = vmatpush1.bf16.msra.mxu0 %v3023
        %3098 = vmatprep.subr.bf16.mxu0 %v3022
        %3099 = vmatpush1.bf16.msra.mxu0 %v3021
        %3100 = vmatprep.subr.bf16.mxu0 %v3020
        %3101 = vmatpush1.bf16.msra.mxu0 %v3019
        %3102 = vmatprep.subr.bf16.mxu0 %v3018
        %3103 = vmatpush1.bf16.msra.mxu0 %v3017
        %3104 = vmatprep.subr.bf16.mxu0 %v3016
        %3105 = vmatpush1.bf16.msra.mxu0 %v3015
        %3106 = vmatprep.subr.bf16.mxu0 %v3046
        %3107 = vmatpush2.bf16.msra.mxu0 %v3045
        %3108 = vmatprep.subr.bf16.mxu0 %v3044
        %3109 = vmatpush2.bf16.msra.mxu0 %v3043
        %3110 = vmatprep.subr.bf16.mxu0 %v3042
        %3111 = vmatpush2.bf16.msra.mxu0 %v3041
        %3112 = vmatprep.subr.bf16.mxu0 %v3040
        %3113 = vmatpush2.bf16.msra.mxu0 %v3039
        %3114 = vmatprep.subr.bf16.mxu0 %v3038
        %3115 = vmatpush2.bf16.msra.mxu0 %v3037
        %3116 = vmatprep.subr.bf16.mxu0 %v3036
        %3117 = vmatpush2.bf16.msra.mxu0 %v3035
        %3118 = vmatprep.subr.bf16.mxu0 %v3034
        %3119 = vmatpush2.bf16.msra.mxu0 %v3033
        %3120 = vmatprep.subr.bf16.mxu0 %v3032
        %3121 = vmatpush2.bf16.msra.mxu0 %v3031
        %3122 = vmatprep.mubr.bf16.mxu0 %v2901
        %3123 = vmatmul.mubr.bf16.gmra.mxu0 %v2898
        %v3124 = vpop.f32.mrf.mxu0
        %v3125 = vadd.f32 0.0, %v3124
        %v3126 = vpop.f32.mrf.mxu0
        %v3127 = vadd.f32 0.0, %v3126
        %v3128 = vpop.f32.mrf.mxu0
        %v3129 = vadd.f32 0.0, %v3128
        %v3130 = vpop.f32.mrf.mxu0
        %v3131 = vadd.f32 0.0, %v3130
        %3132 = vdwg.mxu0
        %3133 = vmatprep.subr.bf16.mxu0 0
        %3134 = vmatpush1.bf16.msra.mxu0 0
        %3135 = vmatprep.subr.bf16.mxu0 0
        %3136 = vmatpush1.bf16.msra.mxu0 0
        %3137 = vmatprep.subr.bf16.mxu0 0
        %3138 = vmatpush1.bf16.msra.mxu0 0
        %3139 = vmatprep.subr.bf16.mxu0 0
        %3140 = vmatpush1.bf16.msra.mxu0 0
        %3141 = vmatprep.subr.bf16.mxu0 0
        %3142 = vmatpush1.bf16.msra.mxu0 0
        %3143 = vmatprep.subr.bf16.mxu0 0
        %3144 = vmatpush1.bf16.msra.mxu0 0
        %3145 = vmatprep.subr.bf16.mxu0 %v3050
        %3146 = vmatpush1.bf16.msra.mxu0 %v3049
        %3147 = vmatprep.subr.bf16.mxu0 %v3048
        %3148 = vmatpush1.bf16.msra.mxu0 %v3047
        %3149 = vmatprep.subr.bf16.mxu0 0
        %3150 = vmatpush2.bf16.msra.mxu0 0
        %3151 = vmatprep.subr.bf16.mxu0 0
        %3152 = vmatpush2.bf16.msra.mxu0 0
        %3153 = vmatprep.subr.bf16.mxu0 0
        %3154 = vmatpush2.bf16.msra.mxu0 0
        %3155 = vmatprep.subr.bf16.mxu0 0
        %3156 = vmatpush2.bf16.msra.mxu0 0
        %3157 = vmatprep.subr.bf16.mxu0 0
        %3158 = vmatpush2.bf16.msra.mxu0 0
        %3159 = vmatprep.subr.bf16.mxu0 0
        %3160 = vmatpush2.bf16.msra.mxu0 0
        %3161 = vmatprep.subr.bf16.mxu0 0
        %3162 = vmatpush2.bf16.msra.mxu0 0
        %3163 = vmatprep.subr.bf16.mxu0 0
        %3164 = vmatpush2.bf16.msra.mxu0 0
        %3165 = vmatprep.mubr.bf16.mxu0 0
        %3166 = vmatmul.mubr.bf16.gmra.mxu0 %v3088
        %v3167 = vpop.f32.mrf.mxu0
        %v3168 = vadd.f32 %v3125, %v3167
        %v3169 = vpop.f32.mrf.mxu0
        %v3170 = vadd.f32 %v3127, %v3169
        %v3171 = vpop.f32.mrf.mxu0
        %v3172 = vadd.f32 %v3129, %v3171
        %v3173 = vpop.f32.mrf.mxu0
        %v3174 = vadd.f32 %v3131, %v3173
        %3175 = vdwg.mxu0
        %v3176 = vadd.f32 %v2837, %v3168
        %v3177 = vadd.f32 %v2838, %v3170
        %v3178 = vadd.f32 %v2839, %v3172
        %v3179 = vadd.f32 %v2840, %v3174
        %v3180 = vld [vmem:[%s12] sm:$0x3]
        %v3182 = vlaneseq
        %v3183 = vshrl.u32 %v3182, 7
        %v3184 = vsub.s32 0, %v3183
        %v3185 = vrot.slane %v3180, %v3184
        %v3186 = vlaneseq
        %v3187 = vshrl.u32 %v3186, 7
        %v3188 = vsub.s32 1, %v3187
        %v3189 = vrot.slane %v3180, %v3188
        %v3192 = vadd.f32 %v3176, %v3185
        %v3193 = vadd.f32 %v3177, %v3189
        %v3194 = vadd.f32 %v3178, %v3185
        %v3195 = vadd.f32 %v3179, %v3189
        %v3196 = vmax.f32 %v3192, 0.0
        %v3197 = vmax.f32 %v3193, 0.0
        %v3198 = vmax.f32 %v3194, 0.0
        %v3199 = vmax.f32 %v3195, 0.0
        %3200 = vst [vmem:[%s629] sm:$0xff] %v3196
        %3201 = vst [vmem:[%s629 + $0x8] sm:$0xff] %v3197
        %3202 = vst [vmem:[%s629 + $0x10] sm:$0xff] %v3198
        %3203 = vst [vmem:[%s629 + $0x18] sm:$0xff] %v3199
        %v3208 = vrot.slane %v3196, 7
        %v3209 = vrot.slane %v3197, 7
        %v3210 = vrot.slane %v3198, 7
        %v3211 = vsel %vm678, %v3208, %v3210
        %v3212 = vrot.slane %v3199, 7
        %v3213 = vsel %vm678, %v3209, %v3212
        %3214 = vrot.lane.b32.xlu0 %v3208, 16
        %v3215 = vpop.permute.xlu0 %3214
        %3216 = vrot.lane.b32.xlu0 %v3209, 16
        %v3217 = vpop.permute.xlu0 %3216
        %3218 = vrot.lane.b32.xlu0 %v3211, 16
        %v3219 = vpop.permute.xlu0 %3218
        %3220 = vrot.lane.b32.xlu0 %v3213, 16
        %v3221 = vpop.permute.xlu0 %3220
        %3222 = vrot.lane.b32.xlu0 %v3210, 16
        %v3223 = vpop.permute.xlu0 %3222
        %3224 = vrot.lane.b32.xlu0 %v3212, 16
        %v3225 = vpop.permute.xlu0 %3224
        %v3226 = vsel %vm697, %v3215, %v3217
        %v3227 = vsel %vm697, %v3219, %v3221
        %v3228 = vsel %vm697, %v3223, %v3225
        %3238 = vst.msk [vmem:[#allocation2] sm:$0xfe] %vm710, %v3215
        %3239 = vst [vmem:[#allocation2 + $0x8] sm:$0xfe] %v3226
        %3240 = vst.msk [vmem:[#allocation2 + $0x10] sm:$0xfe] %vm713, %v3217
        %3241 = vst.msk [vmem:[#allocation2 + $0x18] sm:$0xff] %vm715, %v3219
        %3242 = vst [vmem:[#allocation2 + $0x20] sm:$0xff] %v3227
        %3243 = vst.msk [vmem:[#allocation2 + $0x28] sm:$0xff] %vm697, %v3221
        %3244 = vst.msk [vmem:[#allocation2 + $0x30] sm:$0x1] %vm719, %v3223
        %3245 = vst [vmem:[#allocation2 + $0x38] sm:$0x1] %v3228
        %3246 = vst.msk [vmem:[#allocation2 + $0x40] sm:$0x1] %vm722, %v3225
        %v3247 = vld [vmem:[%s646] sm:$0xf]
        %v3248 = vld [vmem:[%s7] sm:$0xf]
        %v3249 = vld [vmem:[%s7 + $0x4] sm:$0xf]
        %v3250 = vld [vmem:[%s7 + $0x8] sm:$0xf]
        %v3251 = vld [vmem:[%s7 + $0xc] sm:$0xf]
        %v3252 = vld [vmem:[%s7 + $0x10] sm:$0xf]
        %v3253 = vld [vmem:[%s7 + $0x14] sm:$0xf]
        %v3254 = vld [vmem:[%s7 + $0x18] sm:$0xf]
        %v3255 = vld [vmem:[%s7 + $0x1c] sm:$0xf]
        %v3256 = vld [vmem:[%s7 + $0x20] sm:$0xf]
        %v3257 = vld [vmem:[%s7 + $0x24] sm:$0xf]
        %v3258 = vld [vmem:[%s7 + $0x28] sm:$0xf]
        %v3259 = vld [vmem:[%s7 + $0x2c] sm:$0xf]
        %v3260 = vld [vmem:[%s7 + $0x30] sm:$0xf]
        %v3261 = vld [vmem:[%s7 + $0x34] sm:$0xf]
        %v3262 = vld [vmem:[%s7 + $0x38] sm:$0xf]
        %v3263 = vld [vmem:[%s7 + $0x3c] sm:$0xf]
        %v3264 = vld [vmem:[%s7 + $0x40] sm:$0xf]
        %v3265 = vld [vmem:[%s7 + $0x44] sm:$0xf]
        %v3266 = vld [vmem:[%s7 + $0x48] sm:$0xf]
        %v3267 = vld [vmem:[%s7 + $0x4c] sm:$0xf]
        %v3268 = vld [vmem:[%s7 + $0x50] sm:$0xf]
        %v3269 = vld [vmem:[%s7 + $0x54] sm:$0xf]
        %v3270 = vld [vmem:[%s7 + $0x58] sm:$0xf]
        %v3271 = vld [vmem:[%s7 + $0x5c] sm:$0xf]
        %v3272 = vld [vmem:[%s7 + $0x60] sm:$0xf]
        %v3273 = vld [vmem:[%s7 + $0x64] sm:$0xf]
        %v3274 = vld [vmem:[%s7 + $0x68] sm:$0xf]
        %v3275 = vld [vmem:[%s7 + $0x6c] sm:$0xf]
        %v3276 = vld [vmem:[%s7 + $0x70] sm:$0xf]
        %v3277 = vld [vmem:[%s7 + $0x74] sm:$0xf]
        %v3278 = vld [vmem:[%s7 + $0x78] sm:$0xf]
        %v3279 = vld [vmem:[%s7 + $0x7c] sm:$0xf]
        %v3280 = vld [vmem:[%s8] sm:$0x1]
        %v3282 = vlaneseq
        %v3283 = vshrl.u32 %v3282, 7
        %v3284 = vsub.s32 0, %v3283
        %v3285 = vrot.slane %v3280, %v3284
        %v3289 = vunpack.c.l.s4 1983009808
        %v3290 = vunpack.c.0.s8 %v3289
        %v3291 = vlaneseq
        %v3292 = vshrl.u32 %v3291, 7
        %v3293 = vsub.s32 %v3290, %v3292
        %v3294 = vrot.slane %v3247, %v3293
        %v3295 = vcombine.high %v3294, %v3294
        %v3330 = vunpack.c.l.b16 %v3248
        %v3331 = vunpack.c.l.b16 %v3249
        %v3332 = vunpack.c.l.b16 %v3250
        %v3333 = vunpack.c.l.b16 %v3251
        %v3334 = vunpack.c.l.b16 %v3252
        %v3335 = vunpack.c.l.b16 %v3253
        %v3336 = vunpack.c.l.b16 %v3254
        %v3337 = vunpack.c.l.b16 %v3255
        %v3338 = vunpack.c.l.b16 %v3256
        %v3339 = vunpack.c.l.b16 %v3257
        %v3340 = vunpack.c.l.b16 %v3258
        %v3341 = vunpack.c.l.b16 %v3259
        %v3342 = vunpack.c.l.b16 %v3260
        %v3343 = vunpack.c.l.b16 %v3261
        %v3344 = vunpack.c.l.b16 %v3262
        %v3345 = vunpack.c.l.b16 %v3263
        %v3346 = vunpack.c.l.b16 %v3264
        %v3347 = vunpack.c.l.b16 %v3265
        %v3348 = vunpack.c.l.b16 %v3266
        %v3349 = vunpack.c.l.b16 %v3267
        %v3350 = vunpack.c.l.b16 %v3268
        %v3351 = vunpack.c.l.b16 %v3269
        %v3352 = vunpack.c.l.b16 %v3270
        %v3353 = vunpack.c.l.b16 %v3271
        %v3354 = vunpack.c.l.b16 %v3272
        %v3355 = vunpack.c.l.b16 %v3273
        %v3356 = vunpack.c.l.b16 %v3274
        %v3357 = vunpack.c.l.b16 %v3275
        %v3358 = vunpack.c.l.b16 %v3276
        %v3359 = vunpack.c.l.b16 %v3277
        %v3360 = vunpack.c.l.b16 %v3278
        %v3361 = vunpack.c.l.b16 %v3279
        %v3362 = vpack.c.b16 %v3331, %v3330
        %v3363 = vpack.c.b16 %v3333, %v3332
        %v3364 = vpack.c.b16 %v3335, %v3334
        %v3365 = vpack.c.b16 %v3337, %v3336
        %v3366 = vpack.c.b16 %v3339, %v3338
        %v3367 = vpack.c.b16 %v3341, %v3340
        %v3368 = vpack.c.b16 %v3343, %v3342
        %v3369 = vpack.c.b16 %v3345, %v3344
        %v3370 = vpack.c.b16 %v3347, %v3346
        %v3371 = vpack.c.b16 %v3349, %v3348
        %v3372 = vpack.c.b16 %v3351, %v3350
        %v3373 = vpack.c.b16 %v3353, %v3352
        %v3374 = vpack.c.b16 %v3355, %v3354
        %v3375 = vpack.c.b16 %v3357, %v3356
        %v3376 = vpack.c.b16 %v3359, %v3358
        %v3377 = vpack.c.b16 %v3361, %v3360
        %3394 = vmatprep.subr.bf16.mxu0 0
        %3395 = vmatpush1.bf16.msra.mxu0 %v3369
        %3396 = vmatprep.subr.bf16.mxu0 0
        %3397 = vmatpush1.bf16.msra.mxu0 %v3368
        %3398 = vmatprep.subr.bf16.mxu0 0
        %3399 = vmatpush1.bf16.msra.mxu0 %v3367
        %3400 = vmatprep.subr.bf16.mxu0 0
        %3401 = vmatpush1.bf16.msra.mxu0 %v3366
        %3402 = vmatprep.subr.bf16.mxu0 0
        %3403 = vmatpush1.bf16.msra.mxu0 %v3365
        %3404 = vmatprep.subr.bf16.mxu0 0
        %3405 = vmatpush1.bf16.msra.mxu0 %v3364
        %3406 = vmatprep.subr.bf16.mxu0 0
        %3407 = vmatpush1.bf16.msra.mxu0 %v3363
        %3408 = vmatprep.subr.bf16.mxu0 0
        %3409 = vmatpush1.bf16.msra.mxu0 %v3362
        %3410 = vmatprep.subr.bf16.mxu0 0
        %3411 = vmatpush2.bf16.msra.mxu0 %v3377
        %3412 = vmatprep.subr.bf16.mxu0 0
        %3413 = vmatpush2.bf16.msra.mxu0 %v3376
        %3414 = vmatprep.subr.bf16.mxu0 0
        %3415 = vmatpush2.bf16.msra.mxu0 %v3375
        %3416 = vmatprep.subr.bf16.mxu0 0
        %3417 = vmatpush2.bf16.msra.mxu0 %v3374
        %3418 = vmatprep.subr.bf16.mxu0 0
        %3419 = vmatpush2.bf16.msra.mxu0 %v3373
        %3420 = vmatprep.subr.bf16.mxu0 0
        %3421 = vmatpush2.bf16.msra.mxu0 %v3372
        %3422 = vmatprep.subr.bf16.mxu0 0
        %3423 = vmatpush2.bf16.msra.mxu0 %v3371
        %3424 = vmatprep.subr.bf16.mxu0 0
        %3425 = vmatpush2.bf16.msra.mxu0 %v3370
        %3426 = vmatprep.mubr.bf16.mxu0 %v3295
        %3427 = vmatmul.mubr.bf16.gmra.mxu0 %v3294
        %v3428 = vpop.f32.mrf.mxu0
        %v3429 = vadd.f32 %v3285, %v3428
        %v3430 = vpop.f32.mrf.mxu0
        %v3431 = vpop.f32.mrf.mxu0
        %v3432 = vpop.f32.mrf.mxu0
        %3433 = vdwg.mxu0
        %v3434 = vmax.f32 %v3429, 0.0
        %v3435 = vld [vmem:[%s9] sm:$0xf]
        %v3436 = vld [vmem:[%s9 + $0x4] sm:$0xf]
        %v3437 = vpack.c.bf16 %v3434, %v3434
        %v3440 = vunpack.c.l.b16 %v3435
        %v3441 = vunpack.c.l.b16 %v3436
        %v3442 = vpack.c.b16 %v3441, %v3440
        %vm3443 = vcmask 31744
        %v3445 = vsel %vm3443, %v3442, 0
        %vm3447 = vcmask 1041408
        %v3449 = vsel %vm3447, %v3437, 0
        %3451 = vmatprep.subr.bf16.mxu0 0
        %3452 = vmatpush1.bf16.msra.mxu0 0
        %3453 = vmatprep.subr.bf16.mxu0 0
        %3454 = vmatpush1.bf16.msra.mxu0 0
        %3455 = vmatprep.subr.bf16.mxu0 0
        %3456 = vmatpush1.bf16.msra.mxu0 0
        %3457 = vmatprep.subr.bf16.mxu0 0
        %3458 = vmatpush1.bf16.msra.mxu0 0
        %3459 = vmatprep.subr.bf16.mxu0 0
        %3460 = vmatpush1.bf16.msra.mxu0 0
        %3461 = vmatprep.subr.bf16.mxu0 0
        %3462 = vmatpush1.bf16.msra.mxu0 0
        %3463 = vmatprep.subr.bf16.mxu0 0
        %3464 = vmatpush1.bf16.msra.mxu0 0
        %3465 = vmatprep.subr.bf16.mxu0 0
        %3466 = vmatpush1.bf16.msra.mxu0 %v3449
        %3467 = vmatprep.subr.bf16.mxu0 0
        %3468 = vmatpush2.bf16.msra.mxu0 0
        %3469 = vmatprep.subr.bf16.mxu0 0
        %3470 = vmatpush2.bf16.msra.mxu0 0
        %3471 = vmatprep.subr.bf16.mxu0 0
        %3472 = vmatpush2.bf16.msra.mxu0 0
        %3473 = vmatprep.subr.bf16.mxu0 0
        %3474 = vmatpush2.bf16.msra.mxu0 0
        %3475 = vmatprep.subr.bf16.mxu0 0
        %3476 = vmatpush2.bf16.msra.mxu0 0
        %3477 = vmatprep.subr.bf16.mxu0 0
        %3478 = vmatpush2.bf16.msra.mxu0 0
        %3479 = vmatprep.subr.bf16.mxu0 0
        %3480 = vmatpush2.bf16.msra.mxu0 0
        %3481 = vmatprep.subr.bf16.mxu0 0
        %3482 = vmatpush2.bf16.msra.mxu0 0
        %3483 = vmatprep.mubr.bf16.mxu0 0
        %3484 = vmatmul.mubr.bf16.gmra.mxu0 %v3445
        %v3485 = vpop.f32.mrf.mxu0
        %v3486 = vadd.f32 0.0, %v3485
        %v3487 = vpop.f32.mrf.mxu0
        %v3488 = vpop.f32.mrf.mxu0
        %v3489 = vadd.f32 0.0, %v3488
        %v3490 = vpop.f32.mrf.mxu0
        %3491 = vdwg.mxu0
        %v3492 = vpack.c.bf16 %v3489, %v3486
        %v3493 = vld [vmem:[%s10] sm:$0xff]
        %v3494 = vld [vmem:[%s10 + $0x8] sm:$0xff]
        %v3495 = vld [vmem:[%s10 + $0x10] sm:$0xff]
        %v3496 = vld [vmem:[%s10 + $0x18] sm:$0xff]
        %v3497 = vld [vmem:[%s10 + $0x20] sm:$0xff]
        %v3498 = vld [vmem:[%s10 + $0x28] sm:$0xff]
        %v3499 = vld [vmem:[%s10 + $0x30] sm:$0xff]
        %v3500 = vld [vmem:[%s10 + $0x38] sm:$0xff]
        %v3509 = vunpack.c.l.b16 %v3493
        %v3510 = vunpack.c.h.b16 %v3493
        %v3511 = vunpack.c.l.b16 %v3494
        %v3512 = vunpack.c.h.b16 %v3494
        %v3513 = vunpack.c.l.b16 %v3495
        %v3514 = vunpack.c.h.b16 %v3495
        %v3515 = vunpack.c.l.b16 %v3496
        %v3516 = vunpack.c.h.b16 %v3496
        %v3517 = vunpack.c.l.b16 %v3497
        %v3518 = vunpack.c.h.b16 %v3497
        %v3519 = vunpack.c.l.b16 %v3498
        %v3520 = vunpack.c.h.b16 %v3498
        %v3521 = vunpack.c.l.b16 %v3499
        %v3522 = vunpack.c.h.b16 %v3499
        %v3523 = vunpack.c.l.b16 %v3500
        %v3524 = vunpack.c.h.b16 %v3500
        %v3525 = vpack.c.b16 %v3511, %v3509
        %v3526 = vpack.c.b16 %v3512, %v3510
        %v3527 = vpack.c.b16 %v3515, %v3513
        %v3528 = vpack.c.b16 %v3516, %v3514
        %v3529 = vpack.c.b16 %v3519, %v3517
        %v3530 = vpack.c.b16 %v3520, %v3518
        %v3531 = vpack.c.b16 %v3523, %v3521
        %v3532 = vpack.c.b16 %v3524, %v3522
        %vm3541 = vcmask 523264
        %v3543 = vsel %vm3541, %v3492, 0
        %3545 = vmatprep.subr.bf16.mxu0 0
        %3546 = vmatpush1.bf16.msra.mxu0 0
        %3547 = vmatprep.subr.bf16.mxu0 0
        %3548 = vmatpush1.bf16.msra.mxu0 0
        %3549 = vmatprep.subr.bf16.mxu0 0
        %3550 = vmatpush1.bf16.msra.mxu0 0
        %3551 = vmatprep.subr.bf16.mxu0 0
        %3552 = vmatpush1.bf16.msra.mxu0 0
        %3553 = vmatprep.subr.bf16.mxu0 %v3532
        %3554 = vmatpush1.bf16.msra.mxu0 %v3531
        %3555 = vmatprep.subr.bf16.mxu0 %v3530
        %3556 = vmatpush1.bf16.msra.mxu0 %v3529
        %3557 = vmatprep.subr.bf16.mxu0 %v3528
        %3558 = vmatpush1.bf16.msra.mxu0 %v3527
        %3559 = vmatprep.subr.bf16.mxu0 %v3526
        %3560 = vmatpush1.bf16.msra.mxu0 %v3525
        %3561 = vmatprep.subr.bf16.mxu0 0
        %3562 = vmatpush2.bf16.msra.mxu0 0
        %3563 = vmatprep.subr.bf16.mxu0 0
        %3564 = vmatpush2.bf16.msra.mxu0 0
        %3565 = vmatprep.subr.bf16.mxu0 0
        %3566 = vmatpush2.bf16.msra.mxu0 0
        %3567 = vmatprep.subr.bf16.mxu0 0
        %3568 = vmatpush2.bf16.msra.mxu0 0
        %3569 = vmatprep.subr.bf16.mxu0 0
        %3570 = vmatpush2.bf16.msra.mxu0 0
        %3571 = vmatprep.subr.bf16.mxu0 0
        %3572 = vmatpush2.bf16.msra.mxu0 0
        %3573 = vmatprep.subr.bf16.mxu0 0
        %3574 = vmatpush2.bf16.msra.mxu0 0
        %3575 = vmatprep.subr.bf16.mxu0 0
        %3576 = vmatpush2.bf16.msra.mxu0 0
        %3577 = vmatprep.mubr.bf16.mxu0 0
        %3578 = vmatmul.mubr.bf16.gmra.mxu0 %v3543
        %v3579 = vpop.f32.mrf.mxu0
        %v3580 = vadd.f32 0.0, %v3579
        %v3581 = vpop.f32.mrf.mxu0
        %v3582 = vadd.f32 0.0, %v3581
        %v3583 = vpop.f32.mrf.mxu0
        %v3584 = vadd.f32 0.0, %v3583
        %v3585 = vpop.f32.mrf.mxu0
        %v3586 = vadd.f32 0.0, %v3585
        %3587 = vdwg.mxu0
        %v3592 = vrot.slane %v3580, 7
        %v3593 = vrot.slane %v3582, 7
        %v3594 = vrot.slane %v3584, 7
        %v3595 = vsel %vm678, %v3592, %v3594
        %v3596 = vrot.slane %v3586, 7
        %v3597 = vsel %vm678, %v3593, %v3596
        %3598 = vrot.lane.b32.xlu0 %v3592, 16
        %v3599 = vpop.permute.xlu0 %3598
        %3600 = vrot.lane.b32.xlu0 %v3593, 16
        %v3601 = vpop.permute.xlu0 %3600
        %3602 = vrot.lane.b32.xlu0 %v3595, 16
        %v3603 = vpop.permute.xlu0 %3602
        %3604 = vrot.lane.b32.xlu0 %v3597, 16
        %v3605 = vpop.permute.xlu0 %3604
        %3606 = vrot.lane.b32.xlu0 %v3594, 16
        %v3607 = vpop.permute.xlu0 %3606
        %3608 = vrot.lane.b32.xlu0 %v3596, 16
        %v3609 = vpop.permute.xlu0 %3608
        %v3610 = vsel %vm697, %v3599, %v3601
        %v3611 = vsel %vm697, %v3603, %v3605
        %v3612 = vsel %vm697, %v3607, %v3609
        %3622 = vst.msk [vmem:[#allocation3] sm:$0xfe] %vm710, %v3599
        %3623 = vst [vmem:[#allocation3 + $0x8] sm:$0xfe] %v3610
        %3624 = vst.msk [vmem:[#allocation3 + $0x10] sm:$0xfe] %vm713, %v3601
        %3625 = vst.msk [vmem:[#allocation3 + $0x18] sm:$0xff] %vm715, %v3603
        %3626 = vst [vmem:[#allocation3 + $0x20] sm:$0xff] %v3611
        %3627 = vst.msk [vmem:[#allocation3 + $0x28] sm:$0xff] %vm697, %v3605
        %3628 = vst.msk [vmem:[#allocation3 + $0x30] sm:$0x1] %vm719, %v3607
        %3629 = vst [vmem:[#allocation3 + $0x38] sm:$0x1] %v3612
        %3630 = vst.msk [vmem:[#allocation3 + $0x40] sm:$0x1] %vm722, %v3609
        %v3631 = vld [vmem:[#allocation2] sm:$0xff]
        %v3632 = vld [vmem:[#allocation2 + $0x8] sm:$0xff]
        %v3633 = vld [vmem:[#allocation2 + $0x10] sm:$0xff]
        %v3634 = vld [vmem:[#allocation2 + $0x18] sm:$0xff]
        %v3635 = vld [vmem:[#allocation2 + $0x20] sm:$0xff]
        %v3636 = vld [vmem:[#allocation2 + $0x28] sm:$0xff]
        %v3637 = vpack.c.bf16 %v3634, %v3631
        %v3638 = vpack.c.bf16 %v3635, %v3632
        %v3639 = vpack.c.bf16 %v3636, %v3633
        %v3640 = vld [vmem:[#allocation12] sm:$0xff]
        %v3641 = vld [vmem:[#allocation12 + $0x8] sm:$0xff]
        %v3642 = vld [vmem:[#allocation12 + $0x10] sm:$0xff]
        %v3643 = vld [vmem:[#allocation12 + $0x18] sm:$0xff]
        %v3644 = vld [vmem:[#allocation12 + $0x20] sm:$0xff]
        %v3645 = vld [vmem:[#allocation12 + $0x28] sm:$0xff]
        %v3646 = vld [vmem:[#allocation12 + $0x30] sm:$0xff]
        %v3647 = vld [vmem:[#allocation12 + $0x38] sm:$0xff]
        %v3648 = vld [vmem:[#allocation12 + $0x40] sm:$0xff]
        %v3649 = vld [vmem:[#allocation12 + $0x48] sm:$0xff]
        %v3650 = vld [vmem:[#allocation12 + $0x50] sm:$0xff]
        %v3651 = vld [vmem:[#allocation12 + $0x58] sm:$0xff]
        %v3652 = vld [vmem:[#allocation12 + $0x60] sm:$0xff]
        %v3653 = vld [vmem:[#allocation12 + $0x68] sm:$0xff]
        %v3654 = vld [vmem:[#allocation12 + $0x70] sm:$0xff]
        %v3655 = vld [vmem:[#allocation12 + $0x78] sm:$0xff]
        %v3656 = vld [vmem:[#allocation12 + $0x80] sm:$0xff]
        %v3657 = vld [vmem:[#allocation12 + $0x88] sm:$0xff]
        %v3658 = vld [vmem:[#allocation12 + $0x90] sm:$0xff]
        %v3659 = vld [vmem:[#allocation12 + $0x98] sm:$0xff]
        %v3660 = vld [vmem:[#allocation12 + $0xa0] sm:$0xff]
        %v3661 = vld [vmem:[#allocation12 + $0xa8] sm:$0xff]
        %v3662 = vld [vmem:[#allocation12 + $0xb0] sm:$0xff]
        %v3663 = vld [vmem:[#allocation12 + $0xb8] sm:$0xff]
        %v3664 = vld [vmem:[#allocation12 + $0xc0] sm:$0xff]
        %v3665 = vld [vmem:[#allocation12 + $0xc8] sm:$0xff]
        %v3666 = vld [vmem:[#allocation12 + $0xd0] sm:$0xff]
        %v3667 = vld [vmem:[#allocation12 + $0xd8] sm:$0xff]
        %v3668 = vld [vmem:[#allocation12 + $0xe0] sm:$0xff]
        %v3669 = vld [vmem:[#allocation12 + $0xe8] sm:$0xff]
        %v3670 = vld [vmem:[#allocation12 + $0xf0] sm:$0xff]
        %v3671 = vld [vmem:[#allocation12 + $0xf8] sm:$0xff]
        %v3672 = vld [vmem:[#allocation12 + $0x100] sm:$0xff]
        %v3673 = vld [vmem:[#allocation12 + $0x108] sm:$0xff]
        %v3674 = vld [vmem:[#allocation12 + $0x110] sm:$0xff]
        %v3675 = vld [vmem:[#allocation12 + $0x118] sm:$0xff]
        %v3676 = vld [vmem:[#allocation2] sm:$0xfe]
        %v3677 = vld [vmem:[#allocation2 + $0x8] sm:$0xfe]
        %v3678 = vld [vmem:[#allocation2 + $0x10] sm:$0xfe]
        %v3679 = vld [vmem:[#allocation2 + $0x30] sm:$0x1]
        %v3680 = vld [vmem:[#allocation2 + $0x38] sm:$0x1]
        %v3681 = vld [vmem:[#allocation2 + $0x40] sm:$0x1]
        %v3682 = vpack.c.bf16 %v3634, %v3676
        %v3683 = vpack.c.bf16 %v3635, %v3677
        %v3684 = vpack.c.bf16 %v3636, %v3678
        %v3685 = vpack.c.bf16 %v3679, %v3679
        %v3686 = vpack.c.bf16 %v3680, %v3680
        %v3687 = vpack.c.bf16 %v3681, %v3681
        %s3688 = scalar_lea.vmem [#allocation12], 288
        %v3689 = vld [vmem:[%s3688] sm:$0xff]
        %v3690 = vld [vmem:[%s3688 + $0x8] sm:$0xff]
        %v3691 = vld [vmem:[%s3688 + $0x10] sm:$0xff]
        %v3692 = vld [vmem:[%s3688 + $0x18] sm:$0xff]
        %v3693 = vld [vmem:[%s3688 + $0x20] sm:$0xff]
        %v3694 = vld [vmem:[%s3688 + $0x28] sm:$0xff]
        %v3695 = vld [vmem:[%s3688 + $0x30] sm:$0xff]
        %v3696 = vld [vmem:[%s3688 + $0x38] sm:$0xff]
        %v3697 = vld [vmem:[%s3688 + $0x40] sm:$0xff]
        %v3698 = vld [vmem:[%s3688 + $0x48] sm:$0xff]
        %v3699 = vld [vmem:[%s3688 + $0x50] sm:$0xff]
        %v3700 = vld [vmem:[%s3688 + $0x58] sm:$0xff]
        %v3701 = vld [vmem:[%s3688 + $0x60] sm:$0xff]
        %v3702 = vld [vmem:[%s3688 + $0x68] sm:$0xff]
        %v3703 = vld [vmem:[%s3688 + $0x70] sm:$0xff]
        %v3704 = vld [vmem:[%s3688 + $0x78] sm:$0xff]
        %v3705 = vld [vmem:[%s3688 + $0x80] sm:$0xff]
        %v3706 = vld [vmem:[%s3688 + $0x88] sm:$0xff]
        %v3707 = vld [vmem:[%s3688 + $0x90] sm:$0xff]
        %v3708 = vld [vmem:[%s3688 + $0x98] sm:$0xff]
        %v3709 = vld [vmem:[%s3688 + $0xa0] sm:$0xff]
        %v3710 = vld [vmem:[%s3688 + $0xa8] sm:$0xff]
        %v3711 = vld [vmem:[%s3688 + $0xb0] sm:$0xff]
        %v3712 = vld [vmem:[%s3688 + $0xb8] sm:$0xff]
        %v3713 = vld [vmem:[%s3688 + $0xc0] sm:$0xff]
        %v3714 = vld [vmem:[%s3688 + $0xc8] sm:$0xff]
        %v3715 = vld [vmem:[%s3688 + $0xd0] sm:$0xff]
        %v3716 = vld [vmem:[%s3688 + $0xd8] sm:$0xff]
        %v3717 = vld [vmem:[%s3688 + $0xe0] sm:$0xff]
        %v3718 = vld [vmem:[%s3688 + $0xe8] sm:$0xff]
        %v3719 = vld [vmem:[%s3688 + $0xf0] sm:$0xff]
        %v3720 = vld [vmem:[%s3688 + $0xf8] sm:$0xff]
        %v3721 = vld [vmem:[%s3688 + $0x100] sm:$0xff]
        %v3722 = vld [vmem:[%s3688 + $0x108] sm:$0xff]
        %v3723 = vld [vmem:[%s3688 + $0x110] sm:$0xff]
        %v3724 = vld [vmem:[%s3688 + $0x118] sm:$0xff]
        %v3726 = vshrl.u32 %v3682, 16
        %v3728 = vshll.u32 %v3682, 16
        %v3730 = vrot.slane %v3728, 1
        %v3731 = vor.u32 %v3726, %v3730
        %v3733 = vshll.u32 %v3685, 16
        %v3735 = vrot.slane %v3733, 1
        %v3736 = vsel %vm1242, %v3731, %v3735
        %v3738 = vshrl.u32 %v3683, 16
        %v3740 = vshll.u32 %v3683, 16
        %v3742 = vrot.slane %v3740, 1
        %v3743 = vor.u32 %v3738, %v3742
        %v3745 = vshll.u32 %v3686, 16
        %v3747 = vrot.slane %v3745, 1
        %v3748 = vsel %vm1242, %v3743, %v3747
        %v3750 = vshrl.u32 %v3684, 16
        %v3752 = vshll.u32 %v3684, 16
        %v3754 = vrot.slane %v3752, 1
        %v3755 = vor.u32 %v3750, %v3754
        %v3757 = vshll.u32 %v3687, 16
        %v3759 = vrot.slane %v3757, 1
        %v3760 = vsel %vm1242, %v3755, %v3759
        %v3799 = vunpack.c.l.b16 %v3689
        %v3800 = vunpack.c.h.b16 %v3689
        %v3801 = vunpack.c.l.b16 %v3690
        %v3802 = vunpack.c.h.b16 %v3690
        %v3803 = vunpack.c.l.b16 %v3691
        %v3804 = vunpack.c.h.b16 %v3691
        %v3805 = vunpack.c.l.b16 %v3692
        %v3806 = vunpack.c.h.b16 %v3692
        %v3807 = vunpack.c.l.b16 %v3693
        %v3808 = vunpack.c.h.b16 %v3693
        %v3809 = vunpack.c.l.b16 %v3694
        %v3810 = vunpack.c.h.b16 %v3694
        %v3811 = vunpack.c.l.b16 %v3695
        %v3812 = vunpack.c.h.b16 %v3695
        %v3813 = vunpack.c.l.b16 %v3696
        %v3814 = vunpack.c.h.b16 %v3696
        %v3815 = vunpack.c.l.b16 %v3697
        %v3816 = vunpack.c.h.b16 %v3697
        %v3817 = vunpack.c.l.b16 %v3698
        %v3818 = vunpack.c.h.b16 %v3698
        %v3819 = vunpack.c.l.b16 %v3699
        %v3820 = vunpack.c.h.b16 %v3699
        %v3821 = vunpack.c.l.b16 %v3700
        %v3822 = vunpack.c.h.b16 %v3700
        %v3823 = vunpack.c.l.b16 %v3701
        %v3824 = vunpack.c.h.b16 %v3701
        %v3825 = vunpack.c.l.b16 %v3702
        %v3826 = vunpack.c.h.b16 %v3702
        %v3827 = vunpack.c.l.b16 %v3703
        %v3828 = vunpack.c.h.b16 %v3703
        %v3829 = vunpack.c.l.b16 %v3704
        %v3830 = vunpack.c.h.b16 %v3704
        %v3831 = vunpack.c.l.b16 %v3705
        %v3832 = vunpack.c.h.b16 %v3705
        %v3833 = vunpack.c.l.b16 %v3706
        %v3834 = vunpack.c.h.b16 %v3706
        %v3835 = vunpack.c.l.b16 %v3707
        %v3836 = vunpack.c.h.b16 %v3707
        %v3837 = vunpack.c.l.b16 %v3708
        %v3838 = vunpack.c.h.b16 %v3708
        %v3839 = vunpack.c.l.b16 %v3709
        %v3840 = vunpack.c.h.b16 %v3709
        %v3841 = vunpack.c.l.b16 %v3710
        %v3842 = vunpack.c.h.b16 %v3710
        %v3843 = vunpack.c.l.b16 %v3711
        %v3844 = vunpack.c.h.b16 %v3711
        %v3845 = vunpack.c.l.b16 %v3712
        %v3846 = vunpack.c.h.b16 %v3712
        %v3847 = vunpack.c.l.b16 %v3713
        %v3848 = vunpack.c.h.b16 %v3713
        %v3849 = vunpack.c.l.b16 %v3714
        %v3850 = vunpack.c.h.b16 %v3714
        %v3851 = vunpack.c.l.b16 %v3715
        %v3852 = vunpack.c.h.b16 %v3715
        %v3853 = vunpack.c.l.b16 %v3716
        %v3854 = vunpack.c.h.b16 %v3716
        %v3855 = vunpack.c.l.b16 %v3717
        %v3856 = vunpack.c.h.b16 %v3717
        %v3857 = vunpack.c.l.b16 %v3718
        %v3858 = vunpack.c.h.b16 %v3718
        %v3859 = vunpack.c.l.b16 %v3719
        %v3860 = vunpack.c.h.b16 %v3719
        %v3861 = vunpack.c.l.b16 %v3720
        %v3862 = vunpack.c.h.b16 %v3720
        %v3863 = vunpack.c.l.b16 %v3721
        %v3864 = vunpack.c.h.b16 %v3721
        %v3865 = vunpack.c.l.b16 %v3722
        %v3866 = vunpack.c.h.b16 %v3722
        %v3867 = vunpack.c.l.b16 %v3723
        %v3868 = vunpack.c.h.b16 %v3723
        %v3869 = vunpack.c.l.b16 %v3724
        %v3870 = vunpack.c.h.b16 %v3724
        %v3871 = vpack.c.b16 %v3801, %v3799
        %v3872 = vpack.c.b16 %v3802, %v3800
        %v3873 = vpack.c.b16 %v3805, %v3803
        %v3874 = vpack.c.b16 %v3806, %v3804
        %v3875 = vpack.c.b16 %v3809, %v3807
        %v3876 = vpack.c.b16 %v3810, %v3808
        %v3877 = vpack.c.b16 %v3813, %v3811
        %v3878 = vpack.c.b16 %v3814, %v3812
        %v3879 = vpack.c.b16 %v3817, %v3815
        %v3880 = vpack.c.b16 %v3818, %v3816
        %v3881 = vpack.c.b16 %v3821, %v3819
        %v3882 = vpack.c.b16 %v3822, %v3820
        %v3883 = vpack.c.b16 %v3825, %v3823
        %v3884 = vpack.c.b16 %v3826, %v3824
        %v3885 = vpack.c.b16 %v3829, %v3827
        %v3886 = vpack.c.b16 %v3830, %v3828
        %v3887 = vpack.c.b16 %v3833, %v3831
        %v3888 = vpack.c.b16 %v3834, %v3832
        %v3889 = vpack.c.b16 %v3837, %v3835
        %v3890 = vpack.c.b16 %v3838, %v3836
        %v3891 = vpack.c.b16 %v3841, %v3839
        %v3892 = vpack.c.b16 %v3842, %v3840
        %v3893 = vpack.c.b16 %v3845, %v3843
        %v3894 = vpack.c.b16 %v3846, %v3844
        %v3895 = vpack.c.b16 %v3849, %v3847
        %v3896 = vpack.c.b16 %v3850, %v3848
        %v3897 = vpack.c.b16 %v3853, %v3851
        %v3898 = vpack.c.b16 %v3854, %v3852
        %v3899 = vpack.c.b16 %v3857, %v3855
        %v3900 = vpack.c.b16 %v3858, %v3856
        %v3901 = vpack.c.b16 %v3861, %v3859
        %v3902 = vpack.c.b16 %v3862, %v3860
        %v3903 = vpack.c.b16 %v3865, %v3863
        %v3904 = vpack.c.b16 %v3866, %v3864
        %v3905 = vpack.c.b16 %v3869, %v3867
        %v3906 = vpack.c.b16 %v3870, %v3868
        %v3944 = vsel %vm650, %v3760, 0
        %3946 = vmatprep.subr.bf16.mxu0 %v3886
        %3947 = vmatpush1.bf16.msra.mxu0 %v3885
        %3948 = vmatprep.subr.bf16.mxu0 %v3884
        %3949 = vmatpush1.bf16.msra.mxu0 %v3883
        %3950 = vmatprep.subr.bf16.mxu0 %v3882
        %3951 = vmatpush1.bf16.msra.mxu0 %v3881
        %3952 = vmatprep.subr.bf16.mxu0 %v3880
        %3953 = vmatpush1.bf16.msra.mxu0 %v3879
        %3954 = vmatprep.subr.bf16.mxu0 %v3878
        %3955 = vmatpush1.bf16.msra.mxu0 %v3877
        %3956 = vmatprep.subr.bf16.mxu0 %v3876
        %3957 = vmatpush1.bf16.msra.mxu0 %v3875
        %3958 = vmatprep.subr.bf16.mxu0 %v3874
        %3959 = vmatpush1.bf16.msra.mxu0 %v3873
        %3960 = vmatprep.subr.bf16.mxu0 %v3872
        %3961 = vmatpush1.bf16.msra.mxu0 %v3871
        %3962 = vmatprep.subr.bf16.mxu0 %v3902
        %3963 = vmatpush2.bf16.msra.mxu0 %v3901
        %3964 = vmatprep.subr.bf16.mxu0 %v3900
        %3965 = vmatpush2.bf16.msra.mxu0 %v3899
        %3966 = vmatprep.subr.bf16.mxu0 %v3898
        %3967 = vmatpush2.bf16.msra.mxu0 %v3897
        %3968 = vmatprep.subr.bf16.mxu0 %v3896
        %3969 = vmatpush2.bf16.msra.mxu0 %v3895
        %3970 = vmatprep.subr.bf16.mxu0 %v3894
        %3971 = vmatpush2.bf16.msra.mxu0 %v3893
        %3972 = vmatprep.subr.bf16.mxu0 %v3892
        %3973 = vmatpush2.bf16.msra.mxu0 %v3891
        %3974 = vmatprep.subr.bf16.mxu0 %v3890
        %3975 = vmatpush2.bf16.msra.mxu0 %v3889
        %3976 = vmatprep.subr.bf16.mxu0 %v3888
        %3977 = vmatpush2.bf16.msra.mxu0 %v3887
        %3978 = vmatprep.mubr.bf16.mxu0 %v3748
        %3979 = vmatmul.mubr.bf16.gmra.mxu0 %v3736
        %v3980 = vpop.f32.mrf.mxu0
        %v3981 = vadd.f32 0.0, %v3980
        %v3982 = vpop.f32.mrf.mxu0
        %v3983 = vadd.f32 0.0, %v3982
        %v3984 = vpop.f32.mrf.mxu0
        %v3985 = vadd.f32 0.0, %v3984
        %v3986 = vpop.f32.mrf.mxu0
        %v3987 = vadd.f32 0.0, %v3986
        %3988 = vdwg.mxu0
        %3989 = vmatprep.subr.bf16.mxu0 0
        %3990 = vmatpush1.bf16.msra.mxu0 0
        %3991 = vmatprep.subr.bf16.mxu0 0
        %3992 = vmatpush1.bf16.msra.mxu0 0
        %3993 = vmatprep.subr.bf16.mxu0 0
        %3994 = vmatpush1.bf16.msra.mxu0 0
        %3995 = vmatprep.subr.bf16.mxu0 0
        %3996 = vmatpush1.bf16.msra.mxu0 0
        %3997 = vmatprep.subr.bf16.mxu0 0
        %3998 = vmatpush1.bf16.msra.mxu0 0
        %3999 = vmatprep.subr.bf16.mxu0 0
        %4000 = vmatpush1.bf16.msra.mxu0 0
        %4001 = vmatprep.subr.bf16.mxu0 %v3906
        %4002 = vmatpush1.bf16.msra.mxu0 %v3905
        %4003 = vmatprep.subr.bf16.mxu0 %v3904
        %4004 = vmatpush1.bf16.msra.mxu0 %v3903
        %4005 = vmatprep.subr.bf16.mxu0 0
        %4006 = vmatpush2.bf16.msra.mxu0 0
        %4007 = vmatprep.subr.bf16.mxu0 0
        %4008 = vmatpush2.bf16.msra.mxu0 0
        %4009 = vmatprep.subr.bf16.mxu0 0
        %4010 = vmatpush2.bf16.msra.mxu0 0
        %4011 = vmatprep.subr.bf16.mxu0 0
        %4012 = vmatpush2.bf16.msra.mxu0 0
        %4013 = vmatprep.subr.bf16.mxu0 0
        %4014 = vmatpush2.bf16.msra.mxu0 0
        %4015 = vmatprep.subr.bf16.mxu0 0
        %4016 = vmatpush2.bf16.msra.mxu0 0
        %4017 = vmatprep.subr.bf16.mxu0 0
        %4018 = vmatpush2.bf16.msra.mxu0 0
        %4019 = vmatprep.subr.bf16.mxu0 0
        %4020 = vmatpush2.bf16.msra.mxu0 0
        %4021 = vmatprep.mubr.bf16.mxu0 0
        %4022 = vmatmul.mubr.bf16.gmra.mxu0 %v3944
        %v4023 = vpop.f32.mrf.mxu0
        %v4024 = vadd.f32 %v3981, %v4023
        %v4025 = vpop.f32.mrf.mxu0
        %v4026 = vadd.f32 %v3983, %v4025
        %v4027 = vpop.f32.mrf.mxu0
        %v4028 = vadd.f32 %v3985, %v4027
        %v4029 = vpop.f32.mrf.mxu0
        %v4030 = vadd.f32 %v3987, %v4029
        %4031 = vdwg.mxu0
        %v4068 = vunpack.c.l.b16 %v3640
        %v4069 = vunpack.c.h.b16 %v3640
        %v4070 = vunpack.c.l.b16 %v3641
        %v4071 = vunpack.c.h.b16 %v3641
        %v4072 = vunpack.c.l.b16 %v3642
        %v4073 = vunpack.c.h.b16 %v3642
        %v4074 = vunpack.c.l.b16 %v3643
        %v4075 = vunpack.c.h.b16 %v3643
        %v4076 = vunpack.c.l.b16 %v3644
        %v4077 = vunpack.c.h.b16 %v3644
        %v4078 = vunpack.c.l.b16 %v3645
        %v4079 = vunpack.c.h.b16 %v3645
        %v4080 = vunpack.c.l.b16 %v3646
        %v4081 = vunpack.c.h.b16 %v3646
        %v4082 = vunpack.c.l.b16 %v3647
        %v4083 = vunpack.c.h.b16 %v3647
        %v4084 = vunpack.c.l.b16 %v3648
        %v4085 = vunpack.c.h.b16 %v3648
        %v4086 = vunpack.c.l.b16 %v3649
        %v4087 = vunpack.c.h.b16 %v3649
        %v4088 = vunpack.c.l.b16 %v3650
        %v4089 = vunpack.c.h.b16 %v3650
        %v4090 = vunpack.c.l.b16 %v3651
        %v4091 = vunpack.c.h.b16 %v3651
        %v4092 = vunpack.c.l.b16 %v3652
        %v4093 = vunpack.c.h.b16 %v3652
        %v4094 = vunpack.c.l.b16 %v3653
        %v4095 = vunpack.c.h.b16 %v3653
        %v4096 = vunpack.c.l.b16 %v3654
        %v4097 = vunpack.c.h.b16 %v3654
        %v4098 = vunpack.c.l.b16 %v3655
        %v4099 = vunpack.c.h.b16 %v3655
        %v4100 = vunpack.c.l.b16 %v3656
        %v4101 = vunpack.c.h.b16 %v3656
        %v4102 = vunpack.c.l.b16 %v3657
        %v4103 = vunpack.c.h.b16 %v3657
        %v4104 = vunpack.c.l.b16 %v3658
        %v4105 = vunpack.c.h.b16 %v3658
        %v4106 = vunpack.c.l.b16 %v3659
        %v4107 = vunpack.c.h.b16 %v3659
        %v4108 = vunpack.c.l.b16 %v3660
        %v4109 = vunpack.c.h.b16 %v3660
        %v4110 = vunpack.c.l.b16 %v3661
        %v4111 = vunpack.c.h.b16 %v3661
        %v4112 = vunpack.c.l.b16 %v3662
        %v4113 = vunpack.c.h.b16 %v3662
        %v4114 = vunpack.c.l.b16 %v3663
        %v4115 = vunpack.c.h.b16 %v3663
        %v4116 = vunpack.c.l.b16 %v3664
        %v4117 = vunpack.c.h.b16 %v3664
        %v4118 = vunpack.c.l.b16 %v3665
        %v4119 = vunpack.c.h.b16 %v3665
        %v4120 = vunpack.c.l.b16 %v3666
        %v4121 = vunpack.c.h.b16 %v3666
        %v4122 = vunpack.c.l.b16 %v3667
        %v4123 = vunpack.c.h.b16 %v3667
        %v4124 = vunpack.c.l.b16 %v3668
        %v4125 = vunpack.c.h.b16 %v3668
        %v4126 = vunpack.c.l.b16 %v3669
        %v4127 = vunpack.c.h.b16 %v3669
        %v4128 = vunpack.c.l.b16 %v3670
        %v4129 = vunpack.c.h.b16 %v3670
        %v4130 = vunpack.c.l.b16 %v3671
        %v4131 = vunpack.c.h.b16 %v3671
        %v4132 = vunpack.c.l.b16 %v3672
        %v4133 = vunpack.c.h.b16 %v3672
        %v4134 = vunpack.c.l.b16 %v3673
        %v4135 = vunpack.c.h.b16 %v3673
        %v4136 = vunpack.c.l.b16 %v3674
        %v4137 = vunpack.c.h.b16 %v3674
        %v4138 = vunpack.c.l.b16 %v3675
        %v4139 = vunpack.c.h.b16 %v3675
        %v4140 = vpack.c.b16 %v4070, %v4068
        %v4141 = vpack.c.b16 %v4071, %v4069
        %v4142 = vpack.c.b16 %v4074, %v4072
        %v4143 = vpack.c.b16 %v4075, %v4073
        %v4144 = vpack.c.b16 %v4078, %v4076
        %v4145 = vpack.c.b16 %v4079, %v4077
        %v4146 = vpack.c.b16 %v4082, %v4080
        %v4147 = vpack.c.b16 %v4083, %v4081
        %v4148 = vpack.c.b16 %v4086, %v4084
        %v4149 = vpack.c.b16 %v4087, %v4085
        %v4150 = vpack.c.b16 %v4090, %v4088
        %v4151 = vpack.c.b16 %v4091, %v4089
        %v4152 = vpack.c.b16 %v4094, %v4092
        %v4153 = vpack.c.b16 %v4095, %v4093
        %v4154 = vpack.c.b16 %v4098, %v4096
        %v4155 = vpack.c.b16 %v4099, %v4097
        %v4156 = vpack.c.b16 %v4102, %v4100
        %v4157 = vpack.c.b16 %v4103, %v4101
        %v4158 = vpack.c.b16 %v4106, %v4104
        %v4159 = vpack.c.b16 %v4107, %v4105
        %v4160 = vpack.c.b16 %v4110, %v4108
        %v4161 = vpack.c.b16 %v4111, %v4109
        %v4162 = vpack.c.b16 %v4114, %v4112
        %v4163 = vpack.c.b16 %v4115, %v4113
        %v4164 = vpack.c.b16 %v4118, %v4116
        %v4165 = vpack.c.b16 %v4119, %v4117
        %v4166 = vpack.c.b16 %v4122, %v4120
        %v4167 = vpack.c.b16 %v4123, %v4121
        %v4168 = vpack.c.b16 %v4126, %v4124
        %v4169 = vpack.c.b16 %v4127, %v4125
        %v4170 = vpack.c.b16 %v4130, %v4128
        %v4171 = vpack.c.b16 %v4131, %v4129
        %v4172 = vpack.c.b16 %v4134, %v4132
        %v4173 = vpack.c.b16 %v4135, %v4133
        %v4174 = vpack.c.b16 %v4138, %v4136
        %v4175 = vpack.c.b16 %v4139, %v4137
        %v4213 = vsel %vm650, %v3639, 0
        %4215 = vmatprep.subr.bf16.mxu0 %v4155
        %4216 = vmatpush1.bf16.msra.mxu0 %v4154
        %4217 = vmatprep.subr.bf16.mxu0 %v4153
        %4218 = vmatpush1.bf16.msra.mxu0 %v4152
        %4219 = vmatprep.subr.bf16.mxu0 %v4151
        %4220 = vmatpush1.bf16.msra.mxu0 %v4150
        %4221 = vmatprep.subr.bf16.mxu0 %v4149
        %4222 = vmatpush1.bf16.msra.mxu0 %v4148
        %4223 = vmatprep.subr.bf16.mxu0 %v4147
        %4224 = vmatpush1.bf16.msra.mxu0 %v4146
        %4225 = vmatprep.subr.bf16.mxu0 %v4145
        %4226 = vmatpush1.bf16.msra.mxu0 %v4144
        %4227 = vmatprep.subr.bf16.mxu0 %v4143
        %4228 = vmatpush1.bf16.msra.mxu0 %v4142
        %4229 = vmatprep.subr.bf16.mxu0 %v4141
        %4230 = vmatpush1.bf16.msra.mxu0 %v4140
        %4231 = vmatprep.subr.bf16.mxu0 %v4171
        %4232 = vmatpush2.bf16.msra.mxu0 %v4170
        %4233 = vmatprep.subr.bf16.mxu0 %v4169
        %4234 = vmatpush2.bf16.msra.mxu0 %v4168
        %4235 = vmatprep.subr.bf16.mxu0 %v4167
        %4236 = vmatpush2.bf16.msra.mxu0 %v4166
        %4237 = vmatprep.subr.bf16.mxu0 %v4165
        %4238 = vmatpush2.bf16.msra.mxu0 %v4164
        %4239 = vmatprep.subr.bf16.mxu0 %v4163
        %4240 = vmatpush2.bf16.msra.mxu0 %v4162
        %4241 = vmatprep.subr.bf16.mxu0 %v4161
        %4242 = vmatpush2.bf16.msra.mxu0 %v4160
        %4243 = vmatprep.subr.bf16.mxu0 %v4159
        %4244 = vmatpush2.bf16.msra.mxu0 %v4158
        %4245 = vmatprep.subr.bf16.mxu0 %v4157
        %4246 = vmatpush2.bf16.msra.mxu0 %v4156
        %4247 = vmatprep.mubr.bf16.mxu0 %v3638
        %4248 = vmatmul.mubr.bf16.gmra.mxu0 %v3637
        %v4249 = vpop.f32.mrf.mxu0
        %v4250 = vadd.f32 %v4024, %v4249
        %v4251 = vpop.f32.mrf.mxu0
        %v4252 = vadd.f32 %v4026, %v4251
        %v4253 = vpop.f32.mrf.mxu0
        %v4254 = vadd.f32 %v4028, %v4253
        %v4255 = vpop.f32.mrf.mxu0
        %v4256 = vadd.f32 %v4030, %v4255
        %4257 = vdwg.mxu0
        %4258 = vmatprep.subr.bf16.mxu0 0
        %4259 = vmatpush1.bf16.msra.mxu0 0
        %4260 = vmatprep.subr.bf16.mxu0 0
        %4261 = vmatpush1.bf16.msra.mxu0 0
        %4262 = vmatprep.subr.bf16.mxu0 0
        %4263 = vmatpush1.bf16.msra.mxu0 0
        %4264 = vmatprep.subr.bf16.mxu0 0
        %4265 = vmatpush1.bf16.msra.mxu0 0
        %4266 = vmatprep.subr.bf16.mxu0 0
        %4267 = vmatpush1.bf16.msra.mxu0 0
        %4268 = vmatprep.subr.bf16.mxu0 0
        %4269 = vmatpush1.bf16.msra.mxu0 0
        %4270 = vmatprep.subr.bf16.mxu0 %v4175
        %4271 = vmatpush1.bf16.msra.mxu0 %v4174
        %4272 = vmatprep.subr.bf16.mxu0 %v4173
        %4273 = vmatpush1.bf16.msra.mxu0 %v4172
        %4274 = vmatprep.subr.bf16.mxu0 0
        %4275 = vmatpush2.bf16.msra.mxu0 0
        %4276 = vmatprep.subr.bf16.mxu0 0
        %4277 = vmatpush2.bf16.msra.mxu0 0
        %4278 = vmatprep.subr.bf16.mxu0 0
        %4279 = vmatpush2.bf16.msra.mxu0 0
        %4280 = vmatprep.subr.bf16.mxu0 0
        %4281 = vmatpush2.bf16.msra.mxu0 0
        %4282 = vmatprep.subr.bf16.mxu0 0
        %4283 = vmatpush2.bf16.msra.mxu0 0
        %4284 = vmatprep.subr.bf16.mxu0 0
        %4285 = vmatpush2.bf16.msra.mxu0 0
        %4286 = vmatprep.subr.bf16.mxu0 0
        %4287 = vmatpush2.bf16.msra.mxu0 0
        %4288 = vmatprep.subr.bf16.mxu0 0
        %4289 = vmatpush2.bf16.msra.mxu0 0
        %4290 = vmatprep.mubr.bf16.mxu0 0
        %4291 = vmatmul.mubr.bf16.gmra.mxu0 %v4213
        %v4292 = vpop.f32.mrf.mxu0
        %v4293 = vadd.f32 %v4250, %v4292
        %v4294 = vpop.f32.mrf.mxu0
        %v4295 = vadd.f32 %v4252, %v4294
        %v4296 = vpop.f32.mrf.mxu0
        %v4297 = vadd.f32 %v4254, %v4296
        %v4298 = vpop.f32.mrf.mxu0
        %v4299 = vadd.f32 %v4256, %v4298
        %4300 = vdwg.mxu0
        %v4301 = vld [vmem:[#allocation2] sm:$0xfc]
        %v4302 = vld [vmem:[#allocation2 + $0x8] sm:$0xfc]
        %v4303 = vld [vmem:[#allocation2 + $0x10] sm:$0xfc]
        %v4304 = vld [vmem:[#allocation2 + $0x30] sm:$0x3]
        %v4305 = vld [vmem:[#allocation2 + $0x38] sm:$0x3]
        %v4306 = vld [vmem:[#allocation2 + $0x40] sm:$0x3]
        %v4307 = vpack.c.bf16 %v3634, %v4301
        %v4308 = vpack.c.bf16 %v3635, %v4302
        %v4309 = vpack.c.bf16 %v3636, %v4303
        %v4310 = vpack.c.bf16 %v4304, %v4304
        %v4311 = vpack.c.bf16 %v4305, %v4305
        %v4312 = vpack.c.bf16 %v4306, %v4306
        %s4313 = scalar_lea.vmem [#allocation12], 576
        %v4314 = vld [vmem:[%s4313] sm:$0xff]
        %v4315 = vld [vmem:[%s4313 + $0x8] sm:$0xff]
        %v4316 = vld [vmem:[%s4313 + $0x10] sm:$0xff]
        %v4317 = vld [vmem:[%s4313 + $0x18] sm:$0xff]
        %v4318 = vld [vmem:[%s4313 + $0x20] sm:$0xff]
        %v4319 = vld [vmem:[%s4313 + $0x28] sm:$0xff]
        %v4320 = vld [vmem:[%s4313 + $0x30] sm:$0xff]
        %v4321 = vld [vmem:[%s4313 + $0x38] sm:$0xff]
        %v4322 = vld [vmem:[%s4313 + $0x40] sm:$0xff]
        %v4323 = vld [vmem:[%s4313 + $0x48] sm:$0xff]
        %v4324 = vld [vmem:[%s4313 + $0x50] sm:$0xff]
        %v4325 = vld [vmem:[%s4313 + $0x58] sm:$0xff]
        %v4326 = vld [vmem:[%s4313 + $0x60] sm:$0xff]
        %v4327 = vld [vmem:[%s4313 + $0x68] sm:$0xff]
        %v4328 = vld [vmem:[%s4313 + $0x70] sm:$0xff]
        %v4329 = vld [vmem:[%s4313 + $0x78] sm:$0xff]
        %v4330 = vld [vmem:[%s4313 + $0x80] sm:$0xff]
        %v4331 = vld [vmem:[%s4313 + $0x88] sm:$0xff]
        %v4332 = vld [vmem:[%s4313 + $0x90] sm:$0xff]
        %v4333 = vld [vmem:[%s4313 + $0x98] sm:$0xff]
        %v4334 = vld [vmem:[%s4313 + $0xa0] sm:$0xff]
        %v4335 = vld [vmem:[%s4313 + $0xa8] sm:$0xff]
        %v4336 = vld [vmem:[%s4313 + $0xb0] sm:$0xff]
        %v4337 = vld [vmem:[%s4313 + $0xb8] sm:$0xff]
        %v4338 = vld [vmem:[%s4313 + $0xc0] sm:$0xff]
        %v4339 = vld [vmem:[%s4313 + $0xc8] sm:$0xff]
        %v4340 = vld [vmem:[%s4313 + $0xd0] sm:$0xff]
        %v4341 = vld [vmem:[%s4313 + $0xd8] sm:$0xff]
        %v4342 = vld [vmem:[%s4313 + $0xe0] sm:$0xff]
        %v4343 = vld [vmem:[%s4313 + $0xe8] sm:$0xff]
        %v4344 = vld [vmem:[%s4313 + $0xf0] sm:$0xff]
        %v4345 = vld [vmem:[%s4313 + $0xf8] sm:$0xff]
        %v4346 = vld [vmem:[%s4313 + $0x100] sm:$0xff]
        %v4347 = vld [vmem:[%s4313 + $0x108] sm:$0xff]
        %v4348 = vld [vmem:[%s4313 + $0x110] sm:$0xff]
        %v4349 = vld [vmem:[%s4313 + $0x118] sm:$0xff]
        %v4356 = vrot.slane %v4307, 1
        %v4357 = vrot.slane %v4310, 1
        %v4358 = vsel %vm1874, %v4356, %v4357
        %v4359 = vrot.slane %v4308, 1
        %v4360 = vrot.slane %v4311, 1
        %v4361 = vsel %vm1874, %v4359, %v4360
        %v4362 = vrot.slane %v4309, 1
        %v4363 = vrot.slane %v4312, 1
        %v4364 = vsel %vm1874, %v4362, %v4363
        %v4403 = vunpack.c.l.b16 %v4314
        %v4404 = vunpack.c.h.b16 %v4314
        %v4405 = vunpack.c.l.b16 %v4315
        %v4406 = vunpack.c.h.b16 %v4315
        %v4407 = vunpack.c.l.b16 %v4316
        %v4408 = vunpack.c.h.b16 %v4316
        %v4409 = vunpack.c.l.b16 %v4317
        %v4410 = vunpack.c.h.b16 %v4317
        %v4411 = vunpack.c.l.b16 %v4318
        %v4412 = vunpack.c.h.b16 %v4318
        %v4413 = vunpack.c.l.b16 %v4319
        %v4414 = vunpack.c.h.b16 %v4319
        %v4415 = vunpack.c.l.b16 %v4320
        %v4416 = vunpack.c.h.b16 %v4320
        %v4417 = vunpack.c.l.b16 %v4321
        %v4418 = vunpack.c.h.b16 %v4321
        %v4419 = vunpack.c.l.b16 %v4322
        %v4420 = vunpack.c.h.b16 %v4322
        %v4421 = vunpack.c.l.b16 %v4323
        %v4422 = vunpack.c.h.b16 %v4323
        %v4423 = vunpack.c.l.b16 %v4324
        %v4424 = vunpack.c.h.b16 %v4324
        %v4425 = vunpack.c.l.b16 %v4325
        %v4426 = vunpack.c.h.b16 %v4325
        %v4427 = vunpack.c.l.b16 %v4326
        %v4428 = vunpack.c.h.b16 %v4326
        %v4429 = vunpack.c.l.b16 %v4327
        %v4430 = vunpack.c.h.b16 %v4327
        %v4431 = vunpack.c.l.b16 %v4328
        %v4432 = vunpack.c.h.b16 %v4328
        %v4433 = vunpack.c.l.b16 %v4329
        %v4434 = vunpack.c.h.b16 %v4329
        %v4435 = vunpack.c.l.b16 %v4330
        %v4436 = vunpack.c.h.b16 %v4330
        %v4437 = vunpack.c.l.b16 %v4331
        %v4438 = vunpack.c.h.b16 %v4331
        %v4439 = vunpack.c.l.b16 %v4332
        %v4440 = vunpack.c.h.b16 %v4332
        %v4441 = vunpack.c.l.b16 %v4333
        %v4442 = vunpack.c.h.b16 %v4333
        %v4443 = vunpack.c.l.b16 %v4334
        %v4444 = vunpack.c.h.b16 %v4334
        %v4445 = vunpack.c.l.b16 %v4335
        %v4446 = vunpack.c.h.b16 %v4335
        %v4447 = vunpack.c.l.b16 %v4336
        %v4448 = vunpack.c.h.b16 %v4336
        %v4449 = vunpack.c.l.b16 %v4337
        %v4450 = vunpack.c.h.b16 %v4337
        %v4451 = vunpack.c.l.b16 %v4338
        %v4452 = vunpack.c.h.b16 %v4338
        %v4453 = vunpack.c.l.b16 %v4339
        %v4454 = vunpack.c.h.b16 %v4339
        %v4455 = vunpack.c.l.b16 %v4340
        %v4456 = vunpack.c.h.b16 %v4340
        %v4457 = vunpack.c.l.b16 %v4341
        %v4458 = vunpack.c.h.b16 %v4341
        %v4459 = vunpack.c.l.b16 %v4342
        %v4460 = vunpack.c.h.b16 %v4342
        %v4461 = vunpack.c.l.b16 %v4343
        %v4462 = vunpack.c.h.b16 %v4343
        %v4463 = vunpack.c.l.b16 %v4344
        %v4464 = vunpack.c.h.b16 %v4344
        %v4465 = vunpack.c.l.b16 %v4345
        %v4466 = vunpack.c.h.b16 %v4345
        %v4467 = vunpack.c.l.b16 %v4346
        %v4468 = vunpack.c.h.b16 %v4346
        %v4469 = vunpack.c.l.b16 %v4347
        %v4470 = vunpack.c.h.b16 %v4347
        %v4471 = vunpack.c.l.b16 %v4348
        %v4472 = vunpack.c.h.b16 %v4348
        %v4473 = vunpack.c.l.b16 %v4349
        %v4474 = vunpack.c.h.b16 %v4349
        %v4475 = vpack.c.b16 %v4405, %v4403
        %v4476 = vpack.c.b16 %v4406, %v4404
        %v4477 = vpack.c.b16 %v4409, %v4407
        %v4478 = vpack.c.b16 %v4410, %v4408
        %v4479 = vpack.c.b16 %v4413, %v4411
        %v4480 = vpack.c.b16 %v4414, %v4412
        %v4481 = vpack.c.b16 %v4417, %v4415
        %v4482 = vpack.c.b16 %v4418, %v4416
        %v4483 = vpack.c.b16 %v4421, %v4419
        %v4484 = vpack.c.b16 %v4422, %v4420
        %v4485 = vpack.c.b16 %v4425, %v4423
        %v4486 = vpack.c.b16 %v4426, %v4424
        %v4487 = vpack.c.b16 %v4429, %v4427
        %v4488 = vpack.c.b16 %v4430, %v4428
        %v4489 = vpack.c.b16 %v4433, %v4431
        %v4490 = vpack.c.b16 %v4434, %v4432
        %v4491 = vpack.c.b16 %v4437, %v4435
        %v4492 = vpack.c.b16 %v4438, %v4436
        %v4493 = vpack.c.b16 %v4441, %v4439
        %v4494 = vpack.c.b16 %v4442, %v4440
        %v4495 = vpack.c.b16 %v4445, %v4443
        %v4496 = vpack.c.b16 %v4446, %v4444
        %v4497 = vpack.c.b16 %v4449, %v4447
        %v4498 = vpack.c.b16 %v4450, %v4448
        %v4499 = vpack.c.b16 %v4453, %v4451
        %v4500 = vpack.c.b16 %v4454, %v4452
        %v4501 = vpack.c.b16 %v4457, %v4455
        %v4502 = vpack.c.b16 %v4458, %v4456
        %v4503 = vpack.c.b16 %v4461, %v4459
        %v4504 = vpack.c.b16 %v4462, %v4460
        %v4505 = vpack.c.b16 %v4465, %v4463
        %v4506 = vpack.c.b16 %v4466, %v4464
        %v4507 = vpack.c.b16 %v4469, %v4467
        %v4508 = vpack.c.b16 %v4470, %v4468
        %v4509 = vpack.c.b16 %v4473, %v4471
        %v4510 = vpack.c.b16 %v4474, %v4472
        %v4548 = vsel %vm650, %v4364, 0
        %4550 = vmatprep.subr.bf16.mxu0 %v4490
        %4551 = vmatpush1.bf16.msra.mxu0 %v4489
        %4552 = vmatprep.subr.bf16.mxu0 %v4488
        %4553 = vmatpush1.bf16.msra.mxu0 %v4487
        %4554 = vmatprep.subr.bf16.mxu0 %v4486
        %4555 = vmatpush1.bf16.msra.mxu0 %v4485
        %4556 = vmatprep.subr.bf16.mxu0 %v4484
        %4557 = vmatpush1.bf16.msra.mxu0 %v4483
        %4558 = vmatprep.subr.bf16.mxu0 %v4482
        %4559 = vmatpush1.bf16.msra.mxu0 %v4481
        %4560 = vmatprep.subr.bf16.mxu0 %v4480
        %4561 = vmatpush1.bf16.msra.mxu0 %v4479
        %4562 = vmatprep.subr.bf16.mxu0 %v4478
        %4563 = vmatpush1.bf16.msra.mxu0 %v4477
        %4564 = vmatprep.subr.bf16.mxu0 %v4476
        %4565 = vmatpush1.bf16.msra.mxu0 %v4475
        %4566 = vmatprep.subr.bf16.mxu0 %v4506
        %4567 = vmatpush2.bf16.msra.mxu0 %v4505
        %4568 = vmatprep.subr.bf16.mxu0 %v4504
        %4569 = vmatpush2.bf16.msra.mxu0 %v4503
        %4570 = vmatprep.subr.bf16.mxu0 %v4502
        %4571 = vmatpush2.bf16.msra.mxu0 %v4501
        %4572 = vmatprep.subr.bf16.mxu0 %v4500
        %4573 = vmatpush2.bf16.msra.mxu0 %v4499
        %4574 = vmatprep.subr.bf16.mxu0 %v4498
        %4575 = vmatpush2.bf16.msra.mxu0 %v4497
        %4576 = vmatprep.subr.bf16.mxu0 %v4496
        %4577 = vmatpush2.bf16.msra.mxu0 %v4495
        %4578 = vmatprep.subr.bf16.mxu0 %v4494
        %4579 = vmatpush2.bf16.msra.mxu0 %v4493
        %4580 = vmatprep.subr.bf16.mxu0 %v4492
        %4581 = vmatpush2.bf16.msra.mxu0 %v4491
        %4582 = vmatprep.mubr.bf16.mxu0 %v4361
        %4583 = vmatmul.mubr.bf16.gmra.mxu0 %v4358
        %v4584 = vpop.f32.mrf.mxu0
        %v4585 = vadd.f32 0.0, %v4584
        %v4586 = vpop.f32.mrf.mxu0
        %v4587 = vadd.f32 0.0, %v4586
        %v4588 = vpop.f32.mrf.mxu0
        %v4589 = vadd.f32 0.0, %v4588
        %v4590 = vpop.f32.mrf.mxu0
        %v4591 = vadd.f32 0.0, %v4590
        %4592 = vdwg.mxu0
        %4593 = vmatprep.subr.bf16.mxu0 0
        %4594 = vmatpush1.bf16.msra.mxu0 0
        %4595 = vmatprep.subr.bf16.mxu0 0
        %4596 = vmatpush1.bf16.msra.mxu0 0
        %4597 = vmatprep.subr.bf16.mxu0 0
        %4598 = vmatpush1.bf16.msra.mxu0 0
        %4599 = vmatprep.subr.bf16.mxu0 0
        %4600 = vmatpush1.bf16.msra.mxu0 0
        %4601 = vmatprep.subr.bf16.mxu0 0
        %4602 = vmatpush1.bf16.msra.mxu0 0
        %4603 = vmatprep.subr.bf16.mxu0 0
        %4604 = vmatpush1.bf16.msra.mxu0 0
        %4605 = vmatprep.subr.bf16.mxu0 %v4510
        %4606 = vmatpush1.bf16.msra.mxu0 %v4509
        %4607 = vmatprep.subr.bf16.mxu0 %v4508
        %4608 = vmatpush1.bf16.msra.mxu0 %v4507
        %4609 = vmatprep.subr.bf16.mxu0 0
        %4610 = vmatpush2.bf16.msra.mxu0 0
        %4611 = vmatprep.subr.bf16.mxu0 0
        %4612 = vmatpush2.bf16.msra.mxu0 0
        %4613 = vmatprep.subr.bf16.mxu0 0
        %4614 = vmatpush2.bf16.msra.mxu0 0
        %4615 = vmatprep.subr.bf16.mxu0 0
        %4616 = vmatpush2.bf16.msra.mxu0 0
        %4617 = vmatprep.subr.bf16.mxu0 0
        %4618 = vmatpush2.bf16.msra.mxu0 0
        %4619 = vmatprep.subr.bf16.mxu0 0
        %4620 = vmatpush2.bf16.msra.mxu0 0
        %4621 = vmatprep.subr.bf16.mxu0 0
        %4622 = vmatpush2.bf16.msra.mxu0 0
        %4623 = vmatprep.subr.bf16.mxu0 0
        %4624 = vmatpush2.bf16.msra.mxu0 0
        %4625 = vmatprep.mubr.bf16.mxu0 0
        %4626 = vmatmul.mubr.bf16.gmra.mxu0 %v4548
        %v4627 = vpop.f32.mrf.mxu0
        %v4628 = vadd.f32 %v4585, %v4627
        %v4629 = vpop.f32.mrf.mxu0
        %v4630 = vadd.f32 %v4587, %v4629
        %v4631 = vpop.f32.mrf.mxu0
        %v4632 = vadd.f32 %v4589, %v4631
        %v4633 = vpop.f32.mrf.mxu0
        %v4634 = vadd.f32 %v4591, %v4633
        %4635 = vdwg.mxu0
        %v4636 = vadd.f32 %v4293, %v4628
        %v4637 = vadd.f32 %v4295, %v4630
        %v4638 = vadd.f32 %v4297, %v4632
        %v4639 = vadd.f32 %v4299, %v4634
        %v4640 = vld [vmem:[#allocation3] sm:$0xff]
        %v4641 = vld [vmem:[#allocation3 + $0x8] sm:$0xff]
        %v4642 = vld [vmem:[#allocation3 + $0x10] sm:$0xff]
        %v4643 = vld [vmem:[#allocation3 + $0x18] sm:$0xff]
        %v4644 = vld [vmem:[#allocation3 + $0x20] sm:$0xff]
        %v4645 = vld [vmem:[#allocation3 + $0x28] sm:$0xff]
        %v4646 = vpack.c.bf16 %v4643, %v4640
        %v4647 = vpack.c.bf16 %v4644, %v4641
        %v4648 = vpack.c.bf16 %v4645, %v4642
        %s4649 = scalar_lea.vmem [#allocation12], 864
        %v4650 = vld [vmem:[%s4649] sm:$0xff]
        %v4651 = vld [vmem:[%s4649 + $0x8] sm:$0xff]
        %v4652 = vld [vmem:[%s4649 + $0x10] sm:$0xff]
        %v4653 = vld [vmem:[%s4649 + $0x18] sm:$0xff]
        %v4654 = vld [vmem:[%s4649 + $0x20] sm:$0xff]
        %v4655 = vld [vmem:[%s4649 + $0x28] sm:$0xff]
        %v4656 = vld [vmem:[%s4649 + $0x30] sm:$0xff]
        %v4657 = vld [vmem:[%s4649 + $0x38] sm:$0xff]
        %v4658 = vld [vmem:[%s4649 + $0x40] sm:$0xff]
        %v4659 = vld [vmem:[%s4649 + $0x48] sm:$0xff]
        %v4660 = vld [vmem:[%s4649 + $0x50] sm:$0xff]
        %v4661 = vld [vmem:[%s4649 + $0x58] sm:$0xff]
        %v4662 = vld [vmem:[%s4649 + $0x60] sm:$0xff]
        %v4663 = vld [vmem:[%s4649 + $0x68] sm:$0xff]
        %v4664 = vld [vmem:[%s4649 + $0x70] sm:$0xff]
        %v4665 = vld [vmem:[%s4649 + $0x78] sm:$0xff]
        %v4666 = vld [vmem:[%s4649 + $0x80] sm:$0xff]
        %v4667 = vld [vmem:[%s4649 + $0x88] sm:$0xff]
        %v4668 = vld [vmem:[%s4649 + $0x90] sm:$0xff]
        %v4669 = vld [vmem:[%s4649 + $0x98] sm:$0xff]
        %v4670 = vld [vmem:[%s4649 + $0xa0] sm:$0xff]
        %v4671 = vld [vmem:[%s4649 + $0xa8] sm:$0xff]
        %v4672 = vld [vmem:[%s4649 + $0xb0] sm:$0xff]
        %v4673 = vld [vmem:[%s4649 + $0xb8] sm:$0xff]
        %v4674 = vld [vmem:[%s4649 + $0xc0] sm:$0xff]
        %v4675 = vld [vmem:[%s4649 + $0xc8] sm:$0xff]
        %v4676 = vld [vmem:[%s4649 + $0xd0] sm:$0xff]
        %v4677 = vld [vmem:[%s4649 + $0xd8] sm:$0xff]
        %v4678 = vld [vmem:[%s4649 + $0xe0] sm:$0xff]
        %v4679 = vld [vmem:[%s4649 + $0xe8] sm:$0xff]
        %v4680 = vld [vmem:[%s4649 + $0xf0] sm:$0xff]
        %v4681 = vld [vmem:[%s4649 + $0xf8] sm:$0xff]
        %v4682 = vld [vmem:[%s4649 + $0x100] sm:$0xff]
        %v4683 = vld [vmem:[%s4649 + $0x108] sm:$0xff]
        %v4684 = vld [vmem:[%s4649 + $0x110] sm:$0xff]
        %v4685 = vld [vmem:[%s4649 + $0x118] sm:$0xff]
        %v4722 = vunpack.c.l.b16 %v4650
        %v4723 = vunpack.c.h.b16 %v4650
        %v4724 = vunpack.c.l.b16 %v4651
        %v4725 = vunpack.c.h.b16 %v4651
        %v4726 = vunpack.c.l.b16 %v4652
        %v4727 = vunpack.c.h.b16 %v4652
        %v4728 = vunpack.c.l.b16 %v4653
        %v4729 = vunpack.c.h.b16 %v4653
        %v4730 = vunpack.c.l.b16 %v4654
        %v4731 = vunpack.c.h.b16 %v4654
        %v4732 = vunpack.c.l.b16 %v4655
        %v4733 = vunpack.c.h.b16 %v4655
        %v4734 = vunpack.c.l.b16 %v4656
        %v4735 = vunpack.c.h.b16 %v4656
        %v4736 = vunpack.c.l.b16 %v4657
        %v4737 = vunpack.c.h.b16 %v4657
        %v4738 = vunpack.c.l.b16 %v4658
        %v4739 = vunpack.c.h.b16 %v4658
        %v4740 = vunpack.c.l.b16 %v4659
        %v4741 = vunpack.c.h.b16 %v4659
        %v4742 = vunpack.c.l.b16 %v4660
        %v4743 = vunpack.c.h.b16 %v4660
        %v4744 = vunpack.c.l.b16 %v4661
        %v4745 = vunpack.c.h.b16 %v4661
        %v4746 = vunpack.c.l.b16 %v4662
        %v4747 = vunpack.c.h.b16 %v4662
        %v4748 = vunpack.c.l.b16 %v4663
        %v4749 = vunpack.c.h.b16 %v4663
        %v4750 = vunpack.c.l.b16 %v4664
        %v4751 = vunpack.c.h.b16 %v4664
        %v4752 = vunpack.c.l.b16 %v4665
        %v4753 = vunpack.c.h.b16 %v4665
        %v4754 = vunpack.c.l.b16 %v4666
        %v4755 = vunpack.c.h.b16 %v4666
        %v4756 = vunpack.c.l.b16 %v4667
        %v4757 = vunpack.c.h.b16 %v4667
        %v4758 = vunpack.c.l.b16 %v4668
        %v4759 = vunpack.c.h.b16 %v4668
        %v4760 = vunpack.c.l.b16 %v4669
        %v4761 = vunpack.c.h.b16 %v4669
        %v4762 = vunpack.c.l.b16 %v4670
        %v4763 = vunpack.c.h.b16 %v4670
        %v4764 = vunpack.c.l.b16 %v4671
        %v4765 = vunpack.c.h.b16 %v4671
        %v4766 = vunpack.c.l.b16 %v4672
        %v4767 = vunpack.c.h.b16 %v4672
        %v4768 = vunpack.c.l.b16 %v4673
        %v4769 = vunpack.c.h.b16 %v4673
        %v4770 = vunpack.c.l.b16 %v4674
        %v4771 = vunpack.c.h.b16 %v4674
        %v4772 = vunpack.c.l.b16 %v4675
        %v4773 = vunpack.c.h.b16 %v4675
        %v4774 = vunpack.c.l.b16 %v4676
        %v4775 = vunpack.c.h.b16 %v4676
        %v4776 = vunpack.c.l.b16 %v4677
        %v4777 = vunpack.c.h.b16 %v4677
        %v4778 = vunpack.c.l.b16 %v4678
        %v4779 = vunpack.c.h.b16 %v4678
        %v4780 = vunpack.c.l.b16 %v4679
        %v4781 = vunpack.c.h.b16 %v4679
        %v4782 = vunpack.c.l.b16 %v4680
        %v4783 = vunpack.c.h.b16 %v4680
        %v4784 = vunpack.c.l.b16 %v4681
        %v4785 = vunpack.c.h.b16 %v4681
        %v4786 = vunpack.c.l.b16 %v4682
        %v4787 = vunpack.c.h.b16 %v4682
        %v4788 = vunpack.c.l.b16 %v4683
        %v4789 = vunpack.c.h.b16 %v4683
        %v4790 = vunpack.c.l.b16 %v4684
        %v4791 = vunpack.c.h.b16 %v4684
        %v4792 = vunpack.c.l.b16 %v4685
        %v4793 = vunpack.c.h.b16 %v4685
        %v4794 = vpack.c.b16 %v4724, %v4722
        %v4795 = vpack.c.b16 %v4725, %v4723
        %v4796 = vpack.c.b16 %v4728, %v4726
        %v4797 = vpack.c.b16 %v4729, %v4727
        %v4798 = vpack.c.b16 %v4732, %v4730
        %v4799 = vpack.c.b16 %v4733, %v4731
        %v4800 = vpack.c.b16 %v4736, %v4734
        %v4801 = vpack.c.b16 %v4737, %v4735
        %v4802 = vpack.c.b16 %v4740, %v4738
        %v4803 = vpack.c.b16 %v4741, %v4739
        %v4804 = vpack.c.b16 %v4744, %v4742
        %v4805 = vpack.c.b16 %v4745, %v4743
        %v4806 = vpack.c.b16 %v4748, %v4746
        %v4807 = vpack.c.b16 %v4749, %v4747
        %v4808 = vpack.c.b16 %v4752, %v4750
        %v4809 = vpack.c.b16 %v4753, %v4751
        %v4810 = vpack.c.b16 %v4756, %v4754
        %v4811 = vpack.c.b16 %v4757, %v4755
        %v4812 = vpack.c.b16 %v4760, %v4758
        %v4813 = vpack.c.b16 %v4761, %v4759
        %v4814 = vpack.c.b16 %v4764, %v4762
        %v4815 = vpack.c.b16 %v4765, %v4763
        %v4816 = vpack.c.b16 %v4768, %v4766
        %v4817 = vpack.c.b16 %v4769, %v4767
        %v4818 = vpack.c.b16 %v4772, %v4770
        %v4819 = vpack.c.b16 %v4773, %v4771
        %v4820 = vpack.c.b16 %v4776, %v4774
        %v4821 = vpack.c.b16 %v4777, %v4775
        %v4822 = vpack.c.b16 %v4780, %v4778
        %v4823 = vpack.c.b16 %v4781, %v4779
        %v4824 = vpack.c.b16 %v4784, %v4782
        %v4825 = vpack.c.b16 %v4785, %v4783
        %v4826 = vpack.c.b16 %v4788, %v4786
        %v4827 = vpack.c.b16 %v4789, %v4787
        %v4828 = vpack.c.b16 %v4792, %v4790
        %v4829 = vpack.c.b16 %v4793, %v4791
        %v4867 = vsel %vm650, %v4648, 0
        %4869 = vmatprep.subr.bf16.mxu0 %v4809
        %4870 = vmatpush1.bf16.msra.mxu0 %v4808
        %4871 = vmatprep.subr.bf16.mxu0 %v4807
        %4872 = vmatpush1.bf16.msra.mxu0 %v4806
        %4873 = vmatprep.subr.bf16.mxu0 %v4805
        %4874 = vmatpush1.bf16.msra.mxu0 %v4804
        %4875 = vmatprep.subr.bf16.mxu0 %v4803
        %4876 = vmatpush1.bf16.msra.mxu0 %v4802
        %4877 = vmatprep.subr.bf16.mxu0 %v4801
        %4878 = vmatpush1.bf16.msra.mxu0 %v4800
        %4879 = vmatprep.subr.bf16.mxu0 %v4799
        %4880 = vmatpush1.bf16.msra.mxu0 %v4798
        %4881 = vmatprep.subr.bf16.mxu0 %v4797
        %4882 = vmatpush1.bf16.msra.mxu0 %v4796
        %4883 = vmatprep.subr.bf16.mxu0 %v4795
        %4884 = vmatpush1.bf16.msra.mxu0 %v4794
        %4885 = vmatprep.subr.bf16.mxu0 %v4825
        %4886 = vmatpush2.bf16.msra.mxu0 %v4824
        %4887 = vmatprep.subr.bf16.mxu0 %v4823
        %4888 = vmatpush2.bf16.msra.mxu0 %v4822
        %4889 = vmatprep.subr.bf16.mxu0 %v4821
        %4890 = vmatpush2.bf16.msra.mxu0 %v4820
        %4891 = vmatprep.subr.bf16.mxu0 %v4819
        %4892 = vmatpush2.bf16.msra.mxu0 %v4818
        %4893 = vmatprep.subr.bf16.mxu0 %v4817
        %4894 = vmatpush2.bf16.msra.mxu0 %v4816
        %4895 = vmatprep.subr.bf16.mxu0 %v4815
        %4896 = vmatpush2.bf16.msra.mxu0 %v4814
        %4897 = vmatprep.subr.bf16.mxu0 %v4813
        %4898 = vmatpush2.bf16.msra.mxu0 %v4812
        %4899 = vmatprep.subr.bf16.mxu0 %v4811
        %4900 = vmatpush2.bf16.msra.mxu0 %v4810
        %4901 = vmatprep.mubr.bf16.mxu0 %v4647
        %4902 = vmatmul.mubr.bf16.gmra.mxu0 %v4646
        %v4903 = vpop.f32.mrf.mxu0
        %v4904 = vadd.f32 0.0, %v4903
        %v4905 = vpop.f32.mrf.mxu0
        %v4906 = vadd.f32 0.0, %v4905
        %v4907 = vpop.f32.mrf.mxu0
        %v4908 = vadd.f32 0.0, %v4907
        %v4909 = vpop.f32.mrf.mxu0
        %v4910 = vadd.f32 0.0, %v4909
        %4911 = vdwg.mxu0
        %4912 = vmatprep.subr.bf16.mxu0 0
        %4913 = vmatpush1.bf16.msra.mxu0 0
        %4914 = vmatprep.subr.bf16.mxu0 0
        %4915 = vmatpush1.bf16.msra.mxu0 0
        %4916 = vmatprep.subr.bf16.mxu0 0
        %4917 = vmatpush1.bf16.msra.mxu0 0
        %4918 = vmatprep.subr.bf16.mxu0 0
        %4919 = vmatpush1.bf16.msra.mxu0 0
        %4920 = vmatprep.subr.bf16.mxu0 0
        %4921 = vmatpush1.bf16.msra.mxu0 0
        %4922 = vmatprep.subr.bf16.mxu0 0
        %4923 = vmatpush1.bf16.msra.mxu0 0
        %4924 = vmatprep.subr.bf16.mxu0 %v4829
        %4925 = vmatpush1.bf16.msra.mxu0 %v4828
        %4926 = vmatprep.subr.bf16.mxu0 %v4827
        %4927 = vmatpush1.bf16.msra.mxu0 %v4826
        %4928 = vmatprep.subr.bf16.mxu0 0
        %4929 = vmatpush2.bf16.msra.mxu0 0
        %4930 = vmatprep.subr.bf16.mxu0 0
        %4931 = vmatpush2.bf16.msra.mxu0 0
        %4932 = vmatprep.subr.bf16.mxu0 0
        %4933 = vmatpush2.bf16.msra.mxu0 0
        %4934 = vmatprep.subr.bf16.mxu0 0
        %4935 = vmatpush2.bf16.msra.mxu0 0
        %4936 = vmatprep.subr.bf16.mxu0 0
        %4937 = vmatpush2.bf16.msra.mxu0 0
        %4938 = vmatprep.subr.bf16.mxu0 0
        %4939 = vmatpush2.bf16.msra.mxu0 0
        %4940 = vmatprep.subr.bf16.mxu0 0
        %4941 = vmatpush2.bf16.msra.mxu0 0
        %4942 = vmatprep.subr.bf16.mxu0 0
        %4943 = vmatpush2.bf16.msra.mxu0 0
        %4944 = vmatprep.mubr.bf16.mxu0 0
        %4945 = vmatmul.mubr.bf16.gmra.mxu0 %v4867
        %v4946 = vpop.f32.mrf.mxu0
        %v4947 = vadd.f32 %v4904, %v4946
        %v4948 = vpop.f32.mrf.mxu0
        %v4949 = vadd.f32 %v4906, %v4948
        %v4950 = vpop.f32.mrf.mxu0
        %v4951 = vadd.f32 %v4908, %v4950
        %v4952 = vpop.f32.mrf.mxu0
        %v4953 = vadd.f32 %v4910, %v4952
        %4954 = vdwg.mxu0
        %v4955 = vadd.f32 %v4636, %v4947
        %v4956 = vadd.f32 %v4637, %v4949
        %v4957 = vadd.f32 %v4638, %v4951
        %v4958 = vadd.f32 %v4639, %v4953
        %v4959 = vld [vmem:[#allocation3] sm:$0xfe]
        %v4960 = vld [vmem:[#allocation3 + $0x8] sm:$0xfe]
        %v4961 = vld [vmem:[#allocation3 + $0x10] sm:$0xfe]
        %v4962 = vld [vmem:[#allocation3 + $0x18] sm:$0xff]
        %v4963 = vld [vmem:[#allocation3 + $0x20] sm:$0xff]
        %v4964 = vld [vmem:[#allocation3 + $0x28] sm:$0xff]
        %v4965 = vld [vmem:[#allocation3 + $0x30] sm:$0x1]
        %v4966 = vld [vmem:[#allocation3 + $0x38] sm:$0x1]
        %v4967 = vld [vmem:[#allocation3 + $0x40] sm:$0x1]
        %v4968 = vpack.c.bf16 %v4962, %v4959
        %v4969 = vpack.c.bf16 %v4963, %v4960
        %v4970 = vpack.c.bf16 %v4964, %v4961
        %v4971 = vpack.c.bf16 %v4965, %v4965
        %v4972 = vpack.c.bf16 %v4966, %v4966
        %v4973 = vpack.c.bf16 %v4967, %v4967
        %s4974 = scalar_lea.vmem [#allocation12], 1152
        %v4975 = vld [vmem:[%s4974] sm:$0xff]
        %v4976 = vld [vmem:[%s4974 + $0x8] sm:$0xff]
        %v4977 = vld [vmem:[%s4974 + $0x10] sm:$0xff]
        %v4978 = vld [vmem:[%s4974 + $0x18] sm:$0xff]
        %v4979 = vld [vmem:[%s4974 + $0x20] sm:$0xff]
        %v4980 = vld [vmem:[%s4974 + $0x28] sm:$0xff]
        %v4981 = vld [vmem:[%s4974 + $0x30] sm:$0xff]
        %v4982 = vld [vmem:[%s4974 + $0x38] sm:$0xff]
        %v4983 = vld [vmem:[%s4974 + $0x40] sm:$0xff]
        %v4984 = vld [vmem:[%s4974 + $0x48] sm:$0xff]
        %v4985 = vld [vmem:[%s4974 + $0x50] sm:$0xff]
        %v4986 = vld [vmem:[%s4974 + $0x58] sm:$0xff]
        %v4987 = vld [vmem:[%s4974 + $0x60] sm:$0xff]
        %v4988 = vld [vmem:[%s4974 + $0x68] sm:$0xff]
        %v4989 = vld [vmem:[%s4974 + $0x70] sm:$0xff]
        %v4990 = vld [vmem:[%s4974 + $0x78] sm:$0xff]
        %v4991 = vld [vmem:[%s4974 + $0x80] sm:$0xff]
        %v4992 = vld [vmem:[%s4974 + $0x88] sm:$0xff]
        %v4993 = vld [vmem:[%s4974 + $0x90] sm:$0xff]
        %v4994 = vld [vmem:[%s4974 + $0x98] sm:$0xff]
        %v4995 = vld [vmem:[%s4974 + $0xa0] sm:$0xff]
        %v4996 = vld [vmem:[%s4974 + $0xa8] sm:$0xff]
        %v4997 = vld [vmem:[%s4974 + $0xb0] sm:$0xff]
        %v4998 = vld [vmem:[%s4974 + $0xb8] sm:$0xff]
        %v4999 = vld [vmem:[%s4974 + $0xc0] sm:$0xff]
        %v5000 = vld [vmem:[%s4974 + $0xc8] sm:$0xff]
        %v5001 = vld [vmem:[%s4974 + $0xd0] sm:$0xff]
        %v5002 = vld [vmem:[%s4974 + $0xd8] sm:$0xff]
        %v5003 = vld [vmem:[%s4974 + $0xe0] sm:$0xff]
        %v5004 = vld [vmem:[%s4974 + $0xe8] sm:$0xff]
        %v5005 = vld [vmem:[%s4974 + $0xf0] sm:$0xff]
        %v5006 = vld [vmem:[%s4974 + $0xf8] sm:$0xff]
        %v5007 = vld [vmem:[%s4974 + $0x100] sm:$0xff]
        %v5008 = vld [vmem:[%s4974 + $0x108] sm:$0xff]
        %v5009 = vld [vmem:[%s4974 + $0x110] sm:$0xff]
        %v5010 = vld [vmem:[%s4974 + $0x118] sm:$0xff]
        %v5012 = vshrl.u32 %v4968, 16
        %v5014 = vshll.u32 %v4968, 16
        %v5016 = vrot.slane %v5014, 1
        %v5017 = vor.u32 %v5012, %v5016
        %v5019 = vshll.u32 %v4971, 16
        %v5021 = vrot.slane %v5019, 1
        %v5022 = vsel %vm1242, %v5017, %v5021
        %v5024 = vshrl.u32 %v4969, 16
        %v5026 = vshll.u32 %v4969, 16
        %v5028 = vrot.slane %v5026, 1
        %v5029 = vor.u32 %v5024, %v5028
        %v5031 = vshll.u32 %v4972, 16
        %v5033 = vrot.slane %v5031, 1
        %v5034 = vsel %vm1242, %v5029, %v5033
        %v5036 = vshrl.u32 %v4970, 16
        %v5038 = vshll.u32 %v4970, 16
        %v5040 = vrot.slane %v5038, 1
        %v5041 = vor.u32 %v5036, %v5040
        %v5043 = vshll.u32 %v4973, 16
        %v5045 = vrot.slane %v5043, 1
        %v5046 = vsel %vm1242, %v5041, %v5045
        %v5085 = vunpack.c.l.b16 %v4975
        %v5086 = vunpack.c.h.b16 %v4975
        %v5087 = vunpack.c.l.b16 %v4976
        %v5088 = vunpack.c.h.b16 %v4976
        %v5089 = vunpack.c.l.b16 %v4977
        %v5090 = vunpack.c.h.b16 %v4977
        %v5091 = vunpack.c.l.b16 %v4978
        %v5092 = vunpack.c.h.b16 %v4978
        %v5093 = vunpack.c.l.b16 %v4979
        %v5094 = vunpack.c.h.b16 %v4979
        %v5095 = vunpack.c.l.b16 %v4980
        %v5096 = vunpack.c.h.b16 %v4980
        %v5097 = vunpack.c.l.b16 %v4981
        %v5098 = vunpack.c.h.b16 %v4981
        %v5099 = vunpack.c.l.b16 %v4982
        %v5100 = vunpack.c.h.b16 %v4982
        %v5101 = vunpack.c.l.b16 %v4983
        %v5102 = vunpack.c.h.b16 %v4983
        %v5103 = vunpack.c.l.b16 %v4984
        %v5104 = vunpack.c.h.b16 %v4984
        %v5105 = vunpack.c.l.b16 %v4985
        %v5106 = vunpack.c.h.b16 %v4985
        %v5107 = vunpack.c.l.b16 %v4986
        %v5108 = vunpack.c.h.b16 %v4986
        %v5109 = vunpack.c.l.b16 %v4987
        %v5110 = vunpack.c.h.b16 %v4987
        %v5111 = vunpack.c.l.b16 %v4988
        %v5112 = vunpack.c.h.b16 %v4988
        %v5113 = vunpack.c.l.b16 %v4989
        %v5114 = vunpack.c.h.b16 %v4989
        %v5115 = vunpack.c.l.b16 %v4990
        %v5116 = vunpack.c.h.b16 %v4990
        %v5117 = vunpack.c.l.b16 %v4991
        %v5118 = vunpack.c.h.b16 %v4991
        %v5119 = vunpack.c.l.b16 %v4992
        %v5120 = vunpack.c.h.b16 %v4992
        %v5121 = vunpack.c.l.b16 %v4993
        %v5122 = vunpack.c.h.b16 %v4993
        %v5123 = vunpack.c.l.b16 %v4994
        %v5124 = vunpack.c.h.b16 %v4994
        %v5125 = vunpack.c.l.b16 %v4995
        %v5126 = vunpack.c.h.b16 %v4995
        %v5127 = vunpack.c.l.b16 %v4996
        %v5128 = vunpack.c.h.b16 %v4996
        %v5129 = vunpack.c.l.b16 %v4997
        %v5130 = vunpack.c.h.b16 %v4997
        %v5131 = vunpack.c.l.b16 %v4998
        %v5132 = vunpack.c.h.b16 %v4998
        %v5133 = vunpack.c.l.b16 %v4999
        %v5134 = vunpack.c.h.b16 %v4999
        %v5135 = vunpack.c.l.b16 %v5000
        %v5136 = vunpack.c.h.b16 %v5000
        %v5137 = vunpack.c.l.b16 %v5001
        %v5138 = vunpack.c.h.b16 %v5001
        %v5139 = vunpack.c.l.b16 %v5002
        %v5140 = vunpack.c.h.b16 %v5002
        %v5141 = vunpack.c.l.b16 %v5003
        %v5142 = vunpack.c.h.b16 %v5003
        %v5143 = vunpack.c.l.b16 %v5004
        %v5144 = vunpack.c.h.b16 %v5004
        %v5145 = vunpack.c.l.b16 %v5005
        %v5146 = vunpack.c.h.b16 %v5005
        %v5147 = vunpack.c.l.b16 %v5006
        %v5148 = vunpack.c.h.b16 %v5006
        %v5149 = vunpack.c.l.b16 %v5007
        %v5150 = vunpack.c.h.b16 %v5007
        %v5151 = vunpack.c.l.b16 %v5008
        %v5152 = vunpack.c.h.b16 %v5008
        %v5153 = vunpack.c.l.b16 %v5009
        %v5154 = vunpack.c.h.b16 %v5009
        %v5155 = vunpack.c.l.b16 %v5010
        %v5156 = vunpack.c.h.b16 %v5010
        %v5157 = vpack.c.b16 %v5087, %v5085
        %v5158 = vpack.c.b16 %v5088, %v5086
        %v5159 = vpack.c.b16 %v5091, %v5089
        %v5160 = vpack.c.b16 %v5092, %v5090
        %v5161 = vpack.c.b16 %v5095, %v5093
        %v5162 = vpack.c.b16 %v5096, %v5094
        %v5163 = vpack.c.b16 %v5099, %v5097
        %v5164 = vpack.c.b16 %v5100, %v5098
        %v5165 = vpack.c.b16 %v5103, %v5101
        %v5166 = vpack.c.b16 %v5104, %v5102
        %v5167 = vpack.c.b16 %v5107, %v5105
        %v5168 = vpack.c.b16 %v5108, %v5106
        %v5169 = vpack.c.b16 %v5111, %v5109
        %v5170 = vpack.c.b16 %v5112, %v5110
        %v5171 = vpack.c.b16 %v5115, %v5113
        %v5172 = vpack.c.b16 %v5116, %v5114
        %v5173 = vpack.c.b16 %v5119, %v5117
        %v5174 = vpack.c.b16 %v5120, %v5118
        %v5175 = vpack.c.b16 %v5123, %v5121
        %v5176 = vpack.c.b16 %v5124, %v5122
        %v5177 = vpack.c.b16 %v5127, %v5125
        %v5178 = vpack.c.b16 %v5128, %v5126
        %v5179 = vpack.c.b16 %v5131, %v5129
        %v5180 = vpack.c.b16 %v5132, %v5130
        %v5181 = vpack.c.b16 %v5135, %v5133
        %v5182 = vpack.c.b16 %v5136, %v5134
        %v5183 = vpack.c.b16 %v5139, %v5137
        %v5184 = vpack.c.b16 %v5140, %v5138
        %v5185 = vpack.c.b16 %v5143, %v5141
        %v5186 = vpack.c.b16 %v5144, %v5142
        %v5187 = vpack.c.b16 %v5147, %v5145
        %v5188 = vpack.c.b16 %v5148, %v5146
        %v5189 = vpack.c.b16 %v5151, %v5149
        %v5190 = vpack.c.b16 %v5152, %v5150
        %v5191 = vpack.c.b16 %v5155, %v5153
        %v5192 = vpack.c.b16 %v5156, %v5154
        %v5230 = vsel %vm650, %v5046, 0
        %5232 = vmatprep.subr.bf16.mxu0 %v5172
        %5233 = vmatpush1.bf16.msra.mxu0 %v5171
        %5234 = vmatprep.subr.bf16.mxu0 %v5170
        %5235 = vmatpush1.bf16.msra.mxu0 %v5169
        %5236 = vmatprep.subr.bf16.mxu0 %v5168
        %5237 = vmatpush1.bf16.msra.mxu0 %v5167
        %5238 = vmatprep.subr.bf16.mxu0 %v5166
        %5239 = vmatpush1.bf16.msra.mxu0 %v5165
        %5240 = vmatprep.subr.bf16.mxu0 %v5164
        %5241 = vmatpush1.bf16.msra.mxu0 %v5163
        %5242 = vmatprep.subr.bf16.mxu0 %v5162
        %5243 = vmatpush1.bf16.msra.mxu0 %v5161
        %5244 = vmatprep.subr.bf16.mxu0 %v5160
        %5245 = vmatpush1.bf16.msra.mxu0 %v5159
        %5246 = vmatprep.subr.bf16.mxu0 %v5158
        %5247 = vmatpush1.bf16.msra.mxu0 %v5157
        %5248 = vmatprep.subr.bf16.mxu0 %v5188
        %5249 = vmatpush2.bf16.msra.mxu0 %v5187
        %5250 = vmatprep.subr.bf16.mxu0 %v5186
        %5251 = vmatpush2.bf16.msra.mxu0 %v5185
        %5252 = vmatprep.subr.bf16.mxu0 %v5184
        %5253 = vmatpush2.bf16.msra.mxu0 %v5183
        %5254 = vmatprep.subr.bf16.mxu0 %v5182
        %5255 = vmatpush2.bf16.msra.mxu0 %v5181
        %5256 = vmatprep.subr.bf16.mxu0 %v5180
        %5257 = vmatpush2.bf16.msra.mxu0 %v5179
        %5258 = vmatprep.subr.bf16.mxu0 %v5178
        %5259 = vmatpush2.bf16.msra.mxu0 %v5177
        %5260 = vmatprep.subr.bf16.mxu0 %v5176
        %5261 = vmatpush2.bf16.msra.mxu0 %v5175
        %5262 = vmatprep.subr.bf16.mxu0 %v5174
        %5263 = vmatpush2.bf16.msra.mxu0 %v5173
        %5264 = vmatprep.mubr.bf16.mxu0 %v5034
        %5265 = vmatmul.mubr.bf16.gmra.mxu0 %v5022
        %v5266 = vpop.f32.mrf.mxu0
        %v5267 = vadd.f32 0.0, %v5266
        %v5268 = vpop.f32.mrf.mxu0
        %v5269 = vadd.f32 0.0, %v5268
        %v5270 = vpop.f32.mrf.mxu0
        %v5271 = vadd.f32 0.0, %v5270
        %v5272 = vpop.f32.mrf.mxu0
        %v5273 = vadd.f32 0.0, %v5272
        %5274 = vdwg.mxu0
        %5275 = vmatprep.subr.bf16.mxu0 0
        %5276 = vmatpush1.bf16.msra.mxu0 0
        %5277 = vmatprep.subr.bf16.mxu0 0
        %5278 = vmatpush1.bf16.msra.mxu0 0
        %5279 = vmatprep.subr.bf16.mxu0 0
        %5280 = vmatpush1.bf16.msra.mxu0 0
        %5281 = vmatprep.subr.bf16.mxu0 0
        %5282 = vmatpush1.bf16.msra.mxu0 0
        %5283 = vmatprep.subr.bf16.mxu0 0
        %5284 = vmatpush1.bf16.msra.mxu0 0
        %5285 = vmatprep.subr.bf16.mxu0 0
        %5286 = vmatpush1.bf16.msra.mxu0 0
        %5287 = vmatprep.subr.bf16.mxu0 %v5192
        %5288 = vmatpush1.bf16.msra.mxu0 %v5191
        %5289 = vmatprep.subr.bf16.mxu0 %v5190
        %5290 = vmatpush1.bf16.msra.mxu0 %v5189
        %5291 = vmatprep.subr.bf16.mxu0 0
        %5292 = vmatpush2.bf16.msra.mxu0 0
        %5293 = vmatprep.subr.bf16.mxu0 0
        %5294 = vmatpush2.bf16.msra.mxu0 0
        %5295 = vmatprep.subr.bf16.mxu0 0
        %5296 = vmatpush2.bf16.msra.mxu0 0
        %5297 = vmatprep.subr.bf16.mxu0 0
        %5298 = vmatpush2.bf16.msra.mxu0 0
        %5299 = vmatprep.subr.bf16.mxu0 0
        %5300 = vmatpush2.bf16.msra.mxu0 0
        %5301 = vmatprep.subr.bf16.mxu0 0
        %5302 = vmatpush2.bf16.msra.mxu0 0
        %5303 = vmatprep.subr.bf16.mxu0 0
        %5304 = vmatpush2.bf16.msra.mxu0 0
        %5305 = vmatprep.subr.bf16.mxu0 0
        %5306 = vmatpush2.bf16.msra.mxu0 0
        %5307 = vmatprep.mubr.bf16.mxu0 0
        %5308 = vmatmul.mubr.bf16.gmra.mxu0 %v5230
        %v5309 = vpop.f32.mrf.mxu0
        %v5310 = vadd.f32 %v5267, %v5309
        %v5311 = vpop.f32.mrf.mxu0
        %v5312 = vadd.f32 %v5269, %v5311
        %v5313 = vpop.f32.mrf.mxu0
        %v5314 = vadd.f32 %v5271, %v5313
        %v5315 = vpop.f32.mrf.mxu0
        %v5316 = vadd.f32 %v5273, %v5315
        %5317 = vdwg.mxu0
        %v5318 = vadd.f32 %v4955, %v5310
        %v5319 = vadd.f32 %v4956, %v5312
        %v5320 = vadd.f32 %v4957, %v5314
        %v5321 = vadd.f32 %v4958, %v5316
        %v5322 = vld [vmem:[#allocation3] sm:$0xfc]
        %v5323 = vld [vmem:[#allocation3 + $0x8] sm:$0xfc]
        %v5324 = vld [vmem:[#allocation3 + $0x10] sm:$0xfc]
        %v5325 = vld [vmem:[#allocation3 + $0x30] sm:$0x3]
        %v5326 = vld [vmem:[#allocation3 + $0x38] sm:$0x3]
        %v5327 = vld [vmem:[#allocation3 + $0x40] sm:$0x3]
        %v5328 = vpack.c.bf16 %v4962, %v5322
        %v5329 = vpack.c.bf16 %v4963, %v5323
        %v5330 = vpack.c.bf16 %v4964, %v5324
        %v5331 = vpack.c.bf16 %v5325, %v5325
        %v5332 = vpack.c.bf16 %v5326, %v5326
        %v5333 = vpack.c.bf16 %v5327, %v5327
        %s5334 = scalar_lea.vmem [#allocation12], 1440
        %v5335 = vld [vmem:[%s5334] sm:$0xff]
        %v5336 = vld [vmem:[%s5334 + $0x8] sm:$0xff]
        %v5337 = vld [vmem:[%s5334 + $0x10] sm:$0xff]
        %v5338 = vld [vmem:[%s5334 + $0x18] sm:$0xff]
        %v5339 = vld [vmem:[%s5334 + $0x20] sm:$0xff]
        %v5340 = vld [vmem:[%s5334 + $0x28] sm:$0xff]
        %v5341 = vld [vmem:[%s5334 + $0x30] sm:$0xff]
        %v5342 = vld [vmem:[%s5334 + $0x38] sm:$0xff]
        %v5343 = vld [vmem:[%s5334 + $0x40] sm:$0xff]
        %v5344 = vld [vmem:[%s5334 + $0x48] sm:$0xff]
        %v5345 = vld [vmem:[%s5334 + $0x50] sm:$0xff]
        %v5346 = vld [vmem:[%s5334 + $0x58] sm:$0xff]
        %v5347 = vld [vmem:[%s5334 + $0x60] sm:$0xff]
        %v5348 = vld [vmem:[%s5334 + $0x68] sm:$0xff]
        %v5349 = vld [vmem:[%s5334 + $0x70] sm:$0xff]
        %v5350 = vld [vmem:[%s5334 + $0x78] sm:$0xff]
        %v5351 = vld [vmem:[%s5334 + $0x80] sm:$0xff]
        %v5352 = vld [vmem:[%s5334 + $0x88] sm:$0xff]
        %v5353 = vld [vmem:[%s5334 + $0x90] sm:$0xff]
        %v5354 = vld [vmem:[%s5334 + $0x98] sm:$0xff]
        %v5355 = vld [vmem:[%s5334 + $0xa0] sm:$0xff]
        %v5356 = vld [vmem:[%s5334 + $0xa8] sm:$0xff]
        %v5357 = vld [vmem:[%s5334 + $0xb0] sm:$0xff]
        %v5358 = vld [vmem:[%s5334 + $0xb8] sm:$0xff]
        %v5359 = vld [vmem:[%s5334 + $0xc0] sm:$0xff]
        %v5360 = vld [vmem:[%s5334 + $0xc8] sm:$0xff]
        %v5361 = vld [vmem:[%s5334 + $0xd0] sm:$0xff]
        %v5362 = vld [vmem:[%s5334 + $0xd8] sm:$0xff]
        %v5363 = vld [vmem:[%s5334 + $0xe0] sm:$0xff]
        %v5364 = vld [vmem:[%s5334 + $0xe8] sm:$0xff]
        %v5365 = vld [vmem:[%s5334 + $0xf0] sm:$0xff]
        %v5366 = vld [vmem:[%s5334 + $0xf8] sm:$0xff]
        %v5367 = vld [vmem:[%s5334 + $0x100] sm:$0xff]
        %v5368 = vld [vmem:[%s5334 + $0x108] sm:$0xff]
        %v5369 = vld [vmem:[%s5334 + $0x110] sm:$0xff]
        %v5370 = vld [vmem:[%s5334 + $0x118] sm:$0xff]
        %v5377 = vrot.slane %v5328, 1
        %v5378 = vrot.slane %v5331, 1
        %v5379 = vsel %vm1874, %v5377, %v5378
        %v5380 = vrot.slane %v5329, 1
        %v5381 = vrot.slane %v5332, 1
        %v5382 = vsel %vm1874, %v5380, %v5381
        %v5383 = vrot.slane %v5330, 1
        %v5384 = vrot.slane %v5333, 1
        %v5385 = vsel %vm1874, %v5383, %v5384
        %v5424 = vunpack.c.l.b16 %v5335
        %v5425 = vunpack.c.h.b16 %v5335
        %v5426 = vunpack.c.l.b16 %v5336
        %v5427 = vunpack.c.h.b16 %v5336
        %v5428 = vunpack.c.l.b16 %v5337
        %v5429 = vunpack.c.h.b16 %v5337
        %v5430 = vunpack.c.l.b16 %v5338
        %v5431 = vunpack.c.h.b16 %v5338
        %v5432 = vunpack.c.l.b16 %v5339
        %v5433 = vunpack.c.h.b16 %v5339
        %v5434 = vunpack.c.l.b16 %v5340
        %v5435 = vunpack.c.h.b16 %v5340
        %v5436 = vunpack.c.l.b16 %v5341
        %v5437 = vunpack.c.h.b16 %v5341
        %v5438 = vunpack.c.l.b16 %v5342
        %v5439 = vunpack.c.h.b16 %v5342
        %v5440 = vunpack.c.l.b16 %v5343
        %v5441 = vunpack.c.h.b16 %v5343
        %v5442 = vunpack.c.l.b16 %v5344
        %v5443 = vunpack.c.h.b16 %v5344
        %v5444 = vunpack.c.l.b16 %v5345
        %v5445 = vunpack.c.h.b16 %v5345
        %v5446 = vunpack.c.l.b16 %v5346
        %v5447 = vunpack.c.h.b16 %v5346
        %v5448 = vunpack.c.l.b16 %v5347
        %v5449 = vunpack.c.h.b16 %v5347
        %v5450 = vunpack.c.l.b16 %v5348
        %v5451 = vunpack.c.h.b16 %v5348
        %v5452 = vunpack.c.l.b16 %v5349
        %v5453 = vunpack.c.h.b16 %v5349
        %v5454 = vunpack.c.l.b16 %v5350
        %v5455 = vunpack.c.h.b16 %v5350
        %v5456 = vunpack.c.l.b16 %v5351
        %v5457 = vunpack.c.h.b16 %v5351
        %v5458 = vunpack.c.l.b16 %v5352
        %v5459 = vunpack.c.h.b16 %v5352
        %v5460 = vunpack.c.l.b16 %v5353
        %v5461 = vunpack.c.h.b16 %v5353
        %v5462 = vunpack.c.l.b16 %v5354
        %v5463 = vunpack.c.h.b16 %v5354
        %v5464 = vunpack.c.l.b16 %v5355
        %v5465 = vunpack.c.h.b16 %v5355
        %v5466 = vunpack.c.l.b16 %v5356
        %v5467 = vunpack.c.h.b16 %v5356
        %v5468 = vunpack.c.l.b16 %v5357
        %v5469 = vunpack.c.h.b16 %v5357
        %v5470 = vunpack.c.l.b16 %v5358
        %v5471 = vunpack.c.h.b16 %v5358
        %v5472 = vunpack.c.l.b16 %v5359
        %v5473 = vunpack.c.h.b16 %v5359
        %v5474 = vunpack.c.l.b16 %v5360
        %v5475 = vunpack.c.h.b16 %v5360
        %v5476 = vunpack.c.l.b16 %v5361
        %v5477 = vunpack.c.h.b16 %v5361
        %v5478 = vunpack.c.l.b16 %v5362
        %v5479 = vunpack.c.h.b16 %v5362
        %v5480 = vunpack.c.l.b16 %v5363
        %v5481 = vunpack.c.h.b16 %v5363
        %v5482 = vunpack.c.l.b16 %v5364
        %v5483 = vunpack.c.h.b16 %v5364
        %v5484 = vunpack.c.l.b16 %v5365
        %v5485 = vunpack.c.h.b16 %v5365
        %v5486 = vunpack.c.l.b16 %v5366
        %v5487 = vunpack.c.h.b16 %v5366
        %v5488 = vunpack.c.l.b16 %v5367
        %v5489 = vunpack.c.h.b16 %v5367
        %v5490 = vunpack.c.l.b16 %v5368
        %v5491 = vunpack.c.h.b16 %v5368
        %v5492 = vunpack.c.l.b16 %v5369
        %v5493 = vunpack.c.h.b16 %v5369
        %v5494 = vunpack.c.l.b16 %v5370
        %v5495 = vunpack.c.h.b16 %v5370
        %v5496 = vpack.c.b16 %v5426, %v5424
        %v5497 = vpack.c.b16 %v5427, %v5425
        %v5498 = vpack.c.b16 %v5430, %v5428
        %v5499 = vpack.c.b16 %v5431, %v5429
        %v5500 = vpack.c.b16 %v5434, %v5432
        %v5501 = vpack.c.b16 %v5435, %v5433
        %v5502 = vpack.c.b16 %v5438, %v5436
        %v5503 = vpack.c.b16 %v5439, %v5437
        %v5504 = vpack.c.b16 %v5442, %v5440
        %v5505 = vpack.c.b16 %v5443, %v5441
        %v5506 = vpack.c.b16 %v5446, %v5444
        %v5507 = vpack.c.b16 %v5447, %v5445
        %v5508 = vpack.c.b16 %v5450, %v5448
        %v5509 = vpack.c.b16 %v5451, %v5449
        %v5510 = vpack.c.b16 %v5454, %v5452
        %v5511 = vpack.c.b16 %v5455, %v5453
        %v5512 = vpack.c.b16 %v5458, %v5456
        %v5513 = vpack.c.b16 %v5459, %v5457
        %v5514 = vpack.c.b16 %v5462, %v5460
        %v5515 = vpack.c.b16 %v5463, %v5461
        %v5516 = vpack.c.b16 %v5466, %v5464
        %v5517 = vpack.c.b16 %v5467, %v5465
        %v5518 = vpack.c.b16 %v5470, %v5468
        %v5519 = vpack.c.b16 %v5471, %v5469
        %v5520 = vpack.c.b16 %v5474, %v5472
        %v5521 = vpack.c.b16 %v5475, %v5473
        %v5522 = vpack.c.b16 %v5478, %v5476
        %v5523 = vpack.c.b16 %v5479, %v5477
        %v5524 = vpack.c.b16 %v5482, %v5480
        %v5525 = vpack.c.b16 %v5483, %v5481
        %v5526 = vpack.c.b16 %v5486, %v5484
        %v5527 = vpack.c.b16 %v5487, %v5485
        %v5528 = vpack.c.b16 %v5490, %v5488
        %v5529 = vpack.c.b16 %v5491, %v5489
        %v5530 = vpack.c.b16 %v5494, %v5492
        %v5531 = vpack.c.b16 %v5495, %v5493
        %v5569 = vsel %vm650, %v5385, 0
        %5571 = vmatprep.subr.bf16.mxu0 %v5511
        %5572 = vmatpush1.bf16.msra.mxu0 %v5510
        %5573 = vmatprep.subr.bf16.mxu0 %v5509
        %5574 = vmatpush1.bf16.msra.mxu0 %v5508
        %5575 = vmatprep.subr.bf16.mxu0 %v5507
        %5576 = vmatpush1.bf16.msra.mxu0 %v5506
        %5577 = vmatprep.subr.bf16.mxu0 %v5505
        %5578 = vmatpush1.bf16.msra.mxu0 %v5504
        %5579 = vmatprep.subr.bf16.mxu0 %v5503
        %5580 = vmatpush1.bf16.msra.mxu0 %v5502
        %5581 = vmatprep.subr.bf16.mxu0 %v5501
        %5582 = vmatpush1.bf16.msra.mxu0 %v5500
        %5583 = vmatprep.subr.bf16.mxu0 %v5499
        %5584 = vmatpush1.bf16.msra.mxu0 %v5498
        %5585 = vmatprep.subr.bf16.mxu0 %v5497
        %5586 = vmatpush1.bf16.msra.mxu0 %v5496
        %5587 = vmatprep.subr.bf16.mxu0 %v5527
        %5588 = vmatpush2.bf16.msra.mxu0 %v5526
        %5589 = vmatprep.subr.bf16.mxu0 %v5525
        %5590 = vmatpush2.bf16.msra.mxu0 %v5524
        %5591 = vmatprep.subr.bf16.mxu0 %v5523
        %5592 = vmatpush2.bf16.msra.mxu0 %v5522
        %5593 = vmatprep.subr.bf16.mxu0 %v5521
        %5594 = vmatpush2.bf16.msra.mxu0 %v5520
        %5595 = vmatprep.subr.bf16.mxu0 %v5519
        %5596 = vmatpush2.bf16.msra.mxu0 %v5518
        %5597 = vmatprep.subr.bf16.mxu0 %v5517
        %5598 = vmatpush2.bf16.msra.mxu0 %v5516
        %5599 = vmatprep.subr.bf16.mxu0 %v5515
        %5600 = vmatpush2.bf16.msra.mxu0 %v5514
        %5601 = vmatprep.subr.bf16.mxu0 %v5513
        %5602 = vmatpush2.bf16.msra.mxu0 %v5512
        %5603 = vmatprep.mubr.bf16.mxu0 %v5382
        %5604 = vmatmul.mubr.bf16.gmra.mxu0 %v5379
        %v5605 = vpop.f32.mrf.mxu0
        %v5606 = vadd.f32 0.0, %v5605
        %v5607 = vpop.f32.mrf.mxu0
        %v5608 = vadd.f32 0.0, %v5607
        %v5609 = vpop.f32.mrf.mxu0
        %v5610 = vadd.f32 0.0, %v5609
        %v5611 = vpop.f32.mrf.mxu0
        %v5612 = vadd.f32 0.0, %v5611
        %5613 = vdwg.mxu0
        %5614 = vmatprep.subr.bf16.mxu0 0
        %5615 = vmatpush1.bf16.msra.mxu0 0
        %5616 = vmatprep.subr.bf16.mxu0 0
        %5617 = vmatpush1.bf16.msra.mxu0 0
        %5618 = vmatprep.subr.bf16.mxu0 0
        %5619 = vmatpush1.bf16.msra.mxu0 0
        %5620 = vmatprep.subr.bf16.mxu0 0
        %5621 = vmatpush1.bf16.msra.mxu0 0
        %5622 = vmatprep.subr.bf16.mxu0 0
        %5623 = vmatpush1.bf16.msra.mxu0 0
        %5624 = vmatprep.subr.bf16.mxu0 0
        %5625 = vmatpush1.bf16.msra.mxu0 0
        %5626 = vmatprep.subr.bf16.mxu0 %v5531
        %5627 = vmatpush1.bf16.msra.mxu0 %v5530
        %5628 = vmatprep.subr.bf16.mxu0 %v5529
        %5629 = vmatpush1.bf16.msra.mxu0 %v5528
        %5630 = vmatprep.subr.bf16.mxu0 0
        %5631 = vmatpush2.bf16.msra.mxu0 0
        %5632 = vmatprep.subr.bf16.mxu0 0
        %5633 = vmatpush2.bf16.msra.mxu0 0
        %5634 = vmatprep.subr.bf16.mxu0 0
        %5635 = vmatpush2.bf16.msra.mxu0 0
        %5636 = vmatprep.subr.bf16.mxu0 0
        %5637 = vmatpush2.bf16.msra.mxu0 0
        %5638 = vmatprep.subr.bf16.mxu0 0
        %5639 = vmatpush2.bf16.msra.mxu0 0
        %5640 = vmatprep.subr.bf16.mxu0 0
        %5641 = vmatpush2.bf16.msra.mxu0 0
        %5642 = vmatprep.subr.bf16.mxu0 0
        %5643 = vmatpush2.bf16.msra.mxu0 0
        %5644 = vmatprep.subr.bf16.mxu0 0
        %5645 = vmatpush2.bf16.msra.mxu0 0
        %5646 = vmatprep.mubr.bf16.mxu0 0
        %5647 = vmatmul.mubr.bf16.gmra.mxu0 %v5569
        %v5648 = vpop.f32.mrf.mxu0
        %v5649 = vadd.f32 %v5606, %v5648
        %v5650 = vpop.f32.mrf.mxu0
        %v5651 = vadd.f32 %v5608, %v5650
        %v5652 = vpop.f32.mrf.mxu0
        %v5653 = vadd.f32 %v5610, %v5652
        %v5654 = vpop.f32.mrf.mxu0
        %v5655 = vadd.f32 %v5612, %v5654
        %5656 = vdwg.mxu0
        %v5657 = vadd.f32 %v5318, %v5649
        %v5658 = vadd.f32 %v5319, %v5651
        %v5659 = vadd.f32 %v5320, %v5653
        %v5660 = vadd.f32 %v5321, %v5655
        %v5661 = vld [vmem:[%s14] sm:$0x3]
        %v5663 = vlaneseq
        %v5664 = vshrl.u32 %v5663, 7
        %v5665 = vsub.s32 0, %v5664
        %v5666 = vrot.slane %v5661, %v5665
        %v5667 = vlaneseq
        %v5668 = vshrl.u32 %v5667, 7
        %v5669 = vsub.s32 1, %v5668
        %v5670 = vrot.slane %v5661, %v5669
        %v5673 = vadd.f32 %v5657, %v5666
        %v5674 = vadd.f32 %v5658, %v5670
        %v5675 = vadd.f32 %v5659, %v5666
        %v5676 = vadd.f32 %v5660, %v5670
        %v5677 = vmax.f32 %v5673, 0.0
        %v5678 = vmax.f32 %v5674, 0.0
        %v5679 = vmax.f32 %v5675, 0.0
        %v5680 = vmax.f32 %v5676, 0.0
        %5681 = vst [vmem:[%s636] sm:$0xff] %v5677
        %5682 = vst [vmem:[%s636 + $0x8] sm:$0xff] %v5678
        %5683 = vst [vmem:[%s636 + $0x10] sm:$0xff] %v5679
        %5684 = vst [vmem:[%s636 + $0x18] sm:$0xff] %v5680
        %s5685 = sand.u32 %s377, 1
        %s5686 = scalar_lea.sflag [#allocation6], %s5685
        %s5687 = sand.u32 %s377, 1
        %s5688 = smul.addr %s5687, 32
        %s5689 = scalar_lea.vmem [#allocation13], %s5688
        %s5690 = sand.u32 %s403, 1
        %s5691 = scalar_lea.sflag [#allocation15], %s5690
        %s5692 = sand.u32 %s403, 1
        %s5693 = smul.addr %s5692, 32
        %s5694 = scalar_lea.vmem [#allocation14], %s5693
        // Predicated region
        $region101: #{tpu_custom_call.1} parent=79 // pred_check
          %p5695 = pneg %p387
        $region102: #{tpu_custom_call.1} parent=79 // pred_check_branch
          %5697 = sbr.rel (%p5695) target = $region104
        $region103: #{tpu_custom_call.1} parent=79 // pred_region
          %s5699 = ssub.s32 512, 512
          %5700 = vsyncadd %s5686, %s5699
          %s5701 = smul.addr %s39, 4
          %s5702 = smul.addr %s5701, 128
          %s5703 = scalar_lea.hbm %s15, %s5702
          %s5704 = sshll.u32 %s5689, 4
          %s5705 = int_to_ptr.vmem [resolvable:$true] %s5704
          %5710 = dma.vmem_to_hbm [thread:$0]  %s5705, 512, %s5703, %s5686, 256, 256, 16
        $region104: #{tpu_custom_call.1} parent=79 // pred_fallthru
          _
        // Predicated region
        $region105: #{tpu_custom_call.1} parent=79 // pred_check
          %p5711 = pneg %p413
        $region106: #{tpu_custom_call.1} parent=79 // pred_check_branch
          %5713 = sbr.rel (%p5711) target = $region108
        $region107: #{tpu_custom_call.1} parent=79 // pred_region
          %s5715 = ssub.s32 512, 512
          %5716 = vsyncadd %s5691, %s5715
          %s5717 = smul.addr %s39, 4
          %s5718 = smul.addr %s5717, 128
          %s5719 = scalar_lea.hbm %s16, %s5718
          %s5720 = sshll.u32 %s5694, 4
          %s5721 = int_to_ptr.vmem [resolvable:$true] %s5720
          %5726 = dma.vmem_to_hbm [thread:$0]  %s5721, 512, %s5719, %s5691, 256, 256, 16
        $region108: #{tpu_custom_call.1} parent=79 // pred_fallthru
          _
      $region80: #{tpu_custom_call.1} parent=5 // pred_fallthru
        _
      %p5727 = scmp.le.s32.totalorder 2, %s34
      // Predicated region
      $region109: #{tpu_custom_call.1} parent=5 // pred_check
        %p5728 = pneg %p5727
      $region110: #{tpu_custom_call.1} parent=5 // pred_check_branch
        %5730 = sbr.rel (%p5728) target = $region112
      $region111: #{tpu_custom_call.1} parent=5 // pred_region
        %s5731 = ssub.s32 %s34, 2
        // Predicated region
        $region113: #{tpu_custom_call.1} parent=111 // pred_check
          %p5732 = pneg %p393
        $region114: #{tpu_custom_call.1} parent=111 // pred_check_branch
          %5734 = sbr.rel (%p5732) target = $region116
        $region115: #{tpu_custom_call.1} parent=111 // pred_region
          %s5735 = sand.u32 %s378, 1
          %s5736 = scalar_lea.sflag [#allocation6], %s5735
          %s5737 = sand.u32 %s378, 1
          %s5738 = smul.addr %s5737, 32
          %s5739 = scalar_lea.vmem [#allocation13], %s5738
          %5740 = dma.done %s5736, 512
        $region116: #{tpu_custom_call.1} parent=111 // pred_fallthru
          _
        // Predicated region
        $region117: #{tpu_custom_call.1} parent=111 // pred_check
          %p5741 = pneg %p419
        $region118: #{tpu_custom_call.1} parent=111 // pred_check_branch
          %5743 = sbr.rel (%p5741) target = $region120
        $region119: #{tpu_custom_call.1} parent=111 // pred_region
          %s5744 = sand.u32 %s404, 1
          %s5745 = scalar_lea.sflag [#allocation15], %s5744
          %s5746 = sand.u32 %s404, 1
          %s5747 = smul.addr %s5746, 32
          %s5748 = scalar_lea.vmem [#allocation14], %s5747
          %5749 = dma.done %s5745, 512
        $region120: #{tpu_custom_call.1} parent=111 // pred_fallthru
          _
      $region112: #{tpu_custom_call.1} parent=5 // pred_fallthru
        _
    $region6: #{tpu_custom_call.1} parent=1 // loop_footer
      %s38 = sadd.s32 1, %s34
    $region7: #{tpu_custom_call.1} parent=1 // loop_footer_branch
      %33 = sbr.rel target = $region3
    $region8: #{tpu_custom_call.1} parent=1 // loop_exit
      _
    %5750 = vsyncpa [#allocation5], 1
    %s5751 = scalar_lea.sflag [#allocation5], 1
    %5752 = vsyncpa %s5751, 1
    %5753 = vsyncpa [#allocation8], 1
    %5754 = vsyncpa [#allocation11], 1
    %5755 = vsyncpa [#allocation6], 1
    %s5756 = scalar_lea.sflag [#allocation6], 1
    %5757 = vsyncpa %s5756, 1
    %5758 = vsyncpa [#allocation15], 1
    %s5759 = scalar_lea.sflag [#allocation15], 1
    %5760 = vsyncpa %s5759, 1

</llo_original>
